<compile_context>
chip_gen: v5e
topology: v5e:2x2
jax: 0.10.0
libtpu: 0.0.40
codegen_flags: <defaults>
</compile_context>

<pallas_src>
import jax
import jax.numpy as jnp
from jax.experimental import pallas as pl
from jax.experimental.pallas import tpu as pltpu


def fourier_feature_kernel(x_ref, w_ref, o_ref):
    # z = x @ W  -> (TILE_B, out_dim // 2), accumulated in f32.
    z = jnp.dot(x_ref[...], w_ref[...], preferred_element_type=jnp.float32)
    half = w_ref.shape[1]  # static
    # out = [sin(z), cos(z)] written directly into lane-dense halves of o_ref.
    o_ref[:, :half] = jnp.sin(z).astype(o_ref.dtype)
    o_ref[:, half:] = jnp.cos(z).astype(o_ref.dtype)


def fourier_features(x, weights, *, tile_b=128):
    """x: (B, in_dim) f32, weights: (in_dim, out_dim//2) f32 -> (B, out_dim) f32."""
    B, in_dim = x.shape
    half = weights.shape[1]
    out_dim = 2 * half

    # Pad batch up to a multiple of tile_b so the block shape is legal.
    n_tiles = pl.cdiv(B, tile_b)
    Bp = n_tiles * tile_b
    if Bp != B:
        x = jnp.pad(x, ((0, Bp - B), (0, 0)))

    out = pl.pallas_call(
        fourier_feature_kernel,
        out_shape=jax.ShapeDtypeStruct((Bp, out_dim), jnp.float32),
        grid_spec=pltpu.PrefetchScalarGridSpec(
            num_scalar_prefetch=0,
            grid=(n_tiles,),
            in_specs=[
                # x: one batch tile per grid step (pipelined / double-buffered).
                pl.BlockSpec((tile_b, in_dim), lambda i: (i, 0)),
                # weights: constant block index -> resident in VMEM across steps.
                pl.BlockSpec((in_dim, half), lambda i: (0, 0)),
            ],
            out_specs=pl.BlockSpec((tile_b, out_dim), lambda i: (i, 0)),
        ),
        compiler_params=pltpu.CompilerParams(
            dimension_semantics=("parallel",),  # megacore sharding on v7x
        ),
        cost_estimate=pl.CostEstimate(
            flops=2 * Bp * in_dim * half,
            transcendentals=2 * Bp * half,          # sin + cos per output column pair
            bytes_accessed=(Bp * in_dim + in_dim * half + Bp * out_dim) * 4,
        ),
    )(x, weights)

    return out[:B]


def init_params(key, in_dim=2, out_dim=256):
    """Matches PyTorch init: torch.randn(in_dim, out_dim // 2) * 2 * pi."""
    w = jax.random.normal(key, (in_dim, out_dim // 2), jnp.float32) * (2.0 * jnp.pi)
    return w


def reference(x, weights):
    z = x @ weights
    return jnp.concatenate([jnp.sin(z), jnp.cos(z)], axis=-1)


if __name__ == "__main__":
    key = jax.random.PRNGKey(0)
    kx, kw = jax.random.split(key)

    B, in_dim, out_dim = 200, 2, 256   # B deliberately not a tile multiple (tests padding)
    x = jax.random.normal(kx, (B, in_dim), jnp.float32)
    w = init_params(kw, in_dim=in_dim, out_dim=out_dim)

    out = fourier_features(x, w, tile_b=128)
    out = jax.block_until_ready(out)

    ref = reference(x, w)
    assert out.shape == (B, out_dim), out.shape
    assert jnp.allclose(out, ref, atol=1e-4, rtol=1e-4), "mismatch vs reference"

    print("KERNEL_OK")
</pallas_src>

<mosaic_0001>
module attributes {stable_mosaic.version = 11 : i64} {
  func.func @fourier_feature_kernel(%arg0: i32, %arg1: memref<128x2xf32, #tpu.memory_space<vmem>>, %arg2: memref<2x128xf32, #tpu.memory_space<vmem>>, %arg3: memref<128x256xf32, #tpu.memory_space<vmem>>) attributes {dimension_semantics = [#tpu.dimension_semantics<parallel>], iteration_bounds = array<i64: 2>, scalar_prefetch = 0 : i64, scratch_operands = 0 : i64, tpu.core_type = #tpu.core_type<tc>, window_params = [{transform_indices = @transform_0, window_bounds = array<i64: 128, 2>}, {pipeline_mode = #tpu.pipeline_mode<synchronous>, transform_indices = @transform_1, window_bounds = array<i64: 2, 128>}, {transform_indices = @transform_2, window_bounds = array<i64: 128, 256>}]} {
    %c0 = arith.constant 0 : index
    %c0_0 = arith.constant 0 : index
    %0 = vector.load %arg1[%c0, %c0_0] : memref<128x2xf32, #tpu.memory_space<vmem>>, vector<128x2xf32>
    %c0_1 = arith.constant 0 : index
    %c0_2 = arith.constant 0 : index
    %1 = vector.load %arg2[%c0_1, %c0_2] : memref<2x128xf32, #tpu.memory_space<vmem>>, vector<2x128xf32>
    %cst = arith.constant dense<0.000000e+00> : vector<128x128xf32>
    %2 = tpu.matmul %0, %1, %cst {dimension_numbers = #tpu.dot_dimension_numbers<[1], [0], [0], [1], [0, 0, 1, 1], [], []>} : vector<128x2xf32>, vector<2x128xf32>, vector<128x128xf32> -> vector<128x128xf32>
    %3 = math.sin %2 : vector<128x128xf32>
    %c0_3 = arith.constant 0 : index
    %c0_4 = arith.constant 0 : index
    %4 = vector.load %arg3[%c0_3, %c0_4] : memref<128x256xf32, #tpu.memory_space<vmem>>, vector<128x128xf32>
    tpu.vector_store %arg3[%c0_3, %c0_4], %3 {strides = array<i32>} : memref<128x256xf32, #tpu.memory_space<vmem>>, vector<128x128xf32>,
    %5 = math.cos %2 : vector<128x128xf32>
    %c0_5 = arith.constant 0 : index
    %c128 = arith.constant 128 : index
    %6 = vector.load %arg3[%c0_5, %c128] : memref<128x256xf32, #tpu.memory_space<vmem>>, vector<128x128xf32>
    tpu.vector_store %arg3[%c0_5, %c128], %5 {strides = array<i32>} : memref<128x256xf32, #tpu.memory_space<vmem>>, vector<128x128xf32>,
    return
  }
  func.func @transform_0(%arg0: i32) -> (i32, i32) {
    %c0_i32 = arith.constant 0 : i32
    %c0_i32_0 = arith.constant 0 : i32
    return %arg0, %c0_i32 : i32, i32
  }
  func.func @transform_1(%arg0: i32) -> (i32, i32) {
    %c0_i32 = arith.constant 0 : i32
    %c0_i32_0 = arith.constant 0 : i32
    %c0_i32_1 = arith.constant 0 : i32
    return %c0_i32, %c0_i32_0 : i32, i32
  }
  func.func @transform_2(%arg0: i32) -> (i32, i32) {
    %c0_i32 = arith.constant 0 : i32
    %c0_i32_0 = arith.constant 0 : i32
    return %arg0, %c0_i32 : i32, i32
  }
}

</mosaic_0001>

<llo_original>
// kernel: tpu_custom_call.1
$region0: #{tpu_custom_call.1}
  #allocation0 [shape = 'u32[]', space=smem, size = 0x4, offset = 0x4, fixed_abs, tag = 'smem constant byte address 0x4 - core index']
  #allocation1 [shape = 'u32[72,128]{1,0:T(1,128)}', space=vmem, size = 0x9000, scoped, tag = 'internal scratch']
  %s0 = inlined_call_operand.vmem [shape: f32[256,2], index: 0, kind: input, shape index: {}]
  %s1 = inlined_call_operand.vmem [shape: f32[2,128], index: 1, kind: input, shape index: {}]
  %s2 = inlined_call_operand.hbm [shape: f32[256,256], index: 2, kind: output, shape index: {}]
  %s3 = sld [smem:[#allocation0]]
  $region41: #{tpu_custom_call.1} parent=0
    _
  %s5 = ssub.s32 1, %s3
  %s6 = scalar_select 0, %s5, %s3
  $region1: #{tpu_custom_call.1} parent=0
    #allocation2 [shape = 'u8[262144]{0}', space=vmem, size = 0x40000, scoped, tag = 'output window, operand 0']
    #allocation3 [shape = 's32[2]{0}', space=sflag, size = 0x8, scoped, tag = 'scoped memory for tpu_custom_call.1']
    %7 = vsyncpa [#allocation3], 0
    %s8 = scalar_lea.sflag [#allocation3], 1
    %9 = vsyncpa %s8, 0
    loop: start=0, step=1, limit=4
    $region2: #{tpu_custom_call.1} parent=1 // loop_pre_header
      _
    $region3: #{tpu_custom_call.1} parent=1 // loop_header
      %s11 = sphi 0, %s15
      %p12 = scmp.ge.s32.totalorder %s11, 4
      %s21 = sphi 0, %s23
      %s24 = sphi 0, %s21
      %s25 = sphi 0, %s24
      %s41 = sphi 0, %s25
      %s45 = sphi 0, %s45
      %s47 = sphi 0, %s45
      %s48 = sphi 0, %s47
      %s62 = sphi 0, %s48
      %s68 = sphi 0, %s70
      %s71 = sphi 0, %s68
      %s72 = sphi 0, %s71
      %s88 = sphi 0, %s72
    $region4: #{tpu_custom_call.1} parent=1 // loop_header_branch
      %14 = sbr.rel (%p12) target = $region8
    $region5: #{tpu_custom_call.1} parent=1 // loop_body
      %s16 = ssub.s32 %s11, 1
      %s17 = ssub.s32 %s11, 2
      %s18 = sadd.s32 %s11, 1
      %s19 = ssub.s32 %s11, %s18
      %p20 = scmp.eq.s32.totalorder %s19, 0
      %s22 = sadd.s32 %s21, 1
      %s23 = scalar_select %p20, %s21, %s22
      %p26 = pneg %p20
      %p27 = scmp.eq.s32.totalorder %s11, 1
      %p28 = por %p26, %p27
      %p29 = scmp.ne.s32.totalorder %s21, %s24
      %p30 = scmp.eq.s32.totalorder %s11, 0
      %p31 = por %p29, %p30
      %p32 = scmp.ne.s32.totalorder %s21, %s24
      %p33 = scmp.eq.s32.totalorder %s16, 1
      %p34 = por %p32, %p33
      %p35 = scmp.ne.s32.totalorder %s24, %s25
      %p36 = scmp.eq.s32.totalorder %s16, 0
      %p37 = por %p35, %p36
      %p38 = scmp.ne.s32.totalorder %s24, %s25
      %p39 = scmp.eq.s32.totalorder %s17, 1
      %p40 = por %p38, %p39
      %p42 = scmp.ne.s32.totalorder %s25, %s41
      %p43 = scmp.eq.s32.totalorder %s17, 0
      %p44 = por %p42, %p43
      %s46 = sadd.s32 %s45, 1
      %p49 = scmp.eq.s32.totalorder %s11, 1
      %p50 = scmp.ne.s32.totalorder %s45, %s47
      %p51 = scmp.eq.s32.totalorder %s11, 0
      %p52 = por %p50, %p51
      %p53 = scmp.ne.s32.totalorder %s45, %s47
      %p54 = scmp.eq.s32.totalorder %s16, 1
      %p55 = por %p53, %p54
      %p56 = scmp.ne.s32.totalorder %s47, %s48
      %p57 = scmp.eq.s32.totalorder %s16, 0
      %p58 = por %p56, %p57
      %p59 = scmp.ne.s32.totalorder %s47, %s48
      %p60 = scmp.eq.s32.totalorder %s17, 1
      %p61 = por %p59, %p60
      %p63 = scmp.ne.s32.totalorder %s48, %s62
      %p64 = scmp.eq.s32.totalorder %s17, 0
      %p65 = por %p63, %p64
      %s66 = ssub.s32 %s11, %s18
      %p67 = scmp.eq.s32.totalorder %s66, 0
      %s69 = sadd.s32 %s68, 1
      %s70 = scalar_select %p67, %s68, %s69
      %p73 = pneg %p67
      %p74 = scmp.eq.s32.totalorder %s11, 1
      %p75 = por %p73, %p74
      %p76 = scmp.ne.s32.totalorder %s68, %s71
      %p77 = scmp.eq.s32.totalorder %s11, 0
      %p78 = por %p76, %p77
      %p79 = scmp.ne.s32.totalorder %s68, %s71
      %p80 = scmp.eq.s32.totalorder %s16, 1
      %p81 = por %p79, %p80
      %p82 = scmp.ne.s32.totalorder %s71, %s72
      %p83 = scmp.eq.s32.totalorder %s16, 0
      %p84 = por %p82, %p83
      %p85 = scmp.ne.s32.totalorder %s71, %s72
      %p86 = scmp.eq.s32.totalorder %s17, 1
      %p87 = por %p85, %p86
      %p89 = scmp.ne.s32.totalorder %s72, %s88
      %p90 = scmp.eq.s32.totalorder %s17, 0
      %p91 = por %p89, %p90
      %p92 = scmp.le.s32.totalorder 1, %s11
      %p93 = scmp.lt.s32.totalorder %s11, 3
      %p94 = pnand %p92, %p93
      %p95 = pneg %p94
      // Predicated region
      $region9: #{tpu_custom_call.1} parent=5 // pred_check
        _
      $region10: #{tpu_custom_call.1} parent=5 // pred_check_branch
        %97 = sbr.rel (%p94) target = $region12
      $region11: #{tpu_custom_call.1} parent=5 // pred_region
        %s98 = ssub.s32 %s11, 1
        // Predicated region
        $region13: #{tpu_custom_call.1} parent=11 // pred_check
          %p99 = pneg %p58
        $region14: #{tpu_custom_call.1} parent=11 // pred_check_branch
          %101 = sbr.rel (%p99) target = $region16
        $region15: #{tpu_custom_call.1} parent=11 // pred_region
          _
        $region16: #{tpu_custom_call.1} parent=11 // pred_fallthru
          _
      $region12: #{tpu_custom_call.1} parent=5 // pred_fallthru
        _
      %p102 = scmp.lt.s32.totalorder %s11, 2
      // Predicated region
      $region17: #{tpu_custom_call.1} parent=5 // pred_check
        %p103 = pneg %p102
      $region18: #{tpu_custom_call.1} parent=5 // pred_check_branch
        %105 = sbr.rel (%p103) target = $region20
      $region19: #{tpu_custom_call.1} parent=5 // pred_region
        // Predicated region
        $region21: #{tpu_custom_call.1} parent=19 // pred_check
          %p106 = pneg %p31
        $region22: #{tpu_custom_call.1} parent=19 // pred_check_branch
          %108 = sbr.rel (%p106) target = $region24
        $region23: #{tpu_custom_call.1} parent=19 // pred_region
          %s109 = smul.u32 16, %s11
          %p110 = scmp.lt.s32.totalorder %s109, 31
          %s111 = scalar_select %p110, %s109, 31
          %s112 = smul.addr %s111, 8
          %s113 = scalar_lea.vmem %s0, %s112
          %s114 = smul.u32 16, %s11
        $region24: #{tpu_custom_call.1} parent=19 // pred_fallthru
          _
      $region20: #{tpu_custom_call.1} parent=5 // pred_fallthru
        _
      %p115 = scmp.le.s32.totalorder 1, %s11
      %p116 = scmp.lt.s32.totalorder %s11, 3
      %p117 = pnand %p115, %p116
      %p118 = pneg %p117
      // Predicated region
      $region25: #{tpu_custom_call.1} parent=5 // pred_check
        _
      $region26: #{tpu_custom_call.1} parent=5 // pred_check_branch
        %120 = sbr.rel (%p117) target = $region28
      $region27: #{tpu_custom_call.1} parent=5 // pred_region
        %s121 = ssub.s32 %s11, 1
        %s122 = smul.u32 16, %s16
        %p123 = scmp.lt.s32.totalorder %s122, 31
        %s124 = scalar_select %p123, %s122, 31
        %s125 = smul.addr %s124, 8
        %s126 = scalar_lea.vmem %s0, %s125
        %p127 = pneg %p37
        %p128 = pneg %p34
        %p129 = pneg %p58
        %p130 = pneg %p55
        %p131 = pneg %p84
        %p132 = pneg %p81
        %s133 = sand.u32 %s71, 1
        %s134 = scalar_lea.sflag [#allocation3], %s133
        %s135 = sand.u32 %s71, 1
        %s136 = smul.addr %s135, 256
        %s137 = scalar_lea.vmem [#allocation2], %s136
        %s138 = smul.u32 16, %s16
        %p139 = scmp.lt.s32.totalorder %s138, 31
        %s140 = scalar_select %p139, %s138, 31
        %s141 = smul.addr %s140, 8
        %s142 = scalar_lea.vmem %s0, %s141
        %s143 = smul.u32 16, %s16
        %s144 = smul.u32 16, %s16
        %v145 = vld [vmem:[%s142] sm:$0xff]
        %v146 = vld [vmem:[%s142 + $0x8] sm:$0xff]
        %v147 = vld [vmem:[%s142 + $0x10] sm:$0xff]
        %v148 = vld [vmem:[%s142 + $0x18] sm:$0xff]
        %v149 = vld [vmem:[%s142 + $0x20] sm:$0xff]
        %v150 = vld [vmem:[%s142 + $0x28] sm:$0xff]
        %v151 = vld [vmem:[%s142 + $0x30] sm:$0xff]
        %v152 = vld [vmem:[%s142 + $0x38] sm:$0xff]
        %v153 = vld [vmem:[%s142 + $0x40] sm:$0xff]
        %v154 = vld [vmem:[%s142 + $0x48] sm:$0xff]
        %v155 = vld [vmem:[%s142 + $0x50] sm:$0xff]
        %v156 = vld [vmem:[%s142 + $0x58] sm:$0xff]
        %v157 = vld [vmem:[%s142 + $0x60] sm:$0xff]
        %v158 = vld [vmem:[%s142 + $0x68] sm:$0xff]
        %v159 = vld [vmem:[%s142 + $0x70] sm:$0xff]
        %v160 = vld [vmem:[%s142 + $0x78] sm:$0xff]
        %v161 = vld [vmem:[%s1] sm:$0x3]
        %vm162 = vcmask 15360
        %v164 = vsel %vm162, %v145, 0
        %v167 = vsel %vm162, %v146, 0
        %v170 = vsel %vm162, %v147, 0
        %v173 = vsel %vm162, %v148, 0
        %v176 = vsel %vm162, %v149, 0
        %v179 = vsel %vm162, %v150, 0
        %v182 = vsel %vm162, %v151, 0
        %v185 = vsel %vm162, %v152, 0
        %v188 = vsel %vm162, %v153, 0
        %v191 = vsel %vm162, %v154, 0
        %v194 = vsel %vm162, %v155, 0
        %v197 = vsel %vm162, %v156, 0
        %v200 = vsel %vm162, %v157, 0
        %v203 = vsel %vm162, %v158, 0
        %v206 = vsel %vm162, %v159, 0
        %v209 = vsel %vm162, %v160, 0
        %vm211 = vcmask 1041408
        %v213 = vsel %vm211, %v161, 0
        %215 = vmatpush.msra.mxu0 0.0
        %216 = vmatpush.msra.mxu0 0.0
        %217 = vmatpush.msra.mxu0 0.0
        %218 = vmatpush.msra.mxu0 0.0
        %219 = vmatpush.msra.mxu0 0.0
        %220 = vmatpush.msra.mxu0 0.0
        %221 = vmatpush.msra.mxu0 0.0
        %222 = vmatpush.msra.mxu0 0.0
        %223 = vmatpush.msra.mxu0 0.0
        %224 = vmatpush.msra.mxu0 0.0
        %225 = vmatpush.msra.mxu0 0.0
        %226 = vmatpush.msra.mxu0 0.0
        %227 = vmatpush.msra.mxu0 0.0
        %228 = vmatpush.msra.mxu0 0.0
        %229 = vmatpush.msra.mxu0 0.0
        %230 = vmatpush.msra.mxu0 %v213
        %231 = vmatmul.f32.gmra.mxu0 %v164
        %v232 = vpop.f32.mrf.mxu0
        %v233 = vadd.f32 0.0, %v232
        %234 = vmatmul.f32.gmra.mxu0 %v167
        %v235 = vpop.f32.mrf.mxu0
        %v236 = vadd.f32 0.0, %v235
        %237 = vmatmul.f32.gmra.mxu0 %v170
        %v238 = vpop.f32.mrf.mxu0
        %v239 = vadd.f32 0.0, %v238
        %240 = vmatmul.f32.gmra.mxu0 %v173
        %v241 = vpop.f32.mrf.mxu0
        %v242 = vadd.f32 0.0, %v241
        %243 = vmatmul.f32.gmra.mxu0 %v176
        %v244 = vpop.f32.mrf.mxu0
        %v245 = vadd.f32 0.0, %v244
        %246 = vmatmul.f32.gmra.mxu0 %v179
        %v247 = vpop.f32.mrf.mxu0
        %v248 = vadd.f32 0.0, %v247
        %249 = vmatmul.f32.gmra.mxu0 %v182
        %v250 = vpop.f32.mrf.mxu0
        %v251 = vadd.f32 0.0, %v250
        %252 = vmatmul.f32.gmra.mxu0 %v185
        %v253 = vpop.f32.mrf.mxu0
        %v254 = vadd.f32 0.0, %v253
        %255 = vmatmul.f32.gmra.mxu0 %v188
        %v256 = vpop.f32.mrf.mxu0
        %v257 = vadd.f32 0.0, %v256
        %258 = vmatmul.f32.gmra.mxu0 %v191
        %v259 = vpop.f32.mrf.mxu0
        %v260 = vadd.f32 0.0, %v259
        %261 = vmatmul.f32.gmra.mxu0 %v194
        %v262 = vpop.f32.mrf.mxu0
        %v263 = vadd.f32 0.0, %v262
        %264 = vmatmul.f32.gmra.mxu0 %v197
        %v265 = vpop.f32.mrf.mxu0
        %v266 = vadd.f32 0.0, %v265
        %267 = vmatmul.f32.gmra.mxu0 %v200
        %v268 = vpop.f32.mrf.mxu0
        %v269 = vadd.f32 0.0, %v268
        %270 = vmatmul.f32.gmra.mxu0 %v203
        %v271 = vpop.f32.mrf.mxu0
        %v272 = vadd.f32 0.0, %v271
        %273 = vmatmul.f32.gmra.mxu0 %v206
        %v274 = vpop.f32.mrf.mxu0
        %v275 = vadd.f32 0.0, %v274
        %276 = vmatmul.f32.gmra.mxu0 %v209
        %v277 = vpop.f32.mrf.mxu0
        %v278 = vadd.f32 0.0, %v277
        %279 = vdwg.mxu0
        %v280 = vand.u32 2147483647, %v233
        %vm281 = vcmp.le.f32.partialorder %v280, 0.7853982
        %vm282 = vcmp.lt.s32.totalorder %v233, 0
        %v283 = vand.u32 %v233, 2139095040
        %v284 = vshrl.u32 %v283, 23
        %v285 = vsub.s32 %v284, 127
        %v286 = vand.u32 2147483647, %v233
        %v287 = vand.u32 %v286, 8388607
        %v288 = vor.u32 %v287, 8388608
        %v289 = vsub.s32 0, %v288
        %v290 = vadd.s32 %v285, 1
        %vm291 = vcmp.gt.s32.totalorder %v290, 0
        %v292 = vsel %vm291, %v290, 0
        %v293 = vshrl.u32 %v292, 5
        %v294 = vand.u32 %v292, 31
        %v295 = vsub.s32 32, %v294
        %v296 = vshrl.u32 683565275, %v295
        %v297 = vshll.u32 683565275, %v294
        %v298 = vshrl.u32 2475754826, %v295
        %v299 = vor.u32 %v297, %v298
        %v300 = vshll.u32 2475754826, %v294
        %v301 = vshrl.u32 2131351028, %v295
        %v302 = vor.u32 %v300, %v301
        %v303 = vshll.u32 2131351028, %v294
        %v304 = vshrl.u32 2102212464, %v295
        %v305 = vor.u32 %v303, %v304
        %v306 = vshll.u32 2102212464, %v294
        %v307 = vshrl.u32 920167782, %v295
        %v308 = vor.u32 %v306, %v307
        %v309 = vshll.u32 920167782, %v294
        %v310 = vshrl.u32 1326507024, %v295
        %v311 = vor.u32 %v309, %v310
        %vm312 = vcmp.lt.s32.totalorder %v293, 1
        %vm313 = vcmp.lt.s32.totalorder %v293, 2
        %vm314 = vcmp.lt.s32.totalorder %v293, 3
        %vm315 = vcmp.lt.s32.totalorder %v293, 4
        %v316 = vsel %vm312, %v296, %v299
        %v317 = vsel %vm315, %v305, 2102212464
        %v318 = vsel %vm314, %v302, %v317
        %v319 = vsel %vm313, %v316, %v318
        %v320 = vsel %vm312, %v299, %v302
        %v321 = vsel %vm315, %v308, 920167782
        %v322 = vsel %vm314, %v305, %v321
        %v323 = vsel %vm313, %v320, %v322
        %v324 = vsel %vm312, %v302, %v305
        %v325 = vsel %vm315, %v311, 1326507024
        %v326 = vsel %vm314, %v308, %v325
        %v327 = vsel %vm313, %v324, %v326
        %v328 = vshll.u32 %v288, 8
        %v329 = vand.u32 %v328, 65535
        %v330 = vshrl.u32 %v328, 16
        %v331 = vand.u32 %v327, 65535
        %v332 = vshrl.u32 %v327, 16
        %v333 = vmul.u32 %v329, %v331
        %v334 = vmul.u32 %v329, %v332
        %v335 = vmul.u32 %v330, %v331
        %v336 = vmul.u32 %v330, %v332
        %v337 = vshll.u32 %v334, 16
        %v338 = vshrl.u32 %v334, 16
        %v339 = vshll.u32 %v335, 16
        %v340 = vshrl.u32 %v335, 16
        %vm341 = vc.u32 %v333, %v337
        %v342 = vsel %vm341, 1, 0
        %v343 = vadd.s32 %v333, %v337
        %v344 = vadd.s32 %v336, %v342
        %vm345 = vc.u32 %v343, %v339
        %v346 = vsel %vm345, 1, 0
        %v347 = vadd.s32 %v343, %v339
        %v348 = vadd.s32 %v344, %v346
        %v349 = vadd.s32 %v348, %v338
        %v350 = vadd.s32 %v349, %v340
        %v351 = vand.u32 %v328, 65535
        %v352 = vshrl.u32 %v328, 16
        %v353 = vand.u32 %v323, 65535
        %v354 = vshrl.u32 %v323, 16
        %v355 = vmul.u32 %v351, %v353
        %v356 = vmul.u32 %v351, %v354
        %v357 = vmul.u32 %v352, %v353
        %v358 = vmul.u32 %v352, %v354
        %v359 = vshll.u32 %v356, 16
        %v360 = vshrl.u32 %v356, 16
        %v361 = vshll.u32 %v357, 16
        %v362 = vshrl.u32 %v357, 16
        %vm363 = vc.u32 %v355, %v359
        %v364 = vsel %vm363, 1, 0
        %v365 = vadd.s32 %v355, %v359
        %v366 = vadd.s32 %v358, %v364
        %vm367 = vc.u32 %v365, %v361
        %v368 = vsel %vm367, 1, 0
        %v369 = vadd.s32 %v365, %v361
        %v370 = vadd.s32 %v366, %v368
        %v371 = vadd.s32 %v370, %v360
        %v372 = vadd.s32 %v371, %v362
        %v373 = vmul.u32 %v328, %v319
        %v374 = vadd.s32 %v350, %v369
        %vm375 = vc.u32 %v350, %v369
        %v376 = vadd.s32 %v372, 1
        %v377 = vsel %vm375, %v376, %v372
        %v378 = vadd.s32 %v373, %v377
        %v379 = vadd.s32 %v378, 536870912
        %v380 = vshrl.u32 %v379, 30
        %v381 = vshll.u32 %v380, 30
        %v382 = vsub.s32 %v378, %v381
        %vm383 = vcmp.lt.s32.totalorder %v382, 0
        %v384 = vsub.s32 0, %v382
        %v385 = vsel %vm383, %v384, %v382
        %v386 = vclz %v385
        %v387 = vsub.s32 %v386, 2
        %vm388 = vcmp.gt.s32.totalorder 0, %v387
        %v389 = vsel %vm388, 0, %v387
        %v390 = vsub.s32 32, %v389
        %v391 = vshll.u32 %v382, %v389
        %v392 = vshrl.u32 %v374, %v390
        %v393 = vor.u32 %v391, %v392
        %v394 = vsub.s32 4294967266, %v389
        %v395 = vadd.s32 %v394, 127
        %v396 = vshll.u32 %v395, 23
        %v397 = vor.u32 4788187, %v396
        %v398 = vand.u32 2147483647, %v397
        %v400 = vcvt.s32.f32 %v393
        %v401 = vmul.f32 %v400, %v398
        %v402 = vxor.u32 %v401, 2147483648
        %v403 = vsel %vm282, %v402, %v401
        %v404 = vsub.s32 4, %v380
        %v405 = vsel %vm282, %v404, %v380
        %v406 = vsel %vm281, %v233, %v403
        %v407 = vsel %vm281, 0, %v405
        %v408 = vmul.f32 %v406, %v406
        %v409 = vmul.f32 %v408, -0.001358992
        %v410 = vadd.f32 %v409, 0.041655596
        %v411 = vmul.f32 %v408, %v410
        %v412 = vadd.f32 %v411, -0.4999988
        %v413 = vmul.f32 %v408, %v412
        %v414 = vadd.f32 1.0, %v413
        %v415 = vmul.f32 %v406, %v406
        %v416 = vmul.f32 %v415, -0.00019511016
        %v417 = vadd.f32 %v416, 0.008332121
        %v418 = vmul.f32 %v415, %v417
        %v419 = vadd.f32 %v418, -0.16666654
        %v420 = vmul.f32 %v415, %v419
        %v421 = vadd.f32 %v420, 1.0
        %v422 = vmul.f32 %v421, %v406
        %vm423 = vweird.f32 %v233
        %v424 = vadd.s32 %v407, 3
        %v425 = vand.u32 %v424, 3
        %vm426 = vcmp.lt.s32.totalorder %v425, 2
        %vm427 = vcmp.eq.s32.totalorder %v425, 0
        %v428 = vxor.u32 %v422, 2147483648
        %v429 = vsel %vm427, %v414, %v428
        %vm430 = vcmp.eq.s32.totalorder %v425, 2
        %v431 = vxor.u32 %v414, 2147483648
        %v432 = vsel %vm430, %v431, %v422
        %v433 = vsel %vm426, %v429, %v432
        %v434 = vsel %vm423, nan, %v433
        %v435 = vand.u32 2147483647, %v236
        %vm436 = vcmp.le.f32.partialorder %v435, 0.7853982
        %vm437 = vcmp.lt.s32.totalorder %v236, 0
        %v438 = vand.u32 %v236, 2139095040
        %v439 = vshrl.u32 %v438, 23
        %v440 = vsub.s32 %v439, 127
        %v441 = vand.u32 2147483647, %v236
        %v442 = vand.u32 %v441, 8388607
        %v443 = vor.u32 %v442, 8388608
        %v444 = vsub.s32 0, %v443
        %v445 = vadd.s32 %v440, 1
        %vm446 = vcmp.gt.s32.totalorder %v445, 0
        %v447 = vsel %vm446, %v445, 0
        %v448 = vshrl.u32 %v447, 5
        %v449 = vand.u32 %v447, 31
        %v450 = vsub.s32 32, %v449
        %v451 = vshrl.u32 683565275, %v450
        %v452 = vshll.u32 683565275, %v449
        %v453 = vshrl.u32 2475754826, %v450
        %v454 = vor.u32 %v452, %v453
        %v455 = vshll.u32 2475754826, %v449
        %v456 = vshrl.u32 2131351028, %v450
        %v457 = vor.u32 %v455, %v456
        %v458 = vshll.u32 2131351028, %v449
        %v459 = vshrl.u32 2102212464, %v450
        %v460 = vor.u32 %v458, %v459
        %v461 = vshll.u32 2102212464, %v449
        %v462 = vshrl.u32 920167782, %v450
        %v463 = vor.u32 %v461, %v462
        %v464 = vshll.u32 920167782, %v449
        %v465 = vshrl.u32 1326507024, %v450
        %v466 = vor.u32 %v464, %v465
        %vm467 = vcmp.lt.s32.totalorder %v448, 1
        %vm468 = vcmp.lt.s32.totalorder %v448, 2
        %vm469 = vcmp.lt.s32.totalorder %v448, 3
        %vm470 = vcmp.lt.s32.totalorder %v448, 4
        %v471 = vsel %vm467, %v451, %v454
        %v472 = vsel %vm470, %v460, 2102212464
        %v473 = vsel %vm469, %v457, %v472
        %v474 = vsel %vm468, %v471, %v473
        %v475 = vsel %vm467, %v454, %v457
        %v476 = vsel %vm470, %v463, 920167782
        %v477 = vsel %vm469, %v460, %v476
        %v478 = vsel %vm468, %v475, %v477
        %v479 = vsel %vm467, %v457, %v460
        %v480 = vsel %vm470, %v466, 1326507024
        %v481 = vsel %vm469, %v463, %v480
        %v482 = vsel %vm468, %v479, %v481
        %v483 = vshll.u32 %v443, 8
        %v484 = vand.u32 %v483, 65535
        %v485 = vshrl.u32 %v483, 16
        %v486 = vand.u32 %v482, 65535
        %v487 = vshrl.u32 %v482, 16
        %v488 = vmul.u32 %v484, %v486
        %v489 = vmul.u32 %v484, %v487
        %v490 = vmul.u32 %v485, %v486
        %v491 = vmul.u32 %v485, %v487
        %v492 = vshll.u32 %v489, 16
        %v493 = vshrl.u32 %v489, 16
        %v494 = vshll.u32 %v490, 16
        %v495 = vshrl.u32 %v490, 16
        %vm496 = vc.u32 %v488, %v492
        %v497 = vsel %vm496, 1, 0
        %v498 = vadd.s32 %v488, %v492
        %v499 = vadd.s32 %v491, %v497
        %vm500 = vc.u32 %v498, %v494
        %v501 = vsel %vm500, 1, 0
        %v502 = vadd.s32 %v498, %v494
        %v503 = vadd.s32 %v499, %v501
        %v504 = vadd.s32 %v503, %v493
        %v505 = vadd.s32 %v504, %v495
        %v506 = vand.u32 %v483, 65535
        %v507 = vshrl.u32 %v483, 16
        %v508 = vand.u32 %v478, 65535
        %v509 = vshrl.u32 %v478, 16
        %v510 = vmul.u32 %v506, %v508
        %v511 = vmul.u32 %v506, %v509
        %v512 = vmul.u32 %v507, %v508
        %v513 = vmul.u32 %v507, %v509
        %v514 = vshll.u32 %v511, 16
        %v515 = vshrl.u32 %v511, 16
        %v516 = vshll.u32 %v512, 16
        %v517 = vshrl.u32 %v512, 16
        %vm518 = vc.u32 %v510, %v514
        %v519 = vsel %vm518, 1, 0
        %v520 = vadd.s32 %v510, %v514
        %v521 = vadd.s32 %v513, %v519
        %vm522 = vc.u32 %v520, %v516
        %v523 = vsel %vm522, 1, 0
        %v524 = vadd.s32 %v520, %v516
        %v525 = vadd.s32 %v521, %v523
        %v526 = vadd.s32 %v525, %v515
        %v527 = vadd.s32 %v526, %v517
        %v528 = vmul.u32 %v483, %v474
        %v529 = vadd.s32 %v505, %v524
        %vm530 = vc.u32 %v505, %v524
        %v531 = vadd.s32 %v527, 1
        %v532 = vsel %vm530, %v531, %v527
        %v533 = vadd.s32 %v528, %v532
        %v534 = vadd.s32 %v533, 536870912
        %v535 = vshrl.u32 %v534, 30
        %v536 = vshll.u32 %v535, 30
        %v537 = vsub.s32 %v533, %v536
        %vm538 = vcmp.lt.s32.totalorder %v537, 0
        %v539 = vsub.s32 0, %v537
        %v540 = vsel %vm538, %v539, %v537
        %v541 = vclz %v540
        %v542 = vsub.s32 %v541, 2
        %vm543 = vcmp.gt.s32.totalorder 0, %v542
        %v544 = vsel %vm543, 0, %v542
        %v545 = vsub.s32 32, %v544
        %v546 = vshll.u32 %v537, %v544
        %v547 = vshrl.u32 %v529, %v545
        %v548 = vor.u32 %v546, %v547
        %v549 = vsub.s32 4294967266, %v544
        %v550 = vadd.s32 %v549, 127
        %v551 = vshll.u32 %v550, 23
        %v552 = vor.u32 4788187, %v551
        %v553 = vand.u32 2147483647, %v552
        %v555 = vcvt.s32.f32 %v548
        %v556 = vmul.f32 %v555, %v553
        %v557 = vxor.u32 %v556, 2147483648
        %v558 = vsel %vm437, %v557, %v556
        %v559 = vsub.s32 4, %v535
        %v560 = vsel %vm437, %v559, %v535
        %v561 = vsel %vm436, %v236, %v558
        %v562 = vsel %vm436, 0, %v560
        %v563 = vmul.f32 %v561, %v561
        %v564 = vmul.f32 %v563, -0.001358992
        %v565 = vadd.f32 %v564, 0.041655596
        %v566 = vmul.f32 %v563, %v565
        %v567 = vadd.f32 %v566, -0.4999988
        %v568 = vmul.f32 %v563, %v567
        %v569 = vadd.f32 1.0, %v568
        %v570 = vmul.f32 %v561, %v561
        %v571 = vmul.f32 %v570, -0.00019511016
        %v572 = vadd.f32 %v571, 0.008332121
        %v573 = vmul.f32 %v570, %v572
        %v574 = vadd.f32 %v573, -0.16666654
        %v575 = vmul.f32 %v570, %v574
        %v576 = vadd.f32 %v575, 1.0
        %v577 = vmul.f32 %v576, %v561
        %vm578 = vweird.f32 %v236
        %v579 = vadd.s32 %v562, 3
        %v580 = vand.u32 %v579, 3
        %vm581 = vcmp.lt.s32.totalorder %v580, 2
        %vm582 = vcmp.eq.s32.totalorder %v580, 0
        %v583 = vxor.u32 %v577, 2147483648
        %v584 = vsel %vm582, %v569, %v583
        %vm585 = vcmp.eq.s32.totalorder %v580, 2
        %v586 = vxor.u32 %v569, 2147483648
        %v587 = vsel %vm585, %v586, %v577
        %v588 = vsel %vm581, %v584, %v587
        %v589 = vsel %vm578, nan, %v588
        %v590 = vand.u32 2147483647, %v239
        %vm591 = vcmp.le.f32.partialorder %v590, 0.7853982
        %vm592 = vcmp.lt.s32.totalorder %v239, 0
        %v593 = vand.u32 %v239, 2139095040
        %v594 = vshrl.u32 %v593, 23
        %v595 = vsub.s32 %v594, 127
        %v596 = vand.u32 2147483647, %v239
        %v597 = vand.u32 %v596, 8388607
        %v598 = vor.u32 %v597, 8388608
        %v599 = vsub.s32 0, %v598
        %v600 = vadd.s32 %v595, 1
        %vm601 = vcmp.gt.s32.totalorder %v600, 0
        %v602 = vsel %vm601, %v600, 0
        %v603 = vshrl.u32 %v602, 5
        %v604 = vand.u32 %v602, 31
        %v605 = vsub.s32 32, %v604
        %v606 = vshrl.u32 683565275, %v605
        %v607 = vshll.u32 683565275, %v604
        %v608 = vshrl.u32 2475754826, %v605
        %v609 = vor.u32 %v607, %v608
        %v610 = vshll.u32 2475754826, %v604
        %v611 = vshrl.u32 2131351028, %v605
        %v612 = vor.u32 %v610, %v611
        %v613 = vshll.u32 2131351028, %v604
        %v614 = vshrl.u32 2102212464, %v605
        %v615 = vor.u32 %v613, %v614
        %v616 = vshll.u32 2102212464, %v604
        %v617 = vshrl.u32 920167782, %v605
        %v618 = vor.u32 %v616, %v617
        %v619 = vshll.u32 920167782, %v604
        %v620 = vshrl.u32 1326507024, %v605
        %v621 = vor.u32 %v619, %v620
        %vm622 = vcmp.lt.s32.totalorder %v603, 1
        %vm623 = vcmp.lt.s32.totalorder %v603, 2
        %vm624 = vcmp.lt.s32.totalorder %v603, 3
        %vm625 = vcmp.lt.s32.totalorder %v603, 4
        %v626 = vsel %vm622, %v606, %v609
        %v627 = vsel %vm625, %v615, 2102212464
        %v628 = vsel %vm624, %v612, %v627
        %v629 = vsel %vm623, %v626, %v628
        %v630 = vsel %vm622, %v609, %v612
        %v631 = vsel %vm625, %v618, 920167782
        %v632 = vsel %vm624, %v615, %v631
        %v633 = vsel %vm623, %v630, %v632
        %v634 = vsel %vm622, %v612, %v615
        %v635 = vsel %vm625, %v621, 1326507024
        %v636 = vsel %vm624, %v618, %v635
        %v637 = vsel %vm623, %v634, %v636
        %v638 = vshll.u32 %v598, 8
        %v639 = vand.u32 %v638, 65535
        %v640 = vshrl.u32 %v638, 16
        %v641 = vand.u32 %v637, 65535
        %v642 = vshrl.u32 %v637, 16
        %v643 = vmul.u32 %v639, %v641
        %v644 = vmul.u32 %v639, %v642
        %v645 = vmul.u32 %v640, %v641
        %v646 = vmul.u32 %v640, %v642
        %v647 = vshll.u32 %v644, 16
        %v648 = vshrl.u32 %v644, 16
        %v649 = vshll.u32 %v645, 16
        %v650 = vshrl.u32 %v645, 16
        %vm651 = vc.u32 %v643, %v647
        %v652 = vsel %vm651, 1, 0
        %v653 = vadd.s32 %v643, %v647
        %v654 = vadd.s32 %v646, %v652
        %vm655 = vc.u32 %v653, %v649
        %v656 = vsel %vm655, 1, 0
        %v657 = vadd.s32 %v653, %v649
        %v658 = vadd.s32 %v654, %v656
        %v659 = vadd.s32 %v658, %v648
        %v660 = vadd.s32 %v659, %v650
        %v661 = vand.u32 %v638, 65535
        %v662 = vshrl.u32 %v638, 16
        %v663 = vand.u32 %v633, 65535
        %v664 = vshrl.u32 %v633, 16
        %v665 = vmul.u32 %v661, %v663
        %v666 = vmul.u32 %v661, %v664
        %v667 = vmul.u32 %v662, %v663
        %v668 = vmul.u32 %v662, %v664
        %v669 = vshll.u32 %v666, 16
        %v670 = vshrl.u32 %v666, 16
        %v671 = vshll.u32 %v667, 16
        %v672 = vshrl.u32 %v667, 16
        %vm673 = vc.u32 %v665, %v669
        %v674 = vsel %vm673, 1, 0
        %v675 = vadd.s32 %v665, %v669
        %v676 = vadd.s32 %v668, %v674
        %vm677 = vc.u32 %v675, %v671
        %v678 = vsel %vm677, 1, 0
        %v679 = vadd.s32 %v675, %v671
        %v680 = vadd.s32 %v676, %v678
        %v681 = vadd.s32 %v680, %v670
        %v682 = vadd.s32 %v681, %v672
        %v683 = vmul.u32 %v638, %v629
        %v684 = vadd.s32 %v660, %v679
        %vm685 = vc.u32 %v660, %v679
        %v686 = vadd.s32 %v682, 1
        %v687 = vsel %vm685, %v686, %v682
        %v688 = vadd.s32 %v683, %v687
        %v689 = vadd.s32 %v688, 536870912
        %v690 = vshrl.u32 %v689, 30
        %v691 = vshll.u32 %v690, 30
        %v692 = vsub.s32 %v688, %v691
        %vm693 = vcmp.lt.s32.totalorder %v692, 0
        %v694 = vsub.s32 0, %v692
        %v695 = vsel %vm693, %v694, %v692
        %v696 = vclz %v695
        %v697 = vsub.s32 %v696, 2
        %vm698 = vcmp.gt.s32.totalorder 0, %v697
        %v699 = vsel %vm698, 0, %v697
        %v700 = vsub.s32 32, %v699
        %v701 = vshll.u32 %v692, %v699
        %v702 = vshrl.u32 %v684, %v700
        %v703 = vor.u32 %v701, %v702
        %v704 = vsub.s32 4294967266, %v699
        %v705 = vadd.s32 %v704, 127
        %v706 = vshll.u32 %v705, 23
        %v707 = vor.u32 4788187, %v706
        %v708 = vand.u32 2147483647, %v707
        %v710 = vcvt.s32.f32 %v703
        %v711 = vmul.f32 %v710, %v708
        %v712 = vxor.u32 %v711, 2147483648
        %v713 = vsel %vm592, %v712, %v711
        %v714 = vsub.s32 4, %v690
        %v715 = vsel %vm592, %v714, %v690
        %v716 = vsel %vm591, %v239, %v713
        %v717 = vsel %vm591, 0, %v715
        %v718 = vmul.f32 %v716, %v716
        %v719 = vmul.f32 %v718, -0.001358992
        %v720 = vadd.f32 %v719, 0.041655596
        %v721 = vmul.f32 %v718, %v720
        %v722 = vadd.f32 %v721, -0.4999988
        %v723 = vmul.f32 %v718, %v722
        %v724 = vadd.f32 1.0, %v723
        %v725 = vmul.f32 %v716, %v716
        %v726 = vmul.f32 %v725, -0.00019511016
        %v727 = vadd.f32 %v726, 0.008332121
        %v728 = vmul.f32 %v725, %v727
        %v729 = vadd.f32 %v728, -0.16666654
        %v730 = vmul.f32 %v725, %v729
        %v731 = vadd.f32 %v730, 1.0
        %v732 = vmul.f32 %v731, %v716
        %vm733 = vweird.f32 %v239
        %v734 = vadd.s32 %v717, 3
        %v735 = vand.u32 %v734, 3
        %vm736 = vcmp.lt.s32.totalorder %v735, 2
        %vm737 = vcmp.eq.s32.totalorder %v735, 0
        %v738 = vxor.u32 %v732, 2147483648
        %v739 = vsel %vm737, %v724, %v738
        %vm740 = vcmp.eq.s32.totalorder %v735, 2
        %v741 = vxor.u32 %v724, 2147483648
        %v742 = vsel %vm740, %v741, %v732
        %v743 = vsel %vm736, %v739, %v742
        %v744 = vsel %vm733, nan, %v743
        %v745 = vand.u32 2147483647, %v242
        %vm746 = vcmp.le.f32.partialorder %v745, 0.7853982
        %vm747 = vcmp.lt.s32.totalorder %v242, 0
        %v748 = vand.u32 %v242, 2139095040
        %v749 = vshrl.u32 %v748, 23
        %v750 = vsub.s32 %v749, 127
        %v751 = vand.u32 2147483647, %v242
        %v752 = vand.u32 %v751, 8388607
        %v753 = vor.u32 %v752, 8388608
        %v754 = vsub.s32 0, %v753
        %v755 = vadd.s32 %v750, 1
        %vm756 = vcmp.gt.s32.totalorder %v755, 0
        %v757 = vsel %vm756, %v755, 0
        %v758 = vshrl.u32 %v757, 5
        %v759 = vand.u32 %v757, 31
        %v760 = vsub.s32 32, %v759
        %v761 = vshrl.u32 683565275, %v760
        %v762 = vshll.u32 683565275, %v759
        %v763 = vshrl.u32 2475754826, %v760
        %v764 = vor.u32 %v762, %v763
        %v765 = vshll.u32 2475754826, %v759
        %v766 = vshrl.u32 2131351028, %v760
        %v767 = vor.u32 %v765, %v766
        %v768 = vshll.u32 2131351028, %v759
        %v769 = vshrl.u32 2102212464, %v760
        %v770 = vor.u32 %v768, %v769
        %v771 = vshll.u32 2102212464, %v759
        %v772 = vshrl.u32 920167782, %v760
        %v773 = vor.u32 %v771, %v772
        %v774 = vshll.u32 920167782, %v759
        %v775 = vshrl.u32 1326507024, %v760
        %v776 = vor.u32 %v774, %v775
        %vm777 = vcmp.lt.s32.totalorder %v758, 1
        %vm778 = vcmp.lt.s32.totalorder %v758, 2
        %vm779 = vcmp.lt.s32.totalorder %v758, 3
        %vm780 = vcmp.lt.s32.totalorder %v758, 4
        %v781 = vsel %vm777, %v761, %v764
        %v782 = vsel %vm780, %v770, 2102212464
        %v783 = vsel %vm779, %v767, %v782
        %v784 = vsel %vm778, %v781, %v783
        %v785 = vsel %vm777, %v764, %v767
        %v786 = vsel %vm780, %v773, 920167782
        %v787 = vsel %vm779, %v770, %v786
        %v788 = vsel %vm778, %v785, %v787
        %v789 = vsel %vm777, %v767, %v770
        %v790 = vsel %vm780, %v776, 1326507024
        %v791 = vsel %vm779, %v773, %v790
        %v792 = vsel %vm778, %v789, %v791
        %v793 = vshll.u32 %v753, 8
        %v794 = vand.u32 %v793, 65535
        %v795 = vshrl.u32 %v793, 16
        %v796 = vand.u32 %v792, 65535
        %v797 = vshrl.u32 %v792, 16
        %v798 = vmul.u32 %v794, %v796
        %v799 = vmul.u32 %v794, %v797
        %v800 = vmul.u32 %v795, %v796
        %v801 = vmul.u32 %v795, %v797
        %v802 = vshll.u32 %v799, 16
        %v803 = vshrl.u32 %v799, 16
        %v804 = vshll.u32 %v800, 16
        %v805 = vshrl.u32 %v800, 16
        %vm806 = vc.u32 %v798, %v802
        %v807 = vsel %vm806, 1, 0
        %v808 = vadd.s32 %v798, %v802
        %v809 = vadd.s32 %v801, %v807
        %vm810 = vc.u32 %v808, %v804
        %v811 = vsel %vm810, 1, 0
        %v812 = vadd.s32 %v808, %v804
        %v813 = vadd.s32 %v809, %v811
        %v814 = vadd.s32 %v813, %v803
        %v815 = vadd.s32 %v814, %v805
        %v816 = vand.u32 %v793, 65535
        %v817 = vshrl.u32 %v793, 16
        %v818 = vand.u32 %v788, 65535
        %v819 = vshrl.u32 %v788, 16
        %v820 = vmul.u32 %v816, %v818
        %v821 = vmul.u32 %v816, %v819
        %v822 = vmul.u32 %v817, %v818
        %v823 = vmul.u32 %v817, %v819
        %v824 = vshll.u32 %v821, 16
        %v825 = vshrl.u32 %v821, 16
        %v826 = vshll.u32 %v822, 16
        %v827 = vshrl.u32 %v822, 16
        %vm828 = vc.u32 %v820, %v824
        %v829 = vsel %vm828, 1, 0
        %v830 = vadd.s32 %v820, %v824
        %v831 = vadd.s32 %v823, %v829
        %vm832 = vc.u32 %v830, %v826
        %v833 = vsel %vm832, 1, 0
        %v834 = vadd.s32 %v830, %v826
        %v835 = vadd.s32 %v831, %v833
        %v836 = vadd.s32 %v835, %v825
        %v837 = vadd.s32 %v836, %v827
        %v838 = vmul.u32 %v793, %v784
        %v839 = vadd.s32 %v815, %v834
        %vm840 = vc.u32 %v815, %v834
        %v841 = vadd.s32 %v837, 1
        %v842 = vsel %vm840, %v841, %v837
        %v843 = vadd.s32 %v838, %v842
        %v844 = vadd.s32 %v843, 536870912
        %v845 = vshrl.u32 %v844, 30
        %v846 = vshll.u32 %v845, 30
        %v847 = vsub.s32 %v843, %v846
        %vm848 = vcmp.lt.s32.totalorder %v847, 0
        %v849 = vsub.s32 0, %v847
        %v850 = vsel %vm848, %v849, %v847
        %v851 = vclz %v850
        %v852 = vsub.s32 %v851, 2
        %vm853 = vcmp.gt.s32.totalorder 0, %v852
        %v854 = vsel %vm853, 0, %v852
        %v855 = vsub.s32 32, %v854
        %v856 = vshll.u32 %v847, %v854
        %v857 = vshrl.u32 %v839, %v855
        %v858 = vor.u32 %v856, %v857
        %v859 = vsub.s32 4294967266, %v854
        %v860 = vadd.s32 %v859, 127
        %v861 = vshll.u32 %v860, 23
        %v862 = vor.u32 4788187, %v861
        %v863 = vand.u32 2147483647, %v862
        %v865 = vcvt.s32.f32 %v858
        %v866 = vmul.f32 %v865, %v863
        %v867 = vxor.u32 %v866, 2147483648
        %v868 = vsel %vm747, %v867, %v866
        %v869 = vsub.s32 4, %v845
        %v870 = vsel %vm747, %v869, %v845
        %v871 = vsel %vm746, %v242, %v868
        %v872 = vsel %vm746, 0, %v870
        %v873 = vmul.f32 %v871, %v871
        %v874 = vmul.f32 %v873, -0.001358992
        %v875 = vadd.f32 %v874, 0.041655596
        %v876 = vmul.f32 %v873, %v875
        %v877 = vadd.f32 %v876, -0.4999988
        %v878 = vmul.f32 %v873, %v877
        %v879 = vadd.f32 1.0, %v878
        %v880 = vmul.f32 %v871, %v871
        %v881 = vmul.f32 %v880, -0.00019511016
        %v882 = vadd.f32 %v881, 0.008332121
        %v883 = vmul.f32 %v880, %v882
        %v884 = vadd.f32 %v883, -0.16666654
        %v885 = vmul.f32 %v880, %v884
        %v886 = vadd.f32 %v885, 1.0
        %v887 = vmul.f32 %v886, %v871
        %vm888 = vweird.f32 %v242
        %v889 = vadd.s32 %v872, 3
        %v890 = vand.u32 %v889, 3
        %vm891 = vcmp.lt.s32.totalorder %v890, 2
        %vm892 = vcmp.eq.s32.totalorder %v890, 0
        %v893 = vxor.u32 %v887, 2147483648
        %v894 = vsel %vm892, %v879, %v893
        %vm895 = vcmp.eq.s32.totalorder %v890, 2
        %v896 = vxor.u32 %v879, 2147483648
        %v897 = vsel %vm895, %v896, %v887
        %v898 = vsel %vm891, %v894, %v897
        %v899 = vsel %vm888, nan, %v898
        %v900 = vand.u32 2147483647, %v245
        %vm901 = vcmp.le.f32.partialorder %v900, 0.7853982
        %vm902 = vcmp.lt.s32.totalorder %v245, 0
        %v903 = vand.u32 %v245, 2139095040
        %v904 = vshrl.u32 %v903, 23
        %v905 = vsub.s32 %v904, 127
        %v906 = vand.u32 2147483647, %v245
        %v907 = vand.u32 %v906, 8388607
        %v908 = vor.u32 %v907, 8388608
        %v909 = vsub.s32 0, %v908
        %v910 = vadd.s32 %v905, 1
        %vm911 = vcmp.gt.s32.totalorder %v910, 0
        %v912 = vsel %vm911, %v910, 0
        %v913 = vshrl.u32 %v912, 5
        %v914 = vand.u32 %v912, 31
        %v915 = vsub.s32 32, %v914
        %v916 = vshrl.u32 683565275, %v915
        %v917 = vshll.u32 683565275, %v914
        %v918 = vshrl.u32 2475754826, %v915
        %v919 = vor.u32 %v917, %v918
        %v920 = vshll.u32 2475754826, %v914
        %v921 = vshrl.u32 2131351028, %v915
        %v922 = vor.u32 %v920, %v921
        %v923 = vshll.u32 2131351028, %v914
        %v924 = vshrl.u32 2102212464, %v915
        %v925 = vor.u32 %v923, %v924
        %v926 = vshll.u32 2102212464, %v914
        %v927 = vshrl.u32 920167782, %v915
        %v928 = vor.u32 %v926, %v927
        %v929 = vshll.u32 920167782, %v914
        %v930 = vshrl.u32 1326507024, %v915
        %v931 = vor.u32 %v929, %v930
        %vm932 = vcmp.lt.s32.totalorder %v913, 1
        %vm933 = vcmp.lt.s32.totalorder %v913, 2
        %vm934 = vcmp.lt.s32.totalorder %v913, 3
        %vm935 = vcmp.lt.s32.totalorder %v913, 4
        %v936 = vsel %vm932, %v916, %v919
        %v937 = vsel %vm935, %v925, 2102212464
        %v938 = vsel %vm934, %v922, %v937
        %v939 = vsel %vm933, %v936, %v938
        %v940 = vsel %vm932, %v919, %v922
        %v941 = vsel %vm935, %v928, 920167782
        %v942 = vsel %vm934, %v925, %v941
        %v943 = vsel %vm933, %v940, %v942
        %v944 = vsel %vm932, %v922, %v925
        %v945 = vsel %vm935, %v931, 1326507024
        %v946 = vsel %vm934, %v928, %v945
        %v947 = vsel %vm933, %v944, %v946
        %v948 = vshll.u32 %v908, 8
        %v949 = vand.u32 %v948, 65535
        %v950 = vshrl.u32 %v948, 16
        %v951 = vand.u32 %v947, 65535
        %v952 = vshrl.u32 %v947, 16
        %v953 = vmul.u32 %v949, %v951
        %v954 = vmul.u32 %v949, %v952
        %v955 = vmul.u32 %v950, %v951
        %v956 = vmul.u32 %v950, %v952
        %v957 = vshll.u32 %v954, 16
        %v958 = vshrl.u32 %v954, 16
        %v959 = vshll.u32 %v955, 16
        %v960 = vshrl.u32 %v955, 16
        %vm961 = vc.u32 %v953, %v957
        %v962 = vsel %vm961, 1, 0
        %v963 = vadd.s32 %v953, %v957
        %v964 = vadd.s32 %v956, %v962
        %vm965 = vc.u32 %v963, %v959
        %v966 = vsel %vm965, 1, 0
        %v967 = vadd.s32 %v963, %v959
        %v968 = vadd.s32 %v964, %v966
        %v969 = vadd.s32 %v968, %v958
        %v970 = vadd.s32 %v969, %v960
        %v971 = vand.u32 %v948, 65535
        %v972 = vshrl.u32 %v948, 16
        %v973 = vand.u32 %v943, 65535
        %v974 = vshrl.u32 %v943, 16
        %v975 = vmul.u32 %v971, %v973
        %v976 = vmul.u32 %v971, %v974
        %v977 = vmul.u32 %v972, %v973
        %v978 = vmul.u32 %v972, %v974
        %v979 = vshll.u32 %v976, 16
        %v980 = vshrl.u32 %v976, 16
        %v981 = vshll.u32 %v977, 16
        %v982 = vshrl.u32 %v977, 16
        %vm983 = vc.u32 %v975, %v979
        %v984 = vsel %vm983, 1, 0
        %v985 = vadd.s32 %v975, %v979
        %v986 = vadd.s32 %v978, %v984
        %vm987 = vc.u32 %v985, %v981
        %v988 = vsel %vm987, 1, 0
        %v989 = vadd.s32 %v985, %v981
        %v990 = vadd.s32 %v986, %v988
        %v991 = vadd.s32 %v990, %v980
        %v992 = vadd.s32 %v991, %v982
        %v993 = vmul.u32 %v948, %v939
        %v994 = vadd.s32 %v970, %v989
        %vm995 = vc.u32 %v970, %v989
        %v996 = vadd.s32 %v992, 1
        %v997 = vsel %vm995, %v996, %v992
        %v998 = vadd.s32 %v993, %v997
        %v999 = vadd.s32 %v998, 536870912
        %v1000 = vshrl.u32 %v999, 30
        %v1001 = vshll.u32 %v1000, 30
        %v1002 = vsub.s32 %v998, %v1001
        %vm1003 = vcmp.lt.s32.totalorder %v1002, 0
        %v1004 = vsub.s32 0, %v1002
        %v1005 = vsel %vm1003, %v1004, %v1002
        %v1006 = vclz %v1005
        %v1007 = vsub.s32 %v1006, 2
        %vm1008 = vcmp.gt.s32.totalorder 0, %v1007
        %v1009 = vsel %vm1008, 0, %v1007
        %v1010 = vsub.s32 32, %v1009
        %v1011 = vshll.u32 %v1002, %v1009
        %v1012 = vshrl.u32 %v994, %v1010
        %v1013 = vor.u32 %v1011, %v1012
        %v1014 = vsub.s32 4294967266, %v1009
        %v1015 = vadd.s32 %v1014, 127
        %v1016 = vshll.u32 %v1015, 23
        %v1017 = vor.u32 4788187, %v1016
        %v1018 = vand.u32 2147483647, %v1017
        %v1020 = vcvt.s32.f32 %v1013
        %v1021 = vmul.f32 %v1020, %v1018
        %v1022 = vxor.u32 %v1021, 2147483648
        %v1023 = vsel %vm902, %v1022, %v1021
        %v1024 = vsub.s32 4, %v1000
        %v1025 = vsel %vm902, %v1024, %v1000
        %v1026 = vsel %vm901, %v245, %v1023
        %v1027 = vsel %vm901, 0, %v1025
        %v1028 = vmul.f32 %v1026, %v1026
        %v1029 = vmul.f32 %v1028, -0.001358992
        %v1030 = vadd.f32 %v1029, 0.041655596
        %v1031 = vmul.f32 %v1028, %v1030
        %v1032 = vadd.f32 %v1031, -0.4999988
        %v1033 = vmul.f32 %v1028, %v1032
        %v1034 = vadd.f32 1.0, %v1033
        %v1035 = vmul.f32 %v1026, %v1026
        %v1036 = vmul.f32 %v1035, -0.00019511016
        %v1037 = vadd.f32 %v1036, 0.008332121
        %v1038 = vmul.f32 %v1035, %v1037
        %v1039 = vadd.f32 %v1038, -0.16666654
        %v1040 = vmul.f32 %v1035, %v1039
        %v1041 = vadd.f32 %v1040, 1.0
        %v1042 = vmul.f32 %v1041, %v1026
        %vm1043 = vweird.f32 %v245
        %v1044 = vadd.s32 %v1027, 3
        %v1045 = vand.u32 %v1044, 3
        %vm1046 = vcmp.lt.s32.totalorder %v1045, 2
        %vm1047 = vcmp.eq.s32.totalorder %v1045, 0
        %v1048 = vxor.u32 %v1042, 2147483648
        %v1049 = vsel %vm1047, %v1034, %v1048
        %vm1050 = vcmp.eq.s32.totalorder %v1045, 2
        %v1051 = vxor.u32 %v1034, 2147483648
        %v1052 = vsel %vm1050, %v1051, %v1042
        %v1053 = vsel %vm1046, %v1049, %v1052
        %v1054 = vsel %vm1043, nan, %v1053
        %v1055 = vand.u32 2147483647, %v248
        %vm1056 = vcmp.le.f32.partialorder %v1055, 0.7853982
        %vm1057 = vcmp.lt.s32.totalorder %v248, 0
        %v1058 = vand.u32 %v248, 2139095040
        %v1059 = vshrl.u32 %v1058, 23
        %v1060 = vsub.s32 %v1059, 127
        %v1061 = vand.u32 2147483647, %v248
        %v1062 = vand.u32 %v1061, 8388607
        %v1063 = vor.u32 %v1062, 8388608
        %v1064 = vsub.s32 0, %v1063
        %v1065 = vadd.s32 %v1060, 1
        %vm1066 = vcmp.gt.s32.totalorder %v1065, 0
        %v1067 = vsel %vm1066, %v1065, 0
        %v1068 = vshrl.u32 %v1067, 5
        %v1069 = vand.u32 %v1067, 31
        %v1070 = vsub.s32 32, %v1069
        %v1071 = vshrl.u32 683565275, %v1070
        %v1072 = vshll.u32 683565275, %v1069
        %v1073 = vshrl.u32 2475754826, %v1070
        %v1074 = vor.u32 %v1072, %v1073
        %v1075 = vshll.u32 2475754826, %v1069
        %v1076 = vshrl.u32 2131351028, %v1070
        %v1077 = vor.u32 %v1075, %v1076
        %v1078 = vshll.u32 2131351028, %v1069
        %v1079 = vshrl.u32 2102212464, %v1070
        %v1080 = vor.u32 %v1078, %v1079
        %v1081 = vshll.u32 2102212464, %v1069
        %v1082 = vshrl.u32 920167782, %v1070
        %v1083 = vor.u32 %v1081, %v1082
        %v1084 = vshll.u32 920167782, %v1069
        %v1085 = vshrl.u32 1326507024, %v1070
        %v1086 = vor.u32 %v1084, %v1085
        %vm1087 = vcmp.lt.s32.totalorder %v1068, 1
        %vm1088 = vcmp.lt.s32.totalorder %v1068, 2
        %vm1089 = vcmp.lt.s32.totalorder %v1068, 3
        %vm1090 = vcmp.lt.s32.totalorder %v1068, 4
        %v1091 = vsel %vm1087, %v1071, %v1074
        %v1092 = vsel %vm1090, %v1080, 2102212464
        %v1093 = vsel %vm1089, %v1077, %v1092
        %v1094 = vsel %vm1088, %v1091, %v1093
        %v1095 = vsel %vm1087, %v1074, %v1077
        %v1096 = vsel %vm1090, %v1083, 920167782
        %v1097 = vsel %vm1089, %v1080, %v1096
        %v1098 = vsel %vm1088, %v1095, %v1097
        %v1099 = vsel %vm1087, %v1077, %v1080
        %v1100 = vsel %vm1090, %v1086, 1326507024
        %v1101 = vsel %vm1089, %v1083, %v1100
        %v1102 = vsel %vm1088, %v1099, %v1101
        %v1103 = vshll.u32 %v1063, 8
        %v1104 = vand.u32 %v1103, 65535
        %v1105 = vshrl.u32 %v1103, 16
        %v1106 = vand.u32 %v1102, 65535
        %v1107 = vshrl.u32 %v1102, 16
        %v1108 = vmul.u32 %v1104, %v1106
        %v1109 = vmul.u32 %v1104, %v1107
        %v1110 = vmul.u32 %v1105, %v1106
        %v1111 = vmul.u32 %v1105, %v1107
        %v1112 = vshll.u32 %v1109, 16
        %v1113 = vshrl.u32 %v1109, 16
        %v1114 = vshll.u32 %v1110, 16
        %v1115 = vshrl.u32 %v1110, 16
        %vm1116 = vc.u32 %v1108, %v1112
        %v1117 = vsel %vm1116, 1, 0
        %v1118 = vadd.s32 %v1108, %v1112
        %v1119 = vadd.s32 %v1111, %v1117
        %vm1120 = vc.u32 %v1118, %v1114
        %v1121 = vsel %vm1120, 1, 0
        %v1122 = vadd.s32 %v1118, %v1114
        %v1123 = vadd.s32 %v1119, %v1121
        %v1124 = vadd.s32 %v1123, %v1113
        %v1125 = vadd.s32 %v1124, %v1115
        %v1126 = vand.u32 %v1103, 65535
        %v1127 = vshrl.u32 %v1103, 16
        %v1128 = vand.u32 %v1098, 65535
        %v1129 = vshrl.u32 %v1098, 16
        %v1130 = vmul.u32 %v1126, %v1128
        %v1131 = vmul.u32 %v1126, %v1129
        %v1132 = vmul.u32 %v1127, %v1128
        %v1133 = vmul.u32 %v1127, %v1129
        %v1134 = vshll.u32 %v1131, 16
        %v1135 = vshrl.u32 %v1131, 16
        %v1136 = vshll.u32 %v1132, 16
        %v1137 = vshrl.u32 %v1132, 16
        %vm1138 = vc.u32 %v1130, %v1134
        %v1139 = vsel %vm1138, 1, 0
        %v1140 = vadd.s32 %v1130, %v1134
        %v1141 = vadd.s32 %v1133, %v1139
        %vm1142 = vc.u32 %v1140, %v1136
        %v1143 = vsel %vm1142, 1, 0
        %v1144 = vadd.s32 %v1140, %v1136
        %v1145 = vadd.s32 %v1141, %v1143
        %v1146 = vadd.s32 %v1145, %v1135
        %v1147 = vadd.s32 %v1146, %v1137
        %v1148 = vmul.u32 %v1103, %v1094
        %v1149 = vadd.s32 %v1125, %v1144
        %vm1150 = vc.u32 %v1125, %v1144
        %v1151 = vadd.s32 %v1147, 1
        %v1152 = vsel %vm1150, %v1151, %v1147
        %v1153 = vadd.s32 %v1148, %v1152
        %v1154 = vadd.s32 %v1153, 536870912
        %v1155 = vshrl.u32 %v1154, 30
        %v1156 = vshll.u32 %v1155, 30
        %v1157 = vsub.s32 %v1153, %v1156
        %vm1158 = vcmp.lt.s32.totalorder %v1157, 0
        %v1159 = vsub.s32 0, %v1157
        %v1160 = vsel %vm1158, %v1159, %v1157
        %v1161 = vclz %v1160
        %v1162 = vsub.s32 %v1161, 2
        %vm1163 = vcmp.gt.s32.totalorder 0, %v1162
        %v1164 = vsel %vm1163, 0, %v1162
        %v1165 = vsub.s32 32, %v1164
        %v1166 = vshll.u32 %v1157, %v1164
        %v1167 = vshrl.u32 %v1149, %v1165
        %v1168 = vor.u32 %v1166, %v1167
        %v1169 = vsub.s32 4294967266, %v1164
        %v1170 = vadd.s32 %v1169, 127
        %v1171 = vshll.u32 %v1170, 23
        %v1172 = vor.u32 4788187, %v1171
        %v1173 = vand.u32 2147483647, %v1172
        %v1175 = vcvt.s32.f32 %v1168
        %v1176 = vmul.f32 %v1175, %v1173
        %v1177 = vxor.u32 %v1176, 2147483648
        %v1178 = vsel %vm1057, %v1177, %v1176
        %v1179 = vsub.s32 4, %v1155
        %v1180 = vsel %vm1057, %v1179, %v1155
        %v1181 = vsel %vm1056, %v248, %v1178
        %v1182 = vsel %vm1056, 0, %v1180
        %v1183 = vmul.f32 %v1181, %v1181
        %v1184 = vmul.f32 %v1183, -0.001358992
        %v1185 = vadd.f32 %v1184, 0.041655596
        %v1186 = vmul.f32 %v1183, %v1185
        %v1187 = vadd.f32 %v1186, -0.4999988
        %v1188 = vmul.f32 %v1183, %v1187
        %v1189 = vadd.f32 1.0, %v1188
        %v1190 = vmul.f32 %v1181, %v1181
        %v1191 = vmul.f32 %v1190, -0.00019511016
        %v1192 = vadd.f32 %v1191, 0.008332121
        %v1193 = vmul.f32 %v1190, %v1192
        %v1194 = vadd.f32 %v1193, -0.16666654
        %v1195 = vmul.f32 %v1190, %v1194
        %v1196 = vadd.f32 %v1195, 1.0
        %v1197 = vmul.f32 %v1196, %v1181
        %vm1198 = vweird.f32 %v248
        %v1199 = vadd.s32 %v1182, 3
        %v1200 = vand.u32 %v1199, 3
        %vm1201 = vcmp.lt.s32.totalorder %v1200, 2
        %vm1202 = vcmp.eq.s32.totalorder %v1200, 0
        %v1203 = vxor.u32 %v1197, 2147483648
        %v1204 = vsel %vm1202, %v1189, %v1203
        %vm1205 = vcmp.eq.s32.totalorder %v1200, 2
        %v1206 = vxor.u32 %v1189, 2147483648
        %v1207 = vsel %vm1205, %v1206, %v1197
        %v1208 = vsel %vm1201, %v1204, %v1207
        %v1209 = vsel %vm1198, nan, %v1208
        %v1210 = vand.u32 2147483647, %v251
        %vm1211 = vcmp.le.f32.partialorder %v1210, 0.7853982
        %vm1212 = vcmp.lt.s32.totalorder %v251, 0
        %v1213 = vand.u32 %v251, 2139095040
        %v1214 = vshrl.u32 %v1213, 23
        %v1215 = vsub.s32 %v1214, 127
        %v1216 = vand.u32 2147483647, %v251
        %v1217 = vand.u32 %v1216, 8388607
        %v1218 = vor.u32 %v1217, 8388608
        %v1219 = vsub.s32 0, %v1218
        %v1220 = vadd.s32 %v1215, 1
        %vm1221 = vcmp.gt.s32.totalorder %v1220, 0
        %v1222 = vsel %vm1221, %v1220, 0
        %v1223 = vshrl.u32 %v1222, 5
        %v1224 = vand.u32 %v1222, 31
        %v1225 = vsub.s32 32, %v1224
        %v1226 = vshrl.u32 683565275, %v1225
        %v1227 = vshll.u32 683565275, %v1224
        %v1228 = vshrl.u32 2475754826, %v1225
        %v1229 = vor.u32 %v1227, %v1228
        %v1230 = vshll.u32 2475754826, %v1224
        %v1231 = vshrl.u32 2131351028, %v1225
        %v1232 = vor.u32 %v1230, %v1231
        %v1233 = vshll.u32 2131351028, %v1224
        %v1234 = vshrl.u32 2102212464, %v1225
        %v1235 = vor.u32 %v1233, %v1234
        %v1236 = vshll.u32 2102212464, %v1224
        %v1237 = vshrl.u32 920167782, %v1225
        %v1238 = vor.u32 %v1236, %v1237
        %v1239 = vshll.u32 920167782, %v1224
        %v1240 = vshrl.u32 1326507024, %v1225
        %v1241 = vor.u32 %v1239, %v1240
        %vm1242 = vcmp.lt.s32.totalorder %v1223, 1
        %vm1243 = vcmp.lt.s32.totalorder %v1223, 2
        %vm1244 = vcmp.lt.s32.totalorder %v1223, 3
        %vm1245 = vcmp.lt.s32.totalorder %v1223, 4
        %v1246 = vsel %vm1242, %v1226, %v1229
        %v1247 = vsel %vm1245, %v1235, 2102212464
        %v1248 = vsel %vm1244, %v1232, %v1247
        %v1249 = vsel %vm1243, %v1246, %v1248
        %v1250 = vsel %vm1242, %v1229, %v1232
        %v1251 = vsel %vm1245, %v1238, 920167782
        %v1252 = vsel %vm1244, %v1235, %v1251
        %v1253 = vsel %vm1243, %v1250, %v1252
        %v1254 = vsel %vm1242, %v1232, %v1235
        %v1255 = vsel %vm1245, %v1241, 1326507024
        %v1256 = vsel %vm1244, %v1238, %v1255
        %v1257 = vsel %vm1243, %v1254, %v1256
        %v1258 = vshll.u32 %v1218, 8
        %v1259 = vand.u32 %v1258, 65535
        %v1260 = vshrl.u32 %v1258, 16
        %v1261 = vand.u32 %v1257, 65535
        %v1262 = vshrl.u32 %v1257, 16
        %v1263 = vmul.u32 %v1259, %v1261
        %v1264 = vmul.u32 %v1259, %v1262
        %v1265 = vmul.u32 %v1260, %v1261
        %v1266 = vmul.u32 %v1260, %v1262
        %v1267 = vshll.u32 %v1264, 16
        %v1268 = vshrl.u32 %v1264, 16
        %v1269 = vshll.u32 %v1265, 16
        %v1270 = vshrl.u32 %v1265, 16
        %vm1271 = vc.u32 %v1263, %v1267
        %v1272 = vsel %vm1271, 1, 0
        %v1273 = vadd.s32 %v1263, %v1267
        %v1274 = vadd.s32 %v1266, %v1272
        %vm1275 = vc.u32 %v1273, %v1269
        %v1276 = vsel %vm1275, 1, 0
        %v1277 = vadd.s32 %v1273, %v1269
        %v1278 = vadd.s32 %v1274, %v1276
        %v1279 = vadd.s32 %v1278, %v1268
        %v1280 = vadd.s32 %v1279, %v1270
        %v1281 = vand.u32 %v1258, 65535
        %v1282 = vshrl.u32 %v1258, 16
        %v1283 = vand.u32 %v1253, 65535
        %v1284 = vshrl.u32 %v1253, 16
        %v1285 = vmul.u32 %v1281, %v1283
        %v1286 = vmul.u32 %v1281, %v1284
        %v1287 = vmul.u32 %v1282, %v1283
        %v1288 = vmul.u32 %v1282, %v1284
        %v1289 = vshll.u32 %v1286, 16
        %v1290 = vshrl.u32 %v1286, 16
        %v1291 = vshll.u32 %v1287, 16
        %v1292 = vshrl.u32 %v1287, 16
        %vm1293 = vc.u32 %v1285, %v1289
        %v1294 = vsel %vm1293, 1, 0
        %v1295 = vadd.s32 %v1285, %v1289
        %v1296 = vadd.s32 %v1288, %v1294
        %vm1297 = vc.u32 %v1295, %v1291
        %v1298 = vsel %vm1297, 1, 0
        %v1299 = vadd.s32 %v1295, %v1291
        %v1300 = vadd.s32 %v1296, %v1298
        %v1301 = vadd.s32 %v1300, %v1290
        %v1302 = vadd.s32 %v1301, %v1292
        %v1303 = vmul.u32 %v1258, %v1249
        %v1304 = vadd.s32 %v1280, %v1299
        %vm1305 = vc.u32 %v1280, %v1299
        %v1306 = vadd.s32 %v1302, 1
        %v1307 = vsel %vm1305, %v1306, %v1302
        %v1308 = vadd.s32 %v1303, %v1307
        %v1309 = vadd.s32 %v1308, 536870912
        %v1310 = vshrl.u32 %v1309, 30
        %v1311 = vshll.u32 %v1310, 30
        %v1312 = vsub.s32 %v1308, %v1311
        %vm1313 = vcmp.lt.s32.totalorder %v1312, 0
        %v1314 = vsub.s32 0, %v1312
        %v1315 = vsel %vm1313, %v1314, %v1312
        %v1316 = vclz %v1315
        %v1317 = vsub.s32 %v1316, 2
        %vm1318 = vcmp.gt.s32.totalorder 0, %v1317
        %v1319 = vsel %vm1318, 0, %v1317
        %v1320 = vsub.s32 32, %v1319
        %v1321 = vshll.u32 %v1312, %v1319
        %v1322 = vshrl.u32 %v1304, %v1320
        %v1323 = vor.u32 %v1321, %v1322
        %v1324 = vsub.s32 4294967266, %v1319
        %v1325 = vadd.s32 %v1324, 127
        %v1326 = vshll.u32 %v1325, 23
        %v1327 = vor.u32 4788187, %v1326
        %v1328 = vand.u32 2147483647, %v1327
        %v1330 = vcvt.s32.f32 %v1323
        %v1331 = vmul.f32 %v1330, %v1328
        %v1332 = vxor.u32 %v1331, 2147483648
        %v1333 = vsel %vm1212, %v1332, %v1331
        %v1334 = vsub.s32 4, %v1310
        %v1335 = vsel %vm1212, %v1334, %v1310
        %v1336 = vsel %vm1211, %v251, %v1333
        %v1337 = vsel %vm1211, 0, %v1335
        %v1338 = vmul.f32 %v1336, %v1336
        %v1339 = vmul.f32 %v1338, -0.001358992
        %v1340 = vadd.f32 %v1339, 0.041655596
        %v1341 = vmul.f32 %v1338, %v1340
        %v1342 = vadd.f32 %v1341, -0.4999988
        %v1343 = vmul.f32 %v1338, %v1342
        %v1344 = vadd.f32 1.0, %v1343
        %v1345 = vmul.f32 %v1336, %v1336
        %v1346 = vmul.f32 %v1345, -0.00019511016
        %v1347 = vadd.f32 %v1346, 0.008332121
        %v1348 = vmul.f32 %v1345, %v1347
        %v1349 = vadd.f32 %v1348, -0.16666654
        %v1350 = vmul.f32 %v1345, %v1349
        %v1351 = vadd.f32 %v1350, 1.0
        %v1352 = vmul.f32 %v1351, %v1336
        %vm1353 = vweird.f32 %v251
        %v1354 = vadd.s32 %v1337, 3
        %v1355 = vand.u32 %v1354, 3
        %vm1356 = vcmp.lt.s32.totalorder %v1355, 2
        %vm1357 = vcmp.eq.s32.totalorder %v1355, 0
        %v1358 = vxor.u32 %v1352, 2147483648
        %v1359 = vsel %vm1357, %v1344, %v1358
        %vm1360 = vcmp.eq.s32.totalorder %v1355, 2
        %v1361 = vxor.u32 %v1344, 2147483648
        %v1362 = vsel %vm1360, %v1361, %v1352
        %v1363 = vsel %vm1356, %v1359, %v1362
        %v1364 = vsel %vm1353, nan, %v1363
        %v1365 = vand.u32 2147483647, %v254
        %vm1366 = vcmp.le.f32.partialorder %v1365, 0.7853982
        %vm1367 = vcmp.lt.s32.totalorder %v254, 0
        %v1368 = vand.u32 %v254, 2139095040
        %v1369 = vshrl.u32 %v1368, 23
        %v1370 = vsub.s32 %v1369, 127
        %v1371 = vand.u32 2147483647, %v254
        %v1372 = vand.u32 %v1371, 8388607
        %v1373 = vor.u32 %v1372, 8388608
        %v1374 = vsub.s32 0, %v1373
        %v1375 = vadd.s32 %v1370, 1
        %vm1376 = vcmp.gt.s32.totalorder %v1375, 0
        %v1377 = vsel %vm1376, %v1375, 0
        %v1378 = vshrl.u32 %v1377, 5
        %v1379 = vand.u32 %v1377, 31
        %v1380 = vsub.s32 32, %v1379
        %v1381 = vshrl.u32 683565275, %v1380
        %v1382 = vshll.u32 683565275, %v1379
        %v1383 = vshrl.u32 2475754826, %v1380
        %v1384 = vor.u32 %v1382, %v1383
        %v1385 = vshll.u32 2475754826, %v1379
        %v1386 = vshrl.u32 2131351028, %v1380
        %v1387 = vor.u32 %v1385, %v1386
        %v1388 = vshll.u32 2131351028, %v1379
        %v1389 = vshrl.u32 2102212464, %v1380
        %v1390 = vor.u32 %v1388, %v1389
        %v1391 = vshll.u32 2102212464, %v1379
        %v1392 = vshrl.u32 920167782, %v1380
        %v1393 = vor.u32 %v1391, %v1392
        %v1394 = vshll.u32 920167782, %v1379
        %v1395 = vshrl.u32 1326507024, %v1380
        %v1396 = vor.u32 %v1394, %v1395
        %vm1397 = vcmp.lt.s32.totalorder %v1378, 1
        %vm1398 = vcmp.lt.s32.totalorder %v1378, 2
        %vm1399 = vcmp.lt.s32.totalorder %v1378, 3
        %vm1400 = vcmp.lt.s32.totalorder %v1378, 4
        %v1401 = vsel %vm1397, %v1381, %v1384
        %v1402 = vsel %vm1400, %v1390, 2102212464
        %v1403 = vsel %vm1399, %v1387, %v1402
        %v1404 = vsel %vm1398, %v1401, %v1403
        %v1405 = vsel %vm1397, %v1384, %v1387
        %v1406 = vsel %vm1400, %v1393, 920167782
        %v1407 = vsel %vm1399, %v1390, %v1406
        %v1408 = vsel %vm1398, %v1405, %v1407
        %v1409 = vsel %vm1397, %v1387, %v1390
        %v1410 = vsel %vm1400, %v1396, 1326507024
        %v1411 = vsel %vm1399, %v1393, %v1410
        %v1412 = vsel %vm1398, %v1409, %v1411
        %v1413 = vshll.u32 %v1373, 8
        %v1414 = vand.u32 %v1413, 65535
        %v1415 = vshrl.u32 %v1413, 16
        %v1416 = vand.u32 %v1412, 65535
        %v1417 = vshrl.u32 %v1412, 16
        %v1418 = vmul.u32 %v1414, %v1416
        %v1419 = vmul.u32 %v1414, %v1417
        %v1420 = vmul.u32 %v1415, %v1416
        %v1421 = vmul.u32 %v1415, %v1417
        %v1422 = vshll.u32 %v1419, 16
        %v1423 = vshrl.u32 %v1419, 16
        %v1424 = vshll.u32 %v1420, 16
        %v1425 = vshrl.u32 %v1420, 16
        %vm1426 = vc.u32 %v1418, %v1422
        %v1427 = vsel %vm1426, 1, 0
        %v1428 = vadd.s32 %v1418, %v1422
        %v1429 = vadd.s32 %v1421, %v1427
        %vm1430 = vc.u32 %v1428, %v1424
        %v1431 = vsel %vm1430, 1, 0
        %v1432 = vadd.s32 %v1428, %v1424
        %v1433 = vadd.s32 %v1429, %v1431
        %v1434 = vadd.s32 %v1433, %v1423
        %v1435 = vadd.s32 %v1434, %v1425
        %v1436 = vand.u32 %v1413, 65535
        %v1437 = vshrl.u32 %v1413, 16
        %v1438 = vand.u32 %v1408, 65535
        %v1439 = vshrl.u32 %v1408, 16
        %v1440 = vmul.u32 %v1436, %v1438
        %v1441 = vmul.u32 %v1436, %v1439
        %v1442 = vmul.u32 %v1437, %v1438
        %v1443 = vmul.u32 %v1437, %v1439
        %v1444 = vshll.u32 %v1441, 16
        %v1445 = vshrl.u32 %v1441, 16
        %v1446 = vshll.u32 %v1442, 16
        %v1447 = vshrl.u32 %v1442, 16
        %vm1448 = vc.u32 %v1440, %v1444
        %v1449 = vsel %vm1448, 1, 0
        %v1450 = vadd.s32 %v1440, %v1444
        %v1451 = vadd.s32 %v1443, %v1449
        %vm1452 = vc.u32 %v1450, %v1446
        %v1453 = vsel %vm1452, 1, 0
        %v1454 = vadd.s32 %v1450, %v1446
        %v1455 = vadd.s32 %v1451, %v1453
        %v1456 = vadd.s32 %v1455, %v1445
        %v1457 = vadd.s32 %v1456, %v1447
        %v1458 = vmul.u32 %v1413, %v1404
        %v1459 = vadd.s32 %v1435, %v1454
        %vm1460 = vc.u32 %v1435, %v1454
        %v1461 = vadd.s32 %v1457, 1
        %v1462 = vsel %vm1460, %v1461, %v1457
        %v1463 = vadd.s32 %v1458, %v1462
        %v1464 = vadd.s32 %v1463, 536870912
        %v1465 = vshrl.u32 %v1464, 30
        %v1466 = vshll.u32 %v1465, 30
        %v1467 = vsub.s32 %v1463, %v1466
        %vm1468 = vcmp.lt.s32.totalorder %v1467, 0
        %v1469 = vsub.s32 0, %v1467
        %v1470 = vsel %vm1468, %v1469, %v1467
        %v1471 = vclz %v1470
        %v1472 = vsub.s32 %v1471, 2
        %vm1473 = vcmp.gt.s32.totalorder 0, %v1472
        %v1474 = vsel %vm1473, 0, %v1472
        %v1475 = vsub.s32 32, %v1474
        %v1476 = vshll.u32 %v1467, %v1474
        %v1477 = vshrl.u32 %v1459, %v1475
        %v1478 = vor.u32 %v1476, %v1477
        %v1479 = vsub.s32 4294967266, %v1474
        %v1480 = vadd.s32 %v1479, 127
        %v1481 = vshll.u32 %v1480, 23
        %v1482 = vor.u32 4788187, %v1481
        %v1483 = vand.u32 2147483647, %v1482
        %v1485 = vcvt.s32.f32 %v1478
        %v1486 = vmul.f32 %v1485, %v1483
        %v1487 = vxor.u32 %v1486, 2147483648
        %v1488 = vsel %vm1367, %v1487, %v1486
        %v1489 = vsub.s32 4, %v1465
        %v1490 = vsel %vm1367, %v1489, %v1465
        %v1491 = vsel %vm1366, %v254, %v1488
        %v1492 = vsel %vm1366, 0, %v1490
        %v1493 = vmul.f32 %v1491, %v1491
        %v1494 = vmul.f32 %v1493, -0.001358992
        %v1495 = vadd.f32 %v1494, 0.041655596
        %v1496 = vmul.f32 %v1493, %v1495
        %v1497 = vadd.f32 %v1496, -0.4999988
        %v1498 = vmul.f32 %v1493, %v1497
        %v1499 = vadd.f32 1.0, %v1498
        %v1500 = vmul.f32 %v1491, %v1491
        %v1501 = vmul.f32 %v1500, -0.00019511016
        %v1502 = vadd.f32 %v1501, 0.008332121
        %v1503 = vmul.f32 %v1500, %v1502
        %v1504 = vadd.f32 %v1503, -0.16666654
        %v1505 = vmul.f32 %v1500, %v1504
        %v1506 = vadd.f32 %v1505, 1.0
        %v1507 = vmul.f32 %v1506, %v1491
        %vm1508 = vweird.f32 %v254
        %v1509 = vadd.s32 %v1492, 3
        %v1510 = vand.u32 %v1509, 3
        %vm1511 = vcmp.lt.s32.totalorder %v1510, 2
        %vm1512 = vcmp.eq.s32.totalorder %v1510, 0
        %v1513 = vxor.u32 %v1507, 2147483648
        %v1514 = vsel %vm1512, %v1499, %v1513
        %vm1515 = vcmp.eq.s32.totalorder %v1510, 2
        %v1516 = vxor.u32 %v1499, 2147483648
        %v1517 = vsel %vm1515, %v1516, %v1507
        %v1518 = vsel %vm1511, %v1514, %v1517
        %v1519 = vsel %vm1508, nan, %v1518
        %v1520 = vand.u32 2147483647, %v257
        %vm1521 = vcmp.le.f32.partialorder %v1520, 0.7853982
        %vm1522 = vcmp.lt.s32.totalorder %v257, 0
        %v1523 = vand.u32 %v257, 2139095040
        %v1524 = vshrl.u32 %v1523, 23
        %v1525 = vsub.s32 %v1524, 127
        %v1526 = vand.u32 2147483647, %v257
        %v1527 = vand.u32 %v1526, 8388607
        %v1528 = vor.u32 %v1527, 8388608
        %v1529 = vsub.s32 0, %v1528
        %v1530 = vadd.s32 %v1525, 1
        %vm1531 = vcmp.gt.s32.totalorder %v1530, 0
        %v1532 = vsel %vm1531, %v1530, 0
        %v1533 = vshrl.u32 %v1532, 5
        %v1534 = vand.u32 %v1532, 31
        %v1535 = vsub.s32 32, %v1534
        %v1536 = vshrl.u32 683565275, %v1535
        %v1537 = vshll.u32 683565275, %v1534
        %v1538 = vshrl.u32 2475754826, %v1535
        %v1539 = vor.u32 %v1537, %v1538
        %v1540 = vshll.u32 2475754826, %v1534
        %v1541 = vshrl.u32 2131351028, %v1535
        %v1542 = vor.u32 %v1540, %v1541
        %v1543 = vshll.u32 2131351028, %v1534
        %v1544 = vshrl.u32 2102212464, %v1535
        %v1545 = vor.u32 %v1543, %v1544
        %v1546 = vshll.u32 2102212464, %v1534
        %v1547 = vshrl.u32 920167782, %v1535
        %v1548 = vor.u32 %v1546, %v1547
        %v1549 = vshll.u32 920167782, %v1534
        %v1550 = vshrl.u32 1326507024, %v1535
        %v1551 = vor.u32 %v1549, %v1550
        %vm1552 = vcmp.lt.s32.totalorder %v1533, 1
        %vm1553 = vcmp.lt.s32.totalorder %v1533, 2
        %vm1554 = vcmp.lt.s32.totalorder %v1533, 3
        %vm1555 = vcmp.lt.s32.totalorder %v1533, 4
        %v1556 = vsel %vm1552, %v1536, %v1539
        %v1557 = vsel %vm1555, %v1545, 2102212464
        %v1558 = vsel %vm1554, %v1542, %v1557
        %v1559 = vsel %vm1553, %v1556, %v1558
        %v1560 = vsel %vm1552, %v1539, %v1542
        %v1561 = vsel %vm1555, %v1548, 920167782
        %v1562 = vsel %vm1554, %v1545, %v1561
        %v1563 = vsel %vm1553, %v1560, %v1562
        %v1564 = vsel %vm1552, %v1542, %v1545
        %v1565 = vsel %vm1555, %v1551, 1326507024
        %v1566 = vsel %vm1554, %v1548, %v1565
        %v1567 = vsel %vm1553, %v1564, %v1566
        %v1568 = vshll.u32 %v1528, 8
        %v1569 = vand.u32 %v1568, 65535
        %v1570 = vshrl.u32 %v1568, 16
        %v1571 = vand.u32 %v1567, 65535
        %v1572 = vshrl.u32 %v1567, 16
        %v1573 = vmul.u32 %v1569, %v1571
        %v1574 = vmul.u32 %v1569, %v1572
        %v1575 = vmul.u32 %v1570, %v1571
        %v1576 = vmul.u32 %v1570, %v1572
        %v1577 = vshll.u32 %v1574, 16
        %v1578 = vshrl.u32 %v1574, 16
        %v1579 = vshll.u32 %v1575, 16
        %v1580 = vshrl.u32 %v1575, 16
        %vm1581 = vc.u32 %v1573, %v1577
        %v1582 = vsel %vm1581, 1, 0
        %v1583 = vadd.s32 %v1573, %v1577
        %v1584 = vadd.s32 %v1576, %v1582
        %vm1585 = vc.u32 %v1583, %v1579
        %v1586 = vsel %vm1585, 1, 0
        %v1587 = vadd.s32 %v1583, %v1579
        %v1588 = vadd.s32 %v1584, %v1586
        %v1589 = vadd.s32 %v1588, %v1578
        %v1590 = vadd.s32 %v1589, %v1580
        %v1591 = vand.u32 %v1568, 65535
        %v1592 = vshrl.u32 %v1568, 16
        %v1593 = vand.u32 %v1563, 65535
        %v1594 = vshrl.u32 %v1563, 16
        %v1595 = vmul.u32 %v1591, %v1593
        %v1596 = vmul.u32 %v1591, %v1594
        %v1597 = vmul.u32 %v1592, %v1593
        %v1598 = vmul.u32 %v1592, %v1594
        %v1599 = vshll.u32 %v1596, 16
        %v1600 = vshrl.u32 %v1596, 16
        %v1601 = vshll.u32 %v1597, 16
        %v1602 = vshrl.u32 %v1597, 16
        %vm1603 = vc.u32 %v1595, %v1599
        %v1604 = vsel %vm1603, 1, 0
        %v1605 = vadd.s32 %v1595, %v1599
        %v1606 = vadd.s32 %v1598, %v1604
        %vm1607 = vc.u32 %v1605, %v1601
        %v1608 = vsel %vm1607, 1, 0
        %v1609 = vadd.s32 %v1605, %v1601
        %v1610 = vadd.s32 %v1606, %v1608
        %v1611 = vadd.s32 %v1610, %v1600
        %v1612 = vadd.s32 %v1611, %v1602
        %v1613 = vmul.u32 %v1568, %v1559
        %v1614 = vadd.s32 %v1590, %v1609
        %vm1615 = vc.u32 %v1590, %v1609
        %v1616 = vadd.s32 %v1612, 1
        %v1617 = vsel %vm1615, %v1616, %v1612
        %v1618 = vadd.s32 %v1613, %v1617
        %v1619 = vadd.s32 %v1618, 536870912
        %v1620 = vshrl.u32 %v1619, 30
        %v1621 = vshll.u32 %v1620, 30
        %v1622 = vsub.s32 %v1618, %v1621
        %vm1623 = vcmp.lt.s32.totalorder %v1622, 0
        %v1624 = vsub.s32 0, %v1622
        %v1625 = vsel %vm1623, %v1624, %v1622
        %v1626 = vclz %v1625
        %v1627 = vsub.s32 %v1626, 2
        %vm1628 = vcmp.gt.s32.totalorder 0, %v1627
        %v1629 = vsel %vm1628, 0, %v1627
        %v1630 = vsub.s32 32, %v1629
        %v1631 = vshll.u32 %v1622, %v1629
        %v1632 = vshrl.u32 %v1614, %v1630
        %v1633 = vor.u32 %v1631, %v1632
        %v1634 = vsub.s32 4294967266, %v1629
        %v1635 = vadd.s32 %v1634, 127
        %v1636 = vshll.u32 %v1635, 23
        %v1637 = vor.u32 4788187, %v1636
        %v1638 = vand.u32 2147483647, %v1637
        %v1640 = vcvt.s32.f32 %v1633
        %v1641 = vmul.f32 %v1640, %v1638
        %v1642 = vxor.u32 %v1641, 2147483648
        %v1643 = vsel %vm1522, %v1642, %v1641
        %v1644 = vsub.s32 4, %v1620
        %v1645 = vsel %vm1522, %v1644, %v1620
        %v1646 = vsel %vm1521, %v257, %v1643
        %v1647 = vsel %vm1521, 0, %v1645
        %v1648 = vmul.f32 %v1646, %v1646
        %v1649 = vmul.f32 %v1648, -0.001358992
        %v1650 = vadd.f32 %v1649, 0.041655596
        %v1651 = vmul.f32 %v1648, %v1650
        %v1652 = vadd.f32 %v1651, -0.4999988
        %v1653 = vmul.f32 %v1648, %v1652
        %v1654 = vadd.f32 1.0, %v1653
        %v1655 = vmul.f32 %v1646, %v1646
        %v1656 = vmul.f32 %v1655, -0.00019511016
        %v1657 = vadd.f32 %v1656, 0.008332121
        %v1658 = vmul.f32 %v1655, %v1657
        %v1659 = vadd.f32 %v1658, -0.16666654
        %v1660 = vmul.f32 %v1655, %v1659
        %v1661 = vadd.f32 %v1660, 1.0
        %v1662 = vmul.f32 %v1661, %v1646
        %vm1663 = vweird.f32 %v257
        %v1664 = vadd.s32 %v1647, 3
        %v1665 = vand.u32 %v1664, 3
        %vm1666 = vcmp.lt.s32.totalorder %v1665, 2
        %vm1667 = vcmp.eq.s32.totalorder %v1665, 0
        %v1668 = vxor.u32 %v1662, 2147483648
        %v1669 = vsel %vm1667, %v1654, %v1668
        %vm1670 = vcmp.eq.s32.totalorder %v1665, 2
        %v1671 = vxor.u32 %v1654, 2147483648
        %v1672 = vsel %vm1670, %v1671, %v1662
        %v1673 = vsel %vm1666, %v1669, %v1672
        %v1674 = vsel %vm1663, nan, %v1673
        %v1675 = vand.u32 2147483647, %v260
        %vm1676 = vcmp.le.f32.partialorder %v1675, 0.7853982
        %vm1677 = vcmp.lt.s32.totalorder %v260, 0
        %v1678 = vand.u32 %v260, 2139095040
        %v1679 = vshrl.u32 %v1678, 23
        %v1680 = vsub.s32 %v1679, 127
        %v1681 = vand.u32 2147483647, %v260
        %v1682 = vand.u32 %v1681, 8388607
        %v1683 = vor.u32 %v1682, 8388608
        %v1684 = vsub.s32 0, %v1683
        %v1685 = vadd.s32 %v1680, 1
        %vm1686 = vcmp.gt.s32.totalorder %v1685, 0
        %v1687 = vsel %vm1686, %v1685, 0
        %v1688 = vshrl.u32 %v1687, 5
        %v1689 = vand.u32 %v1687, 31
        %v1690 = vsub.s32 32, %v1689
        %v1691 = vshrl.u32 683565275, %v1690
        %v1692 = vshll.u32 683565275, %v1689
        %v1693 = vshrl.u32 2475754826, %v1690
        %v1694 = vor.u32 %v1692, %v1693
        %v1695 = vshll.u32 2475754826, %v1689
        %v1696 = vshrl.u32 2131351028, %v1690
        %v1697 = vor.u32 %v1695, %v1696
        %v1698 = vshll.u32 2131351028, %v1689
        %v1699 = vshrl.u32 2102212464, %v1690
        %v1700 = vor.u32 %v1698, %v1699
        %v1701 = vshll.u32 2102212464, %v1689
        %v1702 = vshrl.u32 920167782, %v1690
        %v1703 = vor.u32 %v1701, %v1702
        %v1704 = vshll.u32 920167782, %v1689
        %v1705 = vshrl.u32 1326507024, %v1690
        %v1706 = vor.u32 %v1704, %v1705
        %vm1707 = vcmp.lt.s32.totalorder %v1688, 1
        %vm1708 = vcmp.lt.s32.totalorder %v1688, 2
        %vm1709 = vcmp.lt.s32.totalorder %v1688, 3
        %vm1710 = vcmp.lt.s32.totalorder %v1688, 4
        %v1711 = vsel %vm1707, %v1691, %v1694
        %v1712 = vsel %vm1710, %v1700, 2102212464
        %v1713 = vsel %vm1709, %v1697, %v1712
        %v1714 = vsel %vm1708, %v1711, %v1713
        %v1715 = vsel %vm1707, %v1694, %v1697
        %v1716 = vsel %vm1710, %v1703, 920167782
        %v1717 = vsel %vm1709, %v1700, %v1716
        %v1718 = vsel %vm1708, %v1715, %v1717
        %v1719 = vsel %vm1707, %v1697, %v1700
        %v1720 = vsel %vm1710, %v1706, 1326507024
        %v1721 = vsel %vm1709, %v1703, %v1720
        %v1722 = vsel %vm1708, %v1719, %v1721
        %v1723 = vshll.u32 %v1683, 8
        %v1724 = vand.u32 %v1723, 65535
        %v1725 = vshrl.u32 %v1723, 16
        %v1726 = vand.u32 %v1722, 65535
        %v1727 = vshrl.u32 %v1722, 16
        %v1728 = vmul.u32 %v1724, %v1726
        %v1729 = vmul.u32 %v1724, %v1727
        %v1730 = vmul.u32 %v1725, %v1726
        %v1731 = vmul.u32 %v1725, %v1727
        %v1732 = vshll.u32 %v1729, 16
        %v1733 = vshrl.u32 %v1729, 16
        %v1734 = vshll.u32 %v1730, 16
        %v1735 = vshrl.u32 %v1730, 16
        %vm1736 = vc.u32 %v1728, %v1732
        %v1737 = vsel %vm1736, 1, 0
        %v1738 = vadd.s32 %v1728, %v1732
        %v1739 = vadd.s32 %v1731, %v1737
        %vm1740 = vc.u32 %v1738, %v1734
        %v1741 = vsel %vm1740, 1, 0
        %v1742 = vadd.s32 %v1738, %v1734
        %v1743 = vadd.s32 %v1739, %v1741
        %v1744 = vadd.s32 %v1743, %v1733
        %v1745 = vadd.s32 %v1744, %v1735
        %v1746 = vand.u32 %v1723, 65535
        %v1747 = vshrl.u32 %v1723, 16
        %v1748 = vand.u32 %v1718, 65535
        %v1749 = vshrl.u32 %v1718, 16
        %v1750 = vmul.u32 %v1746, %v1748
        %v1751 = vmul.u32 %v1746, %v1749
        %v1752 = vmul.u32 %v1747, %v1748
        %v1753 = vmul.u32 %v1747, %v1749
        %v1754 = vshll.u32 %v1751, 16
        %v1755 = vshrl.u32 %v1751, 16
        %v1756 = vshll.u32 %v1752, 16
        %v1757 = vshrl.u32 %v1752, 16
        %vm1758 = vc.u32 %v1750, %v1754
        %v1759 = vsel %vm1758, 1, 0
        %v1760 = vadd.s32 %v1750, %v1754
        %v1761 = vadd.s32 %v1753, %v1759
        %vm1762 = vc.u32 %v1760, %v1756
        %v1763 = vsel %vm1762, 1, 0
        %v1764 = vadd.s32 %v1760, %v1756
        %v1765 = vadd.s32 %v1761, %v1763
        %v1766 = vadd.s32 %v1765, %v1755
        %v1767 = vadd.s32 %v1766, %v1757
        %v1768 = vmul.u32 %v1723, %v1714
        %v1769 = vadd.s32 %v1745, %v1764
        %vm1770 = vc.u32 %v1745, %v1764
        %v1771 = vadd.s32 %v1767, 1
        %v1772 = vsel %vm1770, %v1771, %v1767
        %v1773 = vadd.s32 %v1768, %v1772
        %v1774 = vadd.s32 %v1773, 536870912
        %v1775 = vshrl.u32 %v1774, 30
        %v1776 = vshll.u32 %v1775, 30
        %v1777 = vsub.s32 %v1773, %v1776
        %vm1778 = vcmp.lt.s32.totalorder %v1777, 0
        %v1779 = vsub.s32 0, %v1777
        %v1780 = vsel %vm1778, %v1779, %v1777
        %v1781 = vclz %v1780
        %v1782 = vsub.s32 %v1781, 2
        %vm1783 = vcmp.gt.s32.totalorder 0, %v1782
        %v1784 = vsel %vm1783, 0, %v1782
        %v1785 = vsub.s32 32, %v1784
        %v1786 = vshll.u32 %v1777, %v1784
        %v1787 = vshrl.u32 %v1769, %v1785
        %v1788 = vor.u32 %v1786, %v1787
        %v1789 = vsub.s32 4294967266, %v1784
        %v1790 = vadd.s32 %v1789, 127
        %v1791 = vshll.u32 %v1790, 23
        %v1792 = vor.u32 4788187, %v1791
        %v1793 = vand.u32 2147483647, %v1792
        %v1795 = vcvt.s32.f32 %v1788
        %v1796 = vmul.f32 %v1795, %v1793
        %v1797 = vxor.u32 %v1796, 2147483648
        %v1798 = vsel %vm1677, %v1797, %v1796
        %v1799 = vsub.s32 4, %v1775
        %v1800 = vsel %vm1677, %v1799, %v1775
        %v1801 = vsel %vm1676, %v260, %v1798
        %v1802 = vsel %vm1676, 0, %v1800
        %v1803 = vmul.f32 %v1801, %v1801
        %v1804 = vmul.f32 %v1803, -0.001358992
        %v1805 = vadd.f32 %v1804, 0.041655596
        %v1806 = vmul.f32 %v1803, %v1805
        %v1807 = vadd.f32 %v1806, -0.4999988
        %v1808 = vmul.f32 %v1803, %v1807
        %v1809 = vadd.f32 1.0, %v1808
        %v1810 = vmul.f32 %v1801, %v1801
        %v1811 = vmul.f32 %v1810, -0.00019511016
        %v1812 = vadd.f32 %v1811, 0.008332121
        %v1813 = vmul.f32 %v1810, %v1812
        %v1814 = vadd.f32 %v1813, -0.16666654
        %v1815 = vmul.f32 %v1810, %v1814
        %v1816 = vadd.f32 %v1815, 1.0
        %v1817 = vmul.f32 %v1816, %v1801
        %vm1818 = vweird.f32 %v260
        %v1819 = vadd.s32 %v1802, 3
        %v1820 = vand.u32 %v1819, 3
        %vm1821 = vcmp.lt.s32.totalorder %v1820, 2
        %vm1822 = vcmp.eq.s32.totalorder %v1820, 0
        %v1823 = vxor.u32 %v1817, 2147483648
        %v1824 = vsel %vm1822, %v1809, %v1823
        %vm1825 = vcmp.eq.s32.totalorder %v1820, 2
        %v1826 = vxor.u32 %v1809, 2147483648
        %v1827 = vsel %vm1825, %v1826, %v1817
        %v1828 = vsel %vm1821, %v1824, %v1827
        %v1829 = vsel %vm1818, nan, %v1828
        %v1830 = vand.u32 2147483647, %v263
        %vm1831 = vcmp.le.f32.partialorder %v1830, 0.7853982
        %vm1832 = vcmp.lt.s32.totalorder %v263, 0
        %v1833 = vand.u32 %v263, 2139095040
        %v1834 = vshrl.u32 %v1833, 23
        %v1835 = vsub.s32 %v1834, 127
        %v1836 = vand.u32 2147483647, %v263
        %v1837 = vand.u32 %v1836, 8388607
        %v1838 = vor.u32 %v1837, 8388608
        %v1839 = vsub.s32 0, %v1838
        %v1840 = vadd.s32 %v1835, 1
        %vm1841 = vcmp.gt.s32.totalorder %v1840, 0
        %v1842 = vsel %vm1841, %v1840, 0
        %v1843 = vshrl.u32 %v1842, 5
        %v1844 = vand.u32 %v1842, 31
        %v1845 = vsub.s32 32, %v1844
        %v1846 = vshrl.u32 683565275, %v1845
        %v1847 = vshll.u32 683565275, %v1844
        %v1848 = vshrl.u32 2475754826, %v1845
        %v1849 = vor.u32 %v1847, %v1848
        %v1850 = vshll.u32 2475754826, %v1844
        %v1851 = vshrl.u32 2131351028, %v1845
        %v1852 = vor.u32 %v1850, %v1851
        %v1853 = vshll.u32 2131351028, %v1844
        %v1854 = vshrl.u32 2102212464, %v1845
        %v1855 = vor.u32 %v1853, %v1854
        %v1856 = vshll.u32 2102212464, %v1844
        %v1857 = vshrl.u32 920167782, %v1845
        %v1858 = vor.u32 %v1856, %v1857
        %v1859 = vshll.u32 920167782, %v1844
        %v1860 = vshrl.u32 1326507024, %v1845
        %v1861 = vor.u32 %v1859, %v1860
        %vm1862 = vcmp.lt.s32.totalorder %v1843, 1
        %vm1863 = vcmp.lt.s32.totalorder %v1843, 2
        %vm1864 = vcmp.lt.s32.totalorder %v1843, 3
        %vm1865 = vcmp.lt.s32.totalorder %v1843, 4
        %v1866 = vsel %vm1862, %v1846, %v1849
        %v1867 = vsel %vm1865, %v1855, 2102212464
        %v1868 = vsel %vm1864, %v1852, %v1867
        %v1869 = vsel %vm1863, %v1866, %v1868
        %v1870 = vsel %vm1862, %v1849, %v1852
        %v1871 = vsel %vm1865, %v1858, 920167782
        %v1872 = vsel %vm1864, %v1855, %v1871
        %v1873 = vsel %vm1863, %v1870, %v1872
        %v1874 = vsel %vm1862, %v1852, %v1855
        %v1875 = vsel %vm1865, %v1861, 1326507024
        %v1876 = vsel %vm1864, %v1858, %v1875
        %v1877 = vsel %vm1863, %v1874, %v1876
        %v1878 = vshll.u32 %v1838, 8
        %v1879 = vand.u32 %v1878, 65535
        %v1880 = vshrl.u32 %v1878, 16
        %v1881 = vand.u32 %v1877, 65535
        %v1882 = vshrl.u32 %v1877, 16
        %v1883 = vmul.u32 %v1879, %v1881
        %v1884 = vmul.u32 %v1879, %v1882
        %v1885 = vmul.u32 %v1880, %v1881
        %v1886 = vmul.u32 %v1880, %v1882
        %v1887 = vshll.u32 %v1884, 16
        %v1888 = vshrl.u32 %v1884, 16
        %v1889 = vshll.u32 %v1885, 16
        %v1890 = vshrl.u32 %v1885, 16
        %vm1891 = vc.u32 %v1883, %v1887
        %v1892 = vsel %vm1891, 1, 0
        %v1893 = vadd.s32 %v1883, %v1887
        %v1894 = vadd.s32 %v1886, %v1892
        %vm1895 = vc.u32 %v1893, %v1889
        %v1896 = vsel %vm1895, 1, 0
        %v1897 = vadd.s32 %v1893, %v1889
        %v1898 = vadd.s32 %v1894, %v1896
        %v1899 = vadd.s32 %v1898, %v1888
        %v1900 = vadd.s32 %v1899, %v1890
        %v1901 = vand.u32 %v1878, 65535
        %v1902 = vshrl.u32 %v1878, 16
        %v1903 = vand.u32 %v1873, 65535
        %v1904 = vshrl.u32 %v1873, 16
        %v1905 = vmul.u32 %v1901, %v1903
        %v1906 = vmul.u32 %v1901, %v1904
        %v1907 = vmul.u32 %v1902, %v1903
        %v1908 = vmul.u32 %v1902, %v1904
        %v1909 = vshll.u32 %v1906, 16
        %v1910 = vshrl.u32 %v1906, 16
        %v1911 = vshll.u32 %v1907, 16
        %v1912 = vshrl.u32 %v1907, 16
        %vm1913 = vc.u32 %v1905, %v1909
        %v1914 = vsel %vm1913, 1, 0
        %v1915 = vadd.s32 %v1905, %v1909
        %v1916 = vadd.s32 %v1908, %v1914
        %vm1917 = vc.u32 %v1915, %v1911
        %v1918 = vsel %vm1917, 1, 0
        %v1919 = vadd.s32 %v1915, %v1911
        %v1920 = vadd.s32 %v1916, %v1918
        %v1921 = vadd.s32 %v1920, %v1910
        %v1922 = vadd.s32 %v1921, %v1912
        %v1923 = vmul.u32 %v1878, %v1869
        %v1924 = vadd.s32 %v1900, %v1919
        %vm1925 = vc.u32 %v1900, %v1919
        %v1926 = vadd.s32 %v1922, 1
        %v1927 = vsel %vm1925, %v1926, %v1922
        %v1928 = vadd.s32 %v1923, %v1927
        %v1929 = vadd.s32 %v1928, 536870912
        %v1930 = vshrl.u32 %v1929, 30
        %v1931 = vshll.u32 %v1930, 30
        %v1932 = vsub.s32 %v1928, %v1931
        %vm1933 = vcmp.lt.s32.totalorder %v1932, 0
        %v1934 = vsub.s32 0, %v1932
        %v1935 = vsel %vm1933, %v1934, %v1932
        %v1936 = vclz %v1935
        %v1937 = vsub.s32 %v1936, 2
        %vm1938 = vcmp.gt.s32.totalorder 0, %v1937
        %v1939 = vsel %vm1938, 0, %v1937
        %v1940 = vsub.s32 32, %v1939
        %v1941 = vshll.u32 %v1932, %v1939
        %v1942 = vshrl.u32 %v1924, %v1940
        %v1943 = vor.u32 %v1941, %v1942
        %v1944 = vsub.s32 4294967266, %v1939
        %v1945 = vadd.s32 %v1944, 127
        %v1946 = vshll.u32 %v1945, 23
        %v1947 = vor.u32 4788187, %v1946
        %v1948 = vand.u32 2147483647, %v1947
        %v1950 = vcvt.s32.f32 %v1943
        %v1951 = vmul.f32 %v1950, %v1948
        %v1952 = vxor.u32 %v1951, 2147483648
        %v1953 = vsel %vm1832, %v1952, %v1951
        %v1954 = vsub.s32 4, %v1930
        %v1955 = vsel %vm1832, %v1954, %v1930
        %v1956 = vsel %vm1831, %v263, %v1953
        %v1957 = vsel %vm1831, 0, %v1955
        %v1958 = vmul.f32 %v1956, %v1956
        %v1959 = vmul.f32 %v1958, -0.001358992
        %v1960 = vadd.f32 %v1959, 0.041655596
        %v1961 = vmul.f32 %v1958, %v1960
        %v1962 = vadd.f32 %v1961, -0.4999988
        %v1963 = vmul.f32 %v1958, %v1962
        %v1964 = vadd.f32 1.0, %v1963
        %v1965 = vmul.f32 %v1956, %v1956
        %v1966 = vmul.f32 %v1965, -0.00019511016
        %v1967 = vadd.f32 %v1966, 0.008332121
        %v1968 = vmul.f32 %v1965, %v1967
        %v1969 = vadd.f32 %v1968, -0.16666654
        %v1970 = vmul.f32 %v1965, %v1969
        %v1971 = vadd.f32 %v1970, 1.0
        %v1972 = vmul.f32 %v1971, %v1956
        %vm1973 = vweird.f32 %v263
        %v1974 = vadd.s32 %v1957, 3
        %v1975 = vand.u32 %v1974, 3
        %vm1976 = vcmp.lt.s32.totalorder %v1975, 2
        %vm1977 = vcmp.eq.s32.totalorder %v1975, 0
        %v1978 = vxor.u32 %v1972, 2147483648
        %v1979 = vsel %vm1977, %v1964, %v1978
        %vm1980 = vcmp.eq.s32.totalorder %v1975, 2
        %v1981 = vxor.u32 %v1964, 2147483648
        %v1982 = vsel %vm1980, %v1981, %v1972
        %v1983 = vsel %vm1976, %v1979, %v1982
        %v1984 = vsel %vm1973, nan, %v1983
        %v1985 = vand.u32 2147483647, %v266
        %vm1986 = vcmp.le.f32.partialorder %v1985, 0.7853982
        %vm1987 = vcmp.lt.s32.totalorder %v266, 0
        %v1988 = vand.u32 %v266, 2139095040
        %v1989 = vshrl.u32 %v1988, 23
        %v1990 = vsub.s32 %v1989, 127
        %v1991 = vand.u32 2147483647, %v266
        %v1992 = vand.u32 %v1991, 8388607
        %v1993 = vor.u32 %v1992, 8388608
        %v1994 = vsub.s32 0, %v1993
        %v1995 = vadd.s32 %v1990, 1
        %vm1996 = vcmp.gt.s32.totalorder %v1995, 0
        %v1997 = vsel %vm1996, %v1995, 0
        %v1998 = vshrl.u32 %v1997, 5
        %v1999 = vand.u32 %v1997, 31
        %v2000 = vsub.s32 32, %v1999
        %v2001 = vshrl.u32 683565275, %v2000
        %v2002 = vshll.u32 683565275, %v1999
        %v2003 = vshrl.u32 2475754826, %v2000
        %v2004 = vor.u32 %v2002, %v2003
        %v2005 = vshll.u32 2475754826, %v1999
        %v2006 = vshrl.u32 2131351028, %v2000
        %v2007 = vor.u32 %v2005, %v2006
        %v2008 = vshll.u32 2131351028, %v1999
        %v2009 = vshrl.u32 2102212464, %v2000
        %v2010 = vor.u32 %v2008, %v2009
        %v2011 = vshll.u32 2102212464, %v1999
        %v2012 = vshrl.u32 920167782, %v2000
        %v2013 = vor.u32 %v2011, %v2012
        %v2014 = vshll.u32 920167782, %v1999
        %v2015 = vshrl.u32 1326507024, %v2000
        %v2016 = vor.u32 %v2014, %v2015
        %vm2017 = vcmp.lt.s32.totalorder %v1998, 1
        %vm2018 = vcmp.lt.s32.totalorder %v1998, 2
        %vm2019 = vcmp.lt.s32.totalorder %v1998, 3
        %vm2020 = vcmp.lt.s32.totalorder %v1998, 4
        %v2021 = vsel %vm2017, %v2001, %v2004
        %v2022 = vsel %vm2020, %v2010, 2102212464
        %v2023 = vsel %vm2019, %v2007, %v2022
        %v2024 = vsel %vm2018, %v2021, %v2023
        %v2025 = vsel %vm2017, %v2004, %v2007
        %v2026 = vsel %vm2020, %v2013, 920167782
        %v2027 = vsel %vm2019, %v2010, %v2026
        %v2028 = vsel %vm2018, %v2025, %v2027
        %v2029 = vsel %vm2017, %v2007, %v2010
        %v2030 = vsel %vm2020, %v2016, 1326507024
        %v2031 = vsel %vm2019, %v2013, %v2030
        %v2032 = vsel %vm2018, %v2029, %v2031
        %v2033 = vshll.u32 %v1993, 8
        %v2034 = vand.u32 %v2033, 65535
        %v2035 = vshrl.u32 %v2033, 16
        %v2036 = vand.u32 %v2032, 65535
        %v2037 = vshrl.u32 %v2032, 16
        %v2038 = vmul.u32 %v2034, %v2036
        %v2039 = vmul.u32 %v2034, %v2037
        %v2040 = vmul.u32 %v2035, %v2036
        %v2041 = vmul.u32 %v2035, %v2037
        %v2042 = vshll.u32 %v2039, 16
        %v2043 = vshrl.u32 %v2039, 16
        %v2044 = vshll.u32 %v2040, 16
        %v2045 = vshrl.u32 %v2040, 16
        %vm2046 = vc.u32 %v2038, %v2042
        %v2047 = vsel %vm2046, 1, 0
        %v2048 = vadd.s32 %v2038, %v2042
        %v2049 = vadd.s32 %v2041, %v2047
        %vm2050 = vc.u32 %v2048, %v2044
        %v2051 = vsel %vm2050, 1, 0
        %v2052 = vadd.s32 %v2048, %v2044
        %v2053 = vadd.s32 %v2049, %v2051
        %v2054 = vadd.s32 %v2053, %v2043
        %v2055 = vadd.s32 %v2054, %v2045
        %v2056 = vand.u32 %v2033, 65535
        %v2057 = vshrl.u32 %v2033, 16
        %v2058 = vand.u32 %v2028, 65535
        %v2059 = vshrl.u32 %v2028, 16
        %v2060 = vmul.u32 %v2056, %v2058
        %v2061 = vmul.u32 %v2056, %v2059
        %v2062 = vmul.u32 %v2057, %v2058
        %v2063 = vmul.u32 %v2057, %v2059
        %v2064 = vshll.u32 %v2061, 16
        %v2065 = vshrl.u32 %v2061, 16
        %v2066 = vshll.u32 %v2062, 16
        %v2067 = vshrl.u32 %v2062, 16
        %vm2068 = vc.u32 %v2060, %v2064
        %v2069 = vsel %vm2068, 1, 0
        %v2070 = vadd.s32 %v2060, %v2064
        %v2071 = vadd.s32 %v2063, %v2069
        %vm2072 = vc.u32 %v2070, %v2066
        %v2073 = vsel %vm2072, 1, 0
        %v2074 = vadd.s32 %v2070, %v2066
        %v2075 = vadd.s32 %v2071, %v2073
        %v2076 = vadd.s32 %v2075, %v2065
        %v2077 = vadd.s32 %v2076, %v2067
        %v2078 = vmul.u32 %v2033, %v2024
        %v2079 = vadd.s32 %v2055, %v2074
        %vm2080 = vc.u32 %v2055, %v2074
        %v2081 = vadd.s32 %v2077, 1
        %v2082 = vsel %vm2080, %v2081, %v2077
        %v2083 = vadd.s32 %v2078, %v2082
        %v2084 = vadd.s32 %v2083, 536870912
        %v2085 = vshrl.u32 %v2084, 30
        %v2086 = vshll.u32 %v2085, 30
        %v2087 = vsub.s32 %v2083, %v2086
        %vm2088 = vcmp.lt.s32.totalorder %v2087, 0
        %v2089 = vsub.s32 0, %v2087
        %v2090 = vsel %vm2088, %v2089, %v2087
        %v2091 = vclz %v2090
        %v2092 = vsub.s32 %v2091, 2
        %vm2093 = vcmp.gt.s32.totalorder 0, %v2092
        %v2094 = vsel %vm2093, 0, %v2092
        %v2095 = vsub.s32 32, %v2094
        %v2096 = vshll.u32 %v2087, %v2094
        %v2097 = vshrl.u32 %v2079, %v2095
        %v2098 = vor.u32 %v2096, %v2097
        %v2099 = vsub.s32 4294967266, %v2094
        %v2100 = vadd.s32 %v2099, 127
        %v2101 = vshll.u32 %v2100, 23
        %v2102 = vor.u32 4788187, %v2101
        %v2103 = vand.u32 2147483647, %v2102
        %v2105 = vcvt.s32.f32 %v2098
        %v2106 = vmul.f32 %v2105, %v2103
        %v2107 = vxor.u32 %v2106, 2147483648
        %v2108 = vsel %vm1987, %v2107, %v2106
        %v2109 = vsub.s32 4, %v2085
        %v2110 = vsel %vm1987, %v2109, %v2085
        %v2111 = vsel %vm1986, %v266, %v2108
        %v2112 = vsel %vm1986, 0, %v2110
        %v2113 = vmul.f32 %v2111, %v2111
        %v2114 = vmul.f32 %v2113, -0.001358992
        %v2115 = vadd.f32 %v2114, 0.041655596
        %v2116 = vmul.f32 %v2113, %v2115
        %v2117 = vadd.f32 %v2116, -0.4999988
        %v2118 = vmul.f32 %v2113, %v2117
        %v2119 = vadd.f32 1.0, %v2118
        %v2120 = vmul.f32 %v2111, %v2111
        %v2121 = vmul.f32 %v2120, -0.00019511016
        %v2122 = vadd.f32 %v2121, 0.008332121
        %v2123 = vmul.f32 %v2120, %v2122
        %v2124 = vadd.f32 %v2123, -0.16666654
        %v2125 = vmul.f32 %v2120, %v2124
        %v2126 = vadd.f32 %v2125, 1.0
        %v2127 = vmul.f32 %v2126, %v2111
        %vm2128 = vweird.f32 %v266
        %v2129 = vadd.s32 %v2112, 3
        %v2130 = vand.u32 %v2129, 3
        %vm2131 = vcmp.lt.s32.totalorder %v2130, 2
        %vm2132 = vcmp.eq.s32.totalorder %v2130, 0
        %v2133 = vxor.u32 %v2127, 2147483648
        %v2134 = vsel %vm2132, %v2119, %v2133
        %vm2135 = vcmp.eq.s32.totalorder %v2130, 2
        %v2136 = vxor.u32 %v2119, 2147483648
        %v2137 = vsel %vm2135, %v2136, %v2127
        %v2138 = vsel %vm2131, %v2134, %v2137
        %v2139 = vsel %vm2128, nan, %v2138
        %v2140 = vand.u32 2147483647, %v269
        %vm2141 = vcmp.le.f32.partialorder %v2140, 0.7853982
        %vm2142 = vcmp.lt.s32.totalorder %v269, 0
        %v2143 = vand.u32 %v269, 2139095040
        %v2144 = vshrl.u32 %v2143, 23
        %v2145 = vsub.s32 %v2144, 127
        %v2146 = vand.u32 2147483647, %v269
        %v2147 = vand.u32 %v2146, 8388607
        %v2148 = vor.u32 %v2147, 8388608
        %v2149 = vsub.s32 0, %v2148
        %v2150 = vadd.s32 %v2145, 1
        %vm2151 = vcmp.gt.s32.totalorder %v2150, 0
        %v2152 = vsel %vm2151, %v2150, 0
        %v2153 = vshrl.u32 %v2152, 5
        %v2154 = vand.u32 %v2152, 31
        %v2155 = vsub.s32 32, %v2154
        %v2156 = vshrl.u32 683565275, %v2155
        %v2157 = vshll.u32 683565275, %v2154
        %v2158 = vshrl.u32 2475754826, %v2155
        %v2159 = vor.u32 %v2157, %v2158
        %v2160 = vshll.u32 2475754826, %v2154
        %v2161 = vshrl.u32 2131351028, %v2155
        %v2162 = vor.u32 %v2160, %v2161
        %v2163 = vshll.u32 2131351028, %v2154
        %v2164 = vshrl.u32 2102212464, %v2155
        %v2165 = vor.u32 %v2163, %v2164
        %v2166 = vshll.u32 2102212464, %v2154
        %v2167 = vshrl.u32 920167782, %v2155
        %v2168 = vor.u32 %v2166, %v2167
        %v2169 = vshll.u32 920167782, %v2154
        %v2170 = vshrl.u32 1326507024, %v2155
        %v2171 = vor.u32 %v2169, %v2170
        %vm2172 = vcmp.lt.s32.totalorder %v2153, 1
        %vm2173 = vcmp.lt.s32.totalorder %v2153, 2
        %vm2174 = vcmp.lt.s32.totalorder %v2153, 3
        %vm2175 = vcmp.lt.s32.totalorder %v2153, 4
        %v2176 = vsel %vm2172, %v2156, %v2159
        %v2177 = vsel %vm2175, %v2165, 2102212464
        %v2178 = vsel %vm2174, %v2162, %v2177
        %v2179 = vsel %vm2173, %v2176, %v2178
        %v2180 = vsel %vm2172, %v2159, %v2162
        %v2181 = vsel %vm2175, %v2168, 920167782
        %v2182 = vsel %vm2174, %v2165, %v2181
        %v2183 = vsel %vm2173, %v2180, %v2182
        %v2184 = vsel %vm2172, %v2162, %v2165
        %v2185 = vsel %vm2175, %v2171, 1326507024
        %v2186 = vsel %vm2174, %v2168, %v2185
        %v2187 = vsel %vm2173, %v2184, %v2186
        %v2188 = vshll.u32 %v2148, 8
        %v2189 = vand.u32 %v2188, 65535
        %v2190 = vshrl.u32 %v2188, 16
        %v2191 = vand.u32 %v2187, 65535
        %v2192 = vshrl.u32 %v2187, 16
        %v2193 = vmul.u32 %v2189, %v2191
        %v2194 = vmul.u32 %v2189, %v2192
        %v2195 = vmul.u32 %v2190, %v2191
        %v2196 = vmul.u32 %v2190, %v2192
        %v2197 = vshll.u32 %v2194, 16
        %v2198 = vshrl.u32 %v2194, 16
        %v2199 = vshll.u32 %v2195, 16
        %v2200 = vshrl.u32 %v2195, 16
        %vm2201 = vc.u32 %v2193, %v2197
        %v2202 = vsel %vm2201, 1, 0
        %v2203 = vadd.s32 %v2193, %v2197
        %v2204 = vadd.s32 %v2196, %v2202
        %vm2205 = vc.u32 %v2203, %v2199
        %v2206 = vsel %vm2205, 1, 0
        %v2207 = vadd.s32 %v2203, %v2199
        %v2208 = vadd.s32 %v2204, %v2206
        %v2209 = vadd.s32 %v2208, %v2198
        %v2210 = vadd.s32 %v2209, %v2200
        %v2211 = vand.u32 %v2188, 65535
        %v2212 = vshrl.u32 %v2188, 16
        %v2213 = vand.u32 %v2183, 65535
        %v2214 = vshrl.u32 %v2183, 16
        %v2215 = vmul.u32 %v2211, %v2213
        %v2216 = vmul.u32 %v2211, %v2214
        %v2217 = vmul.u32 %v2212, %v2213
        %v2218 = vmul.u32 %v2212, %v2214
        %v2219 = vshll.u32 %v2216, 16
        %v2220 = vshrl.u32 %v2216, 16
        %v2221 = vshll.u32 %v2217, 16
        %v2222 = vshrl.u32 %v2217, 16
        %vm2223 = vc.u32 %v2215, %v2219
        %v2224 = vsel %vm2223, 1, 0
        %v2225 = vadd.s32 %v2215, %v2219
        %v2226 = vadd.s32 %v2218, %v2224
        %vm2227 = vc.u32 %v2225, %v2221
        %v2228 = vsel %vm2227, 1, 0
        %v2229 = vadd.s32 %v2225, %v2221
        %v2230 = vadd.s32 %v2226, %v2228
        %v2231 = vadd.s32 %v2230, %v2220
        %v2232 = vadd.s32 %v2231, %v2222
        %v2233 = vmul.u32 %v2188, %v2179
        %v2234 = vadd.s32 %v2210, %v2229
        %vm2235 = vc.u32 %v2210, %v2229
        %v2236 = vadd.s32 %v2232, 1
        %v2237 = vsel %vm2235, %v2236, %v2232
        %v2238 = vadd.s32 %v2233, %v2237
        %v2239 = vadd.s32 %v2238, 536870912
        %v2240 = vshrl.u32 %v2239, 30
        %v2241 = vshll.u32 %v2240, 30
        %v2242 = vsub.s32 %v2238, %v2241
        %vm2243 = vcmp.lt.s32.totalorder %v2242, 0
        %v2244 = vsub.s32 0, %v2242
        %v2245 = vsel %vm2243, %v2244, %v2242
        %v2246 = vclz %v2245
        %v2247 = vsub.s32 %v2246, 2
        %vm2248 = vcmp.gt.s32.totalorder 0, %v2247
        %v2249 = vsel %vm2248, 0, %v2247
        %v2250 = vsub.s32 32, %v2249
        %v2251 = vshll.u32 %v2242, %v2249
        %v2252 = vshrl.u32 %v2234, %v2250
        %v2253 = vor.u32 %v2251, %v2252
        %v2254 = vsub.s32 4294967266, %v2249
        %v2255 = vadd.s32 %v2254, 127
        %v2256 = vshll.u32 %v2255, 23
        %v2257 = vor.u32 4788187, %v2256
        %v2258 = vand.u32 2147483647, %v2257
        %v2260 = vcvt.s32.f32 %v2253
        %v2261 = vmul.f32 %v2260, %v2258
        %v2262 = vxor.u32 %v2261, 2147483648
        %v2263 = vsel %vm2142, %v2262, %v2261
        %v2264 = vsub.s32 4, %v2240
        %v2265 = vsel %vm2142, %v2264, %v2240
        %v2266 = vsel %vm2141, %v269, %v2263
        %v2267 = vsel %vm2141, 0, %v2265
        %v2268 = vmul.f32 %v2266, %v2266
        %v2269 = vmul.f32 %v2268, -0.001358992
        %v2270 = vadd.f32 %v2269, 0.041655596
        %v2271 = vmul.f32 %v2268, %v2270
        %v2272 = vadd.f32 %v2271, -0.4999988
        %v2273 = vmul.f32 %v2268, %v2272
        %v2274 = vadd.f32 1.0, %v2273
        %v2275 = vmul.f32 %v2266, %v2266
        %v2276 = vmul.f32 %v2275, -0.00019511016
        %v2277 = vadd.f32 %v2276, 0.008332121
        %v2278 = vmul.f32 %v2275, %v2277
        %v2279 = vadd.f32 %v2278, -0.16666654
        %v2280 = vmul.f32 %v2275, %v2279
        %v2281 = vadd.f32 %v2280, 1.0
        %v2282 = vmul.f32 %v2281, %v2266
        %vm2283 = vweird.f32 %v269
        %v2284 = vadd.s32 %v2267, 3
        %v2285 = vand.u32 %v2284, 3
        %vm2286 = vcmp.lt.s32.totalorder %v2285, 2
        %vm2287 = vcmp.eq.s32.totalorder %v2285, 0
        %v2288 = vxor.u32 %v2282, 2147483648
        %v2289 = vsel %vm2287, %v2274, %v2288
        %vm2290 = vcmp.eq.s32.totalorder %v2285, 2
        %v2291 = vxor.u32 %v2274, 2147483648
        %v2292 = vsel %vm2290, %v2291, %v2282
        %v2293 = vsel %vm2286, %v2289, %v2292
        %v2294 = vsel %vm2283, nan, %v2293
        %v2295 = vand.u32 2147483647, %v272
        %vm2296 = vcmp.le.f32.partialorder %v2295, 0.7853982
        %vm2297 = vcmp.lt.s32.totalorder %v272, 0
        %v2298 = vand.u32 %v272, 2139095040
        %v2299 = vshrl.u32 %v2298, 23
        %v2300 = vsub.s32 %v2299, 127
        %v2301 = vand.u32 2147483647, %v272
        %v2302 = vand.u32 %v2301, 8388607
        %v2303 = vor.u32 %v2302, 8388608
        %v2304 = vsub.s32 0, %v2303
        %v2305 = vadd.s32 %v2300, 1
        %vm2306 = vcmp.gt.s32.totalorder %v2305, 0
        %v2307 = vsel %vm2306, %v2305, 0
        %v2308 = vshrl.u32 %v2307, 5
        %v2309 = vand.u32 %v2307, 31
        %v2310 = vsub.s32 32, %v2309
        %v2311 = vshrl.u32 683565275, %v2310
        %v2312 = vshll.u32 683565275, %v2309
        %v2313 = vshrl.u32 2475754826, %v2310
        %v2314 = vor.u32 %v2312, %v2313
        %v2315 = vshll.u32 2475754826, %v2309
        %v2316 = vshrl.u32 2131351028, %v2310
        %v2317 = vor.u32 %v2315, %v2316
        %v2318 = vshll.u32 2131351028, %v2309
        %v2319 = vshrl.u32 2102212464, %v2310
        %v2320 = vor.u32 %v2318, %v2319
        %v2321 = vshll.u32 2102212464, %v2309
        %v2322 = vshrl.u32 920167782, %v2310
        %v2323 = vor.u32 %v2321, %v2322
        %v2324 = vshll.u32 920167782, %v2309
        %v2325 = vshrl.u32 1326507024, %v2310
        %v2326 = vor.u32 %v2324, %v2325
        %vm2327 = vcmp.lt.s32.totalorder %v2308, 1
        %vm2328 = vcmp.lt.s32.totalorder %v2308, 2
        %vm2329 = vcmp.lt.s32.totalorder %v2308, 3
        %vm2330 = vcmp.lt.s32.totalorder %v2308, 4
        %v2331 = vsel %vm2327, %v2311, %v2314
        %v2332 = vsel %vm2330, %v2320, 2102212464
        %v2333 = vsel %vm2329, %v2317, %v2332
        %v2334 = vsel %vm2328, %v2331, %v2333
        %v2335 = vsel %vm2327, %v2314, %v2317
        %v2336 = vsel %vm2330, %v2323, 920167782
        %v2337 = vsel %vm2329, %v2320, %v2336
        %v2338 = vsel %vm2328, %v2335, %v2337
        %v2339 = vsel %vm2327, %v2317, %v2320
        %v2340 = vsel %vm2330, %v2326, 1326507024
        %v2341 = vsel %vm2329, %v2323, %v2340
        %v2342 = vsel %vm2328, %v2339, %v2341
        %v2343 = vshll.u32 %v2303, 8
        %v2344 = vand.u32 %v2343, 65535
        %v2345 = vshrl.u32 %v2343, 16
        %v2346 = vand.u32 %v2342, 65535
        %v2347 = vshrl.u32 %v2342, 16
        %v2348 = vmul.u32 %v2344, %v2346
        %v2349 = vmul.u32 %v2344, %v2347
        %v2350 = vmul.u32 %v2345, %v2346
        %v2351 = vmul.u32 %v2345, %v2347
        %v2352 = vshll.u32 %v2349, 16
        %v2353 = vshrl.u32 %v2349, 16
        %v2354 = vshll.u32 %v2350, 16
        %v2355 = vshrl.u32 %v2350, 16
        %vm2356 = vc.u32 %v2348, %v2352
        %v2357 = vsel %vm2356, 1, 0
        %v2358 = vadd.s32 %v2348, %v2352
        %v2359 = vadd.s32 %v2351, %v2357
        %vm2360 = vc.u32 %v2358, %v2354
        %v2361 = vsel %vm2360, 1, 0
        %v2362 = vadd.s32 %v2358, %v2354
        %v2363 = vadd.s32 %v2359, %v2361
        %v2364 = vadd.s32 %v2363, %v2353
        %v2365 = vadd.s32 %v2364, %v2355
        %v2366 = vand.u32 %v2343, 65535
        %v2367 = vshrl.u32 %v2343, 16
        %v2368 = vand.u32 %v2338, 65535
        %v2369 = vshrl.u32 %v2338, 16
        %v2370 = vmul.u32 %v2366, %v2368
        %v2371 = vmul.u32 %v2366, %v2369
        %v2372 = vmul.u32 %v2367, %v2368
        %v2373 = vmul.u32 %v2367, %v2369
        %v2374 = vshll.u32 %v2371, 16
        %v2375 = vshrl.u32 %v2371, 16
        %v2376 = vshll.u32 %v2372, 16
        %v2377 = vshrl.u32 %v2372, 16
        %vm2378 = vc.u32 %v2370, %v2374
        %v2379 = vsel %vm2378, 1, 0
        %v2380 = vadd.s32 %v2370, %v2374
        %v2381 = vadd.s32 %v2373, %v2379
        %vm2382 = vc.u32 %v2380, %v2376
        %v2383 = vsel %vm2382, 1, 0
        %v2384 = vadd.s32 %v2380, %v2376
        %v2385 = vadd.s32 %v2381, %v2383
        %v2386 = vadd.s32 %v2385, %v2375
        %v2387 = vadd.s32 %v2386, %v2377
        %v2388 = vmul.u32 %v2343, %v2334
        %v2389 = vadd.s32 %v2365, %v2384
        %vm2390 = vc.u32 %v2365, %v2384
        %v2391 = vadd.s32 %v2387, 1
        %v2392 = vsel %vm2390, %v2391, %v2387
        %v2393 = vadd.s32 %v2388, %v2392
        %v2394 = vadd.s32 %v2393, 536870912
        %v2395 = vshrl.u32 %v2394, 30
        %v2396 = vshll.u32 %v2395, 30
        %v2397 = vsub.s32 %v2393, %v2396
        %vm2398 = vcmp.lt.s32.totalorder %v2397, 0
        %v2399 = vsub.s32 0, %v2397
        %v2400 = vsel %vm2398, %v2399, %v2397
        %v2401 = vclz %v2400
        %v2402 = vsub.s32 %v2401, 2
        %vm2403 = vcmp.gt.s32.totalorder 0, %v2402
        %v2404 = vsel %vm2403, 0, %v2402
        %v2405 = vsub.s32 32, %v2404
        %v2406 = vshll.u32 %v2397, %v2404
        %v2407 = vshrl.u32 %v2389, %v2405
        %v2408 = vor.u32 %v2406, %v2407
        %v2409 = vsub.s32 4294967266, %v2404
        %v2410 = vadd.s32 %v2409, 127
        %v2411 = vshll.u32 %v2410, 23
        %v2412 = vor.u32 4788187, %v2411
        %v2413 = vand.u32 2147483647, %v2412
        %v2415 = vcvt.s32.f32 %v2408
        %v2416 = vmul.f32 %v2415, %v2413
        %v2417 = vxor.u32 %v2416, 2147483648
        %v2418 = vsel %vm2297, %v2417, %v2416
        %v2419 = vsub.s32 4, %v2395
        %v2420 = vsel %vm2297, %v2419, %v2395
        %v2421 = vsel %vm2296, %v272, %v2418
        %v2422 = vsel %vm2296, 0, %v2420
        %v2423 = vmul.f32 %v2421, %v2421
        %v2424 = vmul.f32 %v2423, -0.001358992
        %v2425 = vadd.f32 %v2424, 0.041655596
        %v2426 = vmul.f32 %v2423, %v2425
        %v2427 = vadd.f32 %v2426, -0.4999988
        %v2428 = vmul.f32 %v2423, %v2427
        %v2429 = vadd.f32 1.0, %v2428
        %v2430 = vmul.f32 %v2421, %v2421
        %v2431 = vmul.f32 %v2430, -0.00019511016
        %v2432 = vadd.f32 %v2431, 0.008332121
        %v2433 = vmul.f32 %v2430, %v2432
        %v2434 = vadd.f32 %v2433, -0.16666654
        %v2435 = vmul.f32 %v2430, %v2434
        %v2436 = vadd.f32 %v2435, 1.0
        %v2437 = vmul.f32 %v2436, %v2421
        %vm2438 = vweird.f32 %v272
        %v2439 = vadd.s32 %v2422, 3
        %v2440 = vand.u32 %v2439, 3
        %vm2441 = vcmp.lt.s32.totalorder %v2440, 2
        %vm2442 = vcmp.eq.s32.totalorder %v2440, 0
        %v2443 = vxor.u32 %v2437, 2147483648
        %v2444 = vsel %vm2442, %v2429, %v2443
        %vm2445 = vcmp.eq.s32.totalorder %v2440, 2
        %v2446 = vxor.u32 %v2429, 2147483648
        %v2447 = vsel %vm2445, %v2446, %v2437
        %v2448 = vsel %vm2441, %v2444, %v2447
        %v2449 = vsel %vm2438, nan, %v2448
        %v2450 = vand.u32 2147483647, %v275
        %vm2451 = vcmp.le.f32.partialorder %v2450, 0.7853982
        %vm2452 = vcmp.lt.s32.totalorder %v275, 0
        %v2453 = vand.u32 %v275, 2139095040
        %v2454 = vshrl.u32 %v2453, 23
        %v2455 = vsub.s32 %v2454, 127
        %v2456 = vand.u32 2147483647, %v275
        %v2457 = vand.u32 %v2456, 8388607
        %v2458 = vor.u32 %v2457, 8388608
        %v2459 = vsub.s32 0, %v2458
        %v2460 = vadd.s32 %v2455, 1
        %vm2461 = vcmp.gt.s32.totalorder %v2460, 0
        %v2462 = vsel %vm2461, %v2460, 0
        %v2463 = vshrl.u32 %v2462, 5
        %v2464 = vand.u32 %v2462, 31
        %v2465 = vsub.s32 32, %v2464
        %v2466 = vshrl.u32 683565275, %v2465
        %v2467 = vshll.u32 683565275, %v2464
        %v2468 = vshrl.u32 2475754826, %v2465
        %v2469 = vor.u32 %v2467, %v2468
        %v2470 = vshll.u32 2475754826, %v2464
        %v2471 = vshrl.u32 2131351028, %v2465
        %v2472 = vor.u32 %v2470, %v2471
        %v2473 = vshll.u32 2131351028, %v2464
        %v2474 = vshrl.u32 2102212464, %v2465
        %v2475 = vor.u32 %v2473, %v2474
        %v2476 = vshll.u32 2102212464, %v2464
        %v2477 = vshrl.u32 920167782, %v2465
        %v2478 = vor.u32 %v2476, %v2477
        %v2479 = vshll.u32 920167782, %v2464
        %v2480 = vshrl.u32 1326507024, %v2465
        %v2481 = vor.u32 %v2479, %v2480
        %vm2482 = vcmp.lt.s32.totalorder %v2463, 1
        %vm2483 = vcmp.lt.s32.totalorder %v2463, 2
        %vm2484 = vcmp.lt.s32.totalorder %v2463, 3
        %vm2485 = vcmp.lt.s32.totalorder %v2463, 4
        %v2486 = vsel %vm2482, %v2466, %v2469
        %v2487 = vsel %vm2485, %v2475, 2102212464
        %v2488 = vsel %vm2484, %v2472, %v2487
        %v2489 = vsel %vm2483, %v2486, %v2488
        %v2490 = vsel %vm2482, %v2469, %v2472
        %v2491 = vsel %vm2485, %v2478, 920167782
        %v2492 = vsel %vm2484, %v2475, %v2491
        %v2493 = vsel %vm2483, %v2490, %v2492
        %v2494 = vsel %vm2482, %v2472, %v2475
        %v2495 = vsel %vm2485, %v2481, 1326507024
        %v2496 = vsel %vm2484, %v2478, %v2495
        %v2497 = vsel %vm2483, %v2494, %v2496
        %v2498 = vshll.u32 %v2458, 8
        %v2499 = vand.u32 %v2498, 65535
        %v2500 = vshrl.u32 %v2498, 16
        %v2501 = vand.u32 %v2497, 65535
        %v2502 = vshrl.u32 %v2497, 16
        %v2503 = vmul.u32 %v2499, %v2501
        %v2504 = vmul.u32 %v2499, %v2502
        %v2505 = vmul.u32 %v2500, %v2501
        %v2506 = vmul.u32 %v2500, %v2502
        %v2507 = vshll.u32 %v2504, 16
        %v2508 = vshrl.u32 %v2504, 16
        %v2509 = vshll.u32 %v2505, 16
        %v2510 = vshrl.u32 %v2505, 16
        %vm2511 = vc.u32 %v2503, %v2507
        %v2512 = vsel %vm2511, 1, 0
        %v2513 = vadd.s32 %v2503, %v2507
        %v2514 = vadd.s32 %v2506, %v2512
        %vm2515 = vc.u32 %v2513, %v2509
        %v2516 = vsel %vm2515, 1, 0
        %v2517 = vadd.s32 %v2513, %v2509
        %v2518 = vadd.s32 %v2514, %v2516
        %v2519 = vadd.s32 %v2518, %v2508
        %v2520 = vadd.s32 %v2519, %v2510
        %v2521 = vand.u32 %v2498, 65535
        %v2522 = vshrl.u32 %v2498, 16
        %v2523 = vand.u32 %v2493, 65535
        %v2524 = vshrl.u32 %v2493, 16
        %v2525 = vmul.u32 %v2521, %v2523
        %v2526 = vmul.u32 %v2521, %v2524
        %v2527 = vmul.u32 %v2522, %v2523
        %v2528 = vmul.u32 %v2522, %v2524
        %v2529 = vshll.u32 %v2526, 16
        %v2530 = vshrl.u32 %v2526, 16
        %v2531 = vshll.u32 %v2527, 16
        %v2532 = vshrl.u32 %v2527, 16
        %vm2533 = vc.u32 %v2525, %v2529
        %v2534 = vsel %vm2533, 1, 0
        %v2535 = vadd.s32 %v2525, %v2529
        %v2536 = vadd.s32 %v2528, %v2534
        %vm2537 = vc.u32 %v2535, %v2531
        %v2538 = vsel %vm2537, 1, 0
        %v2539 = vadd.s32 %v2535, %v2531
        %v2540 = vadd.s32 %v2536, %v2538
        %v2541 = vadd.s32 %v2540, %v2530
        %v2542 = vadd.s32 %v2541, %v2532
        %v2543 = vmul.u32 %v2498, %v2489
        %v2544 = vadd.s32 %v2520, %v2539
        %vm2545 = vc.u32 %v2520, %v2539
        %v2546 = vadd.s32 %v2542, 1
        %v2547 = vsel %vm2545, %v2546, %v2542
        %v2548 = vadd.s32 %v2543, %v2547
        %v2549 = vadd.s32 %v2548, 536870912
        %v2550 = vshrl.u32 %v2549, 30
        %v2551 = vshll.u32 %v2550, 30
        %v2552 = vsub.s32 %v2548, %v2551
        %vm2553 = vcmp.lt.s32.totalorder %v2552, 0
        %v2554 = vsub.s32 0, %v2552
        %v2555 = vsel %vm2553, %v2554, %v2552
        %v2556 = vclz %v2555
        %v2557 = vsub.s32 %v2556, 2
        %vm2558 = vcmp.gt.s32.totalorder 0, %v2557
        %v2559 = vsel %vm2558, 0, %v2557
        %v2560 = vsub.s32 32, %v2559
        %v2561 = vshll.u32 %v2552, %v2559
        %v2562 = vshrl.u32 %v2544, %v2560
        %v2563 = vor.u32 %v2561, %v2562
        %v2564 = vsub.s32 4294967266, %v2559
        %v2565 = vadd.s32 %v2564, 127
        %v2566 = vshll.u32 %v2565, 23
        %v2567 = vor.u32 4788187, %v2566
        %v2568 = vand.u32 2147483647, %v2567
        %v2570 = vcvt.s32.f32 %v2563
        %v2571 = vmul.f32 %v2570, %v2568
        %v2572 = vxor.u32 %v2571, 2147483648
        %v2573 = vsel %vm2452, %v2572, %v2571
        %v2574 = vsub.s32 4, %v2550
        %v2575 = vsel %vm2452, %v2574, %v2550
        %v2576 = vsel %vm2451, %v275, %v2573
        %v2577 = vsel %vm2451, 0, %v2575
        %v2578 = vmul.f32 %v2576, %v2576
        %v2579 = vmul.f32 %v2578, -0.001358992
        %v2580 = vadd.f32 %v2579, 0.041655596
        %v2581 = vmul.f32 %v2578, %v2580
        %v2582 = vadd.f32 %v2581, -0.4999988
        %v2583 = vmul.f32 %v2578, %v2582
        %v2584 = vadd.f32 1.0, %v2583
        %v2585 = vmul.f32 %v2576, %v2576
        %v2586 = vmul.f32 %v2585, -0.00019511016
        %v2587 = vadd.f32 %v2586, 0.008332121
        %v2588 = vmul.f32 %v2585, %v2587
        %v2589 = vadd.f32 %v2588, -0.16666654
        %v2590 = vmul.f32 %v2585, %v2589
        %v2591 = vadd.f32 %v2590, 1.0
        %v2592 = vmul.f32 %v2591, %v2576
        %vm2593 = vweird.f32 %v275
        %v2594 = vadd.s32 %v2577, 3
        %v2595 = vand.u32 %v2594, 3
        %vm2596 = vcmp.lt.s32.totalorder %v2595, 2
        %vm2597 = vcmp.eq.s32.totalorder %v2595, 0
        %v2598 = vxor.u32 %v2592, 2147483648
        %v2599 = vsel %vm2597, %v2584, %v2598
        %vm2600 = vcmp.eq.s32.totalorder %v2595, 2
        %v2601 = vxor.u32 %v2584, 2147483648
        %v2602 = vsel %vm2600, %v2601, %v2592
        %v2603 = vsel %vm2596, %v2599, %v2602
        %v2604 = vsel %vm2593, nan, %v2603
        %v2605 = vand.u32 2147483647, %v278
        %vm2606 = vcmp.le.f32.partialorder %v2605, 0.7853982
        %vm2607 = vcmp.lt.s32.totalorder %v278, 0
        %v2608 = vand.u32 %v278, 2139095040
        %v2609 = vshrl.u32 %v2608, 23
        %v2610 = vsub.s32 %v2609, 127
        %v2611 = vand.u32 2147483647, %v278
        %v2612 = vand.u32 %v2611, 8388607
        %v2613 = vor.u32 %v2612, 8388608
        %v2614 = vsub.s32 0, %v2613
        %v2615 = vadd.s32 %v2610, 1
        %vm2616 = vcmp.gt.s32.totalorder %v2615, 0
        %v2617 = vsel %vm2616, %v2615, 0
        %v2618 = vshrl.u32 %v2617, 5
        %v2619 = vand.u32 %v2617, 31
        %v2620 = vsub.s32 32, %v2619
        %v2621 = vshrl.u32 683565275, %v2620
        %v2622 = vshll.u32 683565275, %v2619
        %v2623 = vshrl.u32 2475754826, %v2620
        %v2624 = vor.u32 %v2622, %v2623
        %v2625 = vshll.u32 2475754826, %v2619
        %v2626 = vshrl.u32 2131351028, %v2620
        %v2627 = vor.u32 %v2625, %v2626
        %v2628 = vshll.u32 2131351028, %v2619
        %v2629 = vshrl.u32 2102212464, %v2620
        %v2630 = vor.u32 %v2628, %v2629
        %v2631 = vshll.u32 2102212464, %v2619
        %v2632 = vshrl.u32 920167782, %v2620
        %v2633 = vor.u32 %v2631, %v2632
        %v2634 = vshll.u32 920167782, %v2619
        %v2635 = vshrl.u32 1326507024, %v2620
        %v2636 = vor.u32 %v2634, %v2635
        %vm2637 = vcmp.lt.s32.totalorder %v2618, 1
        %vm2638 = vcmp.lt.s32.totalorder %v2618, 2
        %vm2639 = vcmp.lt.s32.totalorder %v2618, 3
        %vm2640 = vcmp.lt.s32.totalorder %v2618, 4
        %v2641 = vsel %vm2637, %v2621, %v2624
        %v2642 = vsel %vm2640, %v2630, 2102212464
        %v2643 = vsel %vm2639, %v2627, %v2642
        %v2644 = vsel %vm2638, %v2641, %v2643
        %v2645 = vsel %vm2637, %v2624, %v2627
        %v2646 = vsel %vm2640, %v2633, 920167782
        %v2647 = vsel %vm2639, %v2630, %v2646
        %v2648 = vsel %vm2638, %v2645, %v2647
        %v2649 = vsel %vm2637, %v2627, %v2630
        %v2650 = vsel %vm2640, %v2636, 1326507024
        %v2651 = vsel %vm2639, %v2633, %v2650
        %v2652 = vsel %vm2638, %v2649, %v2651
        %v2653 = vshll.u32 %v2613, 8
        %v2654 = vand.u32 %v2653, 65535
        %v2655 = vshrl.u32 %v2653, 16
        %v2656 = vand.u32 %v2652, 65535
        %v2657 = vshrl.u32 %v2652, 16
        %v2658 = vmul.u32 %v2654, %v2656
        %v2659 = vmul.u32 %v2654, %v2657
        %v2660 = vmul.u32 %v2655, %v2656
        %v2661 = vmul.u32 %v2655, %v2657
        %v2662 = vshll.u32 %v2659, 16
        %v2663 = vshrl.u32 %v2659, 16
        %v2664 = vshll.u32 %v2660, 16
        %v2665 = vshrl.u32 %v2660, 16
        %vm2666 = vc.u32 %v2658, %v2662
        %v2667 = vsel %vm2666, 1, 0
        %v2668 = vadd.s32 %v2658, %v2662
        %v2669 = vadd.s32 %v2661, %v2667
        %vm2670 = vc.u32 %v2668, %v2664
        %v2671 = vsel %vm2670, 1, 0
        %v2672 = vadd.s32 %v2668, %v2664
        %v2673 = vadd.s32 %v2669, %v2671
        %v2674 = vadd.s32 %v2673, %v2663
        %v2675 = vadd.s32 %v2674, %v2665
        %v2676 = vand.u32 %v2653, 65535
        %v2677 = vshrl.u32 %v2653, 16
        %v2678 = vand.u32 %v2648, 65535
        %v2679 = vshrl.u32 %v2648, 16
        %v2680 = vmul.u32 %v2676, %v2678
        %v2681 = vmul.u32 %v2676, %v2679
        %v2682 = vmul.u32 %v2677, %v2678
        %v2683 = vmul.u32 %v2677, %v2679
        %v2684 = vshll.u32 %v2681, 16
        %v2685 = vshrl.u32 %v2681, 16
        %v2686 = vshll.u32 %v2682, 16
        %v2687 = vshrl.u32 %v2682, 16
        %vm2688 = vc.u32 %v2680, %v2684
        %v2689 = vsel %vm2688, 1, 0
        %v2690 = vadd.s32 %v2680, %v2684
        %v2691 = vadd.s32 %v2683, %v2689
        %vm2692 = vc.u32 %v2690, %v2686
        %v2693 = vsel %vm2692, 1, 0
        %v2694 = vadd.s32 %v2690, %v2686
        %v2695 = vadd.s32 %v2691, %v2693
        %v2696 = vadd.s32 %v2695, %v2685
        %v2697 = vadd.s32 %v2696, %v2687
        %v2698 = vmul.u32 %v2653, %v2644
        %v2699 = vadd.s32 %v2675, %v2694
        %vm2700 = vc.u32 %v2675, %v2694
        %v2701 = vadd.s32 %v2697, 1
        %v2702 = vsel %vm2700, %v2701, %v2697
        %v2703 = vadd.s32 %v2698, %v2702
        %v2704 = vadd.s32 %v2703, 536870912
        %v2705 = vshrl.u32 %v2704, 30
        %v2706 = vshll.u32 %v2705, 30
        %v2707 = vsub.s32 %v2703, %v2706
        %vm2708 = vcmp.lt.s32.totalorder %v2707, 0
        %v2709 = vsub.s32 0, %v2707
        %v2710 = vsel %vm2708, %v2709, %v2707
        %v2711 = vclz %v2710
        %v2712 = vsub.s32 %v2711, 2
        %vm2713 = vcmp.gt.s32.totalorder 0, %v2712
        %v2714 = vsel %vm2713, 0, %v2712
        %v2715 = vsub.s32 32, %v2714
        %v2716 = vshll.u32 %v2707, %v2714
        %v2717 = vshrl.u32 %v2699, %v2715
        %v2718 = vor.u32 %v2716, %v2717
        %v2719 = vsub.s32 4294967266, %v2714
        %v2720 = vadd.s32 %v2719, 127
        %v2721 = vshll.u32 %v2720, 23
        %v2722 = vor.u32 4788187, %v2721
        %v2723 = vand.u32 2147483647, %v2722
        %v2725 = vcvt.s32.f32 %v2718
        %v2726 = vmul.f32 %v2725, %v2723
        %v2727 = vxor.u32 %v2726, 2147483648
        %v2728 = vsel %vm2607, %v2727, %v2726
        %v2729 = vsub.s32 4, %v2705
        %v2730 = vsel %vm2607, %v2729, %v2705
        %v2731 = vsel %vm2606, %v278, %v2728
        %v2732 = vsel %vm2606, 0, %v2730
        %v2733 = vmul.f32 %v2731, %v2731
        %v2734 = vmul.f32 %v2733, -0.001358992
        %v2735 = vadd.f32 %v2734, 0.041655596
        %v2736 = vmul.f32 %v2733, %v2735
        %v2737 = vadd.f32 %v2736, -0.4999988
        %v2738 = vmul.f32 %v2733, %v2737
        %v2739 = vadd.f32 1.0, %v2738
        %v2740 = vmul.f32 %v2731, %v2731
        %v2741 = vmul.f32 %v2740, -0.00019511016
        %v2742 = vadd.f32 %v2741, 0.008332121
        %v2743 = vmul.f32 %v2740, %v2742
        %v2744 = vadd.f32 %v2743, -0.16666654
        %v2745 = vmul.f32 %v2740, %v2744
        %v2746 = vadd.f32 %v2745, 1.0
        %v2747 = vmul.f32 %v2746, %v2731
        %vm2748 = vweird.f32 %v278
        %v2749 = vadd.s32 %v2732, 3
        %v2750 = vand.u32 %v2749, 3
        %vm2751 = vcmp.lt.s32.totalorder %v2750, 2
        %vm2752 = vcmp.eq.s32.totalorder %v2750, 0
        %v2753 = vxor.u32 %v2747, 2147483648
        %v2754 = vsel %vm2752, %v2739, %v2753
        %vm2755 = vcmp.eq.s32.totalorder %v2750, 2
        %v2756 = vxor.u32 %v2739, 2147483648
        %v2757 = vsel %vm2755, %v2756, %v2747
        %v2758 = vsel %vm2751, %v2754, %v2757
        %v2759 = vsel %vm2748, nan, %v2758
        %2760 = vst [vmem:[%s137] sm:$0xff] %v434
        %2761 = vst [vmem:[%s137 + $0x10] sm:$0xff] %v589
        %2762 = vst [vmem:[%s137 + $0x20] sm:$0xff] %v744
        %2763 = vst [vmem:[%s137 + $0x30] sm:$0xff] %v899
        %2764 = vst [vmem:[%s137 + $0x40] sm:$0xff] %v1054
        %2765 = vst [vmem:[%s137 + $0x50] sm:$0xff] %v1209
        %2766 = vst [vmem:[%s137 + $0x60] sm:$0xff] %v1364
        %2767 = vst [vmem:[%s137 + $0x70] sm:$0xff] %v1519
        %2768 = vst [vmem:[%s137 + $0x80] sm:$0xff] %v1674
        %2769 = vst [vmem:[%s137 + $0x90] sm:$0xff] %v1829
        %2770 = vst [vmem:[%s137 + $0xa0] sm:$0xff] %v1984
        %2771 = vst [vmem:[%s137 + $0xb0] sm:$0xff] %v2139
        %2772 = vst [vmem:[%s137 + $0xc0] sm:$0xff] %v2294
        %2773 = vst [vmem:[%s137 + $0xd0] sm:$0xff] %v2449
        %2774 = vst [vmem:[%s137 + $0xe0] sm:$0xff] %v2604
        %2775 = vst [vmem:[%s137 + $0xf0] sm:$0xff] %v2759
        %v2776 = vand.u32 2147483647, %v233
        %vm2777 = vcmp.le.f32.partialorder %v2776, 0.7853982
        %vm2778 = vcmp.lt.s32.totalorder %v233, 0
        %v2779 = vand.u32 %v233, 2139095040
        %v2780 = vshrl.u32 %v2779, 23
        %v2781 = vsub.s32 %v2780, 127
        %v2782 = vand.u32 2147483647, %v233
        %v2783 = vand.u32 %v2782, 8388607
        %v2784 = vor.u32 %v2783, 8388608
        %v2785 = vsub.s32 0, %v2784
        %v2786 = vadd.s32 %v2781, 1
        %vm2787 = vcmp.gt.s32.totalorder %v2786, 0
        %v2788 = vsel %vm2787, %v2786, 0
        %v2789 = vshrl.u32 %v2788, 5
        %v2790 = vand.u32 %v2788, 31
        %v2791 = vsub.s32 32, %v2790
        %v2792 = vshrl.u32 683565275, %v2791
        %v2793 = vshll.u32 683565275, %v2790
        %v2794 = vshrl.u32 2475754826, %v2791
        %v2795 = vor.u32 %v2793, %v2794
        %v2796 = vshll.u32 2475754826, %v2790
        %v2797 = vshrl.u32 2131351028, %v2791
        %v2798 = vor.u32 %v2796, %v2797
        %v2799 = vshll.u32 2131351028, %v2790
        %v2800 = vshrl.u32 2102212464, %v2791
        %v2801 = vor.u32 %v2799, %v2800
        %v2802 = vshll.u32 2102212464, %v2790
        %v2803 = vshrl.u32 920167782, %v2791
        %v2804 = vor.u32 %v2802, %v2803
        %v2805 = vshll.u32 920167782, %v2790
        %v2806 = vshrl.u32 1326507024, %v2791
        %v2807 = vor.u32 %v2805, %v2806
        %vm2808 = vcmp.lt.s32.totalorder %v2789, 1
        %vm2809 = vcmp.lt.s32.totalorder %v2789, 2
        %vm2810 = vcmp.lt.s32.totalorder %v2789, 3
        %vm2811 = vcmp.lt.s32.totalorder %v2789, 4
        %v2812 = vsel %vm2808, %v2792, %v2795
        %v2813 = vsel %vm2811, %v2801, 2102212464
        %v2814 = vsel %vm2810, %v2798, %v2813
        %v2815 = vsel %vm2809, %v2812, %v2814
        %v2816 = vsel %vm2808, %v2795, %v2798
        %v2817 = vsel %vm2811, %v2804, 920167782
        %v2818 = vsel %vm2810, %v2801, %v2817
        %v2819 = vsel %vm2809, %v2816, %v2818
        %v2820 = vsel %vm2808, %v2798, %v2801
        %v2821 = vsel %vm2811, %v2807, 1326507024
        %v2822 = vsel %vm2810, %v2804, %v2821
        %v2823 = vsel %vm2809, %v2820, %v2822
        %v2824 = vshll.u32 %v2784, 8
        %v2825 = vand.u32 %v2824, 65535
        %v2826 = vshrl.u32 %v2824, 16
        %v2827 = vand.u32 %v2823, 65535
        %v2828 = vshrl.u32 %v2823, 16
        %v2829 = vmul.u32 %v2825, %v2827
        %v2830 = vmul.u32 %v2825, %v2828
        %v2831 = vmul.u32 %v2826, %v2827
        %v2832 = vmul.u32 %v2826, %v2828
        %v2833 = vshll.u32 %v2830, 16
        %v2834 = vshrl.u32 %v2830, 16
        %v2835 = vshll.u32 %v2831, 16
        %v2836 = vshrl.u32 %v2831, 16
        %vm2837 = vc.u32 %v2829, %v2833
        %v2838 = vsel %vm2837, 1, 0
        %v2839 = vadd.s32 %v2829, %v2833
        %v2840 = vadd.s32 %v2832, %v2838
        %vm2841 = vc.u32 %v2839, %v2835
        %v2842 = vsel %vm2841, 1, 0
        %v2843 = vadd.s32 %v2839, %v2835
        %v2844 = vadd.s32 %v2840, %v2842
        %v2845 = vadd.s32 %v2844, %v2834
        %v2846 = vadd.s32 %v2845, %v2836
        %v2847 = vand.u32 %v2824, 65535
        %v2848 = vshrl.u32 %v2824, 16
        %v2849 = vand.u32 %v2819, 65535
        %v2850 = vshrl.u32 %v2819, 16
        %v2851 = vmul.u32 %v2847, %v2849
        %v2852 = vmul.u32 %v2847, %v2850
        %v2853 = vmul.u32 %v2848, %v2849
        %v2854 = vmul.u32 %v2848, %v2850
        %v2855 = vshll.u32 %v2852, 16
        %v2856 = vshrl.u32 %v2852, 16
        %v2857 = vshll.u32 %v2853, 16
        %v2858 = vshrl.u32 %v2853, 16
        %vm2859 = vc.u32 %v2851, %v2855
        %v2860 = vsel %vm2859, 1, 0
        %v2861 = vadd.s32 %v2851, %v2855
        %v2862 = vadd.s32 %v2854, %v2860
        %vm2863 = vc.u32 %v2861, %v2857
        %v2864 = vsel %vm2863, 1, 0
        %v2865 = vadd.s32 %v2861, %v2857
        %v2866 = vadd.s32 %v2862, %v2864
        %v2867 = vadd.s32 %v2866, %v2856
        %v2868 = vadd.s32 %v2867, %v2858
        %v2869 = vmul.u32 %v2824, %v2815
        %v2870 = vadd.s32 %v2846, %v2865
        %vm2871 = vc.u32 %v2846, %v2865
        %v2872 = vadd.s32 %v2868, 1
        %v2873 = vsel %vm2871, %v2872, %v2868
        %v2874 = vadd.s32 %v2869, %v2873
        %v2875 = vadd.s32 %v2874, 536870912
        %v2876 = vshrl.u32 %v2875, 30
        %v2877 = vshll.u32 %v2876, 30
        %v2878 = vsub.s32 %v2874, %v2877
        %vm2879 = vcmp.lt.s32.totalorder %v2878, 0
        %v2880 = vsub.s32 0, %v2878
        %v2881 = vsel %vm2879, %v2880, %v2878
        %v2882 = vclz %v2881
        %v2883 = vsub.s32 %v2882, 2
        %vm2884 = vcmp.gt.s32.totalorder 0, %v2883
        %v2885 = vsel %vm2884, 0, %v2883
        %v2886 = vsub.s32 32, %v2885
        %v2887 = vshll.u32 %v2878, %v2885
        %v2888 = vshrl.u32 %v2870, %v2886
        %v2889 = vor.u32 %v2887, %v2888
        %v2890 = vsub.s32 4294967266, %v2885
        %v2891 = vadd.s32 %v2890, 127
        %v2892 = vshll.u32 %v2891, 23
        %v2893 = vor.u32 4788187, %v2892
        %v2894 = vand.u32 2147483647, %v2893
        %v2896 = vcvt.s32.f32 %v2889
        %v2897 = vmul.f32 %v2896, %v2894
        %v2898 = vxor.u32 %v2897, 2147483648
        %v2899 = vsel %vm2778, %v2898, %v2897
        %v2900 = vsub.s32 4, %v2876
        %v2901 = vsel %vm2778, %v2900, %v2876
        %v2902 = vsel %vm2777, %v233, %v2899
        %v2903 = vsel %vm2777, 0, %v2901
        %v2904 = vmul.f32 %v2902, %v2902
        %v2905 = vmul.f32 %v2904, -0.001358992
        %v2906 = vadd.f32 %v2905, 0.041655596
        %v2907 = vmul.f32 %v2904, %v2906
        %v2908 = vadd.f32 %v2907, -0.4999988
        %v2909 = vmul.f32 %v2904, %v2908
        %v2910 = vadd.f32 1.0, %v2909
        %v2911 = vmul.f32 %v2902, %v2902
        %v2912 = vmul.f32 %v2911, -0.00019511016
        %v2913 = vadd.f32 %v2912, 0.008332121
        %v2914 = vmul.f32 %v2911, %v2913
        %v2915 = vadd.f32 %v2914, -0.16666654
        %v2916 = vmul.f32 %v2911, %v2915
        %v2917 = vadd.f32 %v2916, 1.0
        %v2918 = vmul.f32 %v2917, %v2902
        %vm2919 = vweird.f32 %v233
        %v2920 = vand.u32 %v2903, 3
        %vm2921 = vcmp.lt.s32.totalorder %v2920, 2
        %vm2922 = vcmp.eq.s32.totalorder %v2920, 0
        %v2923 = vxor.u32 %v2918, 2147483648
        %v2924 = vsel %vm2922, %v2910, %v2923
        %vm2925 = vcmp.eq.s32.totalorder %v2920, 2
        %v2926 = vxor.u32 %v2910, 2147483648
        %v2927 = vsel %vm2925, %v2926, %v2918
        %v2928 = vsel %vm2921, %v2924, %v2927
        %v2929 = vsel %vm2919, nan, %v2928
        %v2930 = vand.u32 2147483647, %v236
        %vm2931 = vcmp.le.f32.partialorder %v2930, 0.7853982
        %vm2932 = vcmp.lt.s32.totalorder %v236, 0
        %v2933 = vand.u32 %v236, 2139095040
        %v2934 = vshrl.u32 %v2933, 23
        %v2935 = vsub.s32 %v2934, 127
        %v2936 = vand.u32 2147483647, %v236
        %v2937 = vand.u32 %v2936, 8388607
        %v2938 = vor.u32 %v2937, 8388608
        %v2939 = vsub.s32 0, %v2938
        %v2940 = vadd.s32 %v2935, 1
        %vm2941 = vcmp.gt.s32.totalorder %v2940, 0
        %v2942 = vsel %vm2941, %v2940, 0
        %v2943 = vshrl.u32 %v2942, 5
        %v2944 = vand.u32 %v2942, 31
        %v2945 = vsub.s32 32, %v2944
        %v2946 = vshrl.u32 683565275, %v2945
        %v2947 = vshll.u32 683565275, %v2944
        %v2948 = vshrl.u32 2475754826, %v2945
        %v2949 = vor.u32 %v2947, %v2948
        %v2950 = vshll.u32 2475754826, %v2944
        %v2951 = vshrl.u32 2131351028, %v2945
        %v2952 = vor.u32 %v2950, %v2951
        %v2953 = vshll.u32 2131351028, %v2944
        %v2954 = vshrl.u32 2102212464, %v2945
        %v2955 = vor.u32 %v2953, %v2954
        %v2956 = vshll.u32 2102212464, %v2944
        %v2957 = vshrl.u32 920167782, %v2945
        %v2958 = vor.u32 %v2956, %v2957
        %v2959 = vshll.u32 920167782, %v2944
        %v2960 = vshrl.u32 1326507024, %v2945
        %v2961 = vor.u32 %v2959, %v2960
        %vm2962 = vcmp.lt.s32.totalorder %v2943, 1
        %vm2963 = vcmp.lt.s32.totalorder %v2943, 2
        %vm2964 = vcmp.lt.s32.totalorder %v2943, 3
        %vm2965 = vcmp.lt.s32.totalorder %v2943, 4
        %v2966 = vsel %vm2962, %v2946, %v2949
        %v2967 = vsel %vm2965, %v2955, 2102212464
        %v2968 = vsel %vm2964, %v2952, %v2967
        %v2969 = vsel %vm2963, %v2966, %v2968
        %v2970 = vsel %vm2962, %v2949, %v2952
        %v2971 = vsel %vm2965, %v2958, 920167782
        %v2972 = vsel %vm2964, %v2955, %v2971
        %v2973 = vsel %vm2963, %v2970, %v2972
        %v2974 = vsel %vm2962, %v2952, %v2955
        %v2975 = vsel %vm2965, %v2961, 1326507024
        %v2976 = vsel %vm2964, %v2958, %v2975
        %v2977 = vsel %vm2963, %v2974, %v2976
        %v2978 = vshll.u32 %v2938, 8
        %v2979 = vand.u32 %v2978, 65535
        %v2980 = vshrl.u32 %v2978, 16
        %v2981 = vand.u32 %v2977, 65535
        %v2982 = vshrl.u32 %v2977, 16
        %v2983 = vmul.u32 %v2979, %v2981
        %v2984 = vmul.u32 %v2979, %v2982
        %v2985 = vmul.u32 %v2980, %v2981
        %v2986 = vmul.u32 %v2980, %v2982
        %v2987 = vshll.u32 %v2984, 16
        %v2988 = vshrl.u32 %v2984, 16
        %v2989 = vshll.u32 %v2985, 16
        %v2990 = vshrl.u32 %v2985, 16
        %vm2991 = vc.u32 %v2983, %v2987
        %v2992 = vsel %vm2991, 1, 0
        %v2993 = vadd.s32 %v2983, %v2987
        %v2994 = vadd.s32 %v2986, %v2992
        %vm2995 = vc.u32 %v2993, %v2989
        %v2996 = vsel %vm2995, 1, 0
        %v2997 = vadd.s32 %v2993, %v2989
        %v2998 = vadd.s32 %v2994, %v2996
        %v2999 = vadd.s32 %v2998, %v2988
        %v3000 = vadd.s32 %v2999, %v2990
        %v3001 = vand.u32 %v2978, 65535
        %v3002 = vshrl.u32 %v2978, 16
        %v3003 = vand.u32 %v2973, 65535
        %v3004 = vshrl.u32 %v2973, 16
        %v3005 = vmul.u32 %v3001, %v3003
        %v3006 = vmul.u32 %v3001, %v3004
        %v3007 = vmul.u32 %v3002, %v3003
        %v3008 = vmul.u32 %v3002, %v3004
        %v3009 = vshll.u32 %v3006, 16
        %v3010 = vshrl.u32 %v3006, 16
        %v3011 = vshll.u32 %v3007, 16
        %v3012 = vshrl.u32 %v3007, 16
        %vm3013 = vc.u32 %v3005, %v3009
        %v3014 = vsel %vm3013, 1, 0
        %v3015 = vadd.s32 %v3005, %v3009
        %v3016 = vadd.s32 %v3008, %v3014
        %vm3017 = vc.u32 %v3015, %v3011
        %v3018 = vsel %vm3017, 1, 0
        %v3019 = vadd.s32 %v3015, %v3011
        %v3020 = vadd.s32 %v3016, %v3018
        %v3021 = vadd.s32 %v3020, %v3010
        %v3022 = vadd.s32 %v3021, %v3012
        %v3023 = vmul.u32 %v2978, %v2969
        %v3024 = vadd.s32 %v3000, %v3019
        %vm3025 = vc.u32 %v3000, %v3019
        %v3026 = vadd.s32 %v3022, 1
        %v3027 = vsel %vm3025, %v3026, %v3022
        %v3028 = vadd.s32 %v3023, %v3027
        %v3029 = vadd.s32 %v3028, 536870912
        %v3030 = vshrl.u32 %v3029, 30
        %v3031 = vshll.u32 %v3030, 30
        %v3032 = vsub.s32 %v3028, %v3031
        %vm3033 = vcmp.lt.s32.totalorder %v3032, 0
        %v3034 = vsub.s32 0, %v3032
        %v3035 = vsel %vm3033, %v3034, %v3032
        %v3036 = vclz %v3035
        %v3037 = vsub.s32 %v3036, 2
        %vm3038 = vcmp.gt.s32.totalorder 0, %v3037
        %v3039 = vsel %vm3038, 0, %v3037
        %v3040 = vsub.s32 32, %v3039
        %v3041 = vshll.u32 %v3032, %v3039
        %v3042 = vshrl.u32 %v3024, %v3040
        %v3043 = vor.u32 %v3041, %v3042
        %v3044 = vsub.s32 4294967266, %v3039
        %v3045 = vadd.s32 %v3044, 127
        %v3046 = vshll.u32 %v3045, 23
        %v3047 = vor.u32 4788187, %v3046
        %v3048 = vand.u32 2147483647, %v3047
        %v3050 = vcvt.s32.f32 %v3043
        %v3051 = vmul.f32 %v3050, %v3048
        %v3052 = vxor.u32 %v3051, 2147483648
        %v3053 = vsel %vm2932, %v3052, %v3051
        %v3054 = vsub.s32 4, %v3030
        %v3055 = vsel %vm2932, %v3054, %v3030
        %v3056 = vsel %vm2931, %v236, %v3053
        %v3057 = vsel %vm2931, 0, %v3055
        %v3058 = vmul.f32 %v3056, %v3056
        %v3059 = vmul.f32 %v3058, -0.001358992
        %v3060 = vadd.f32 %v3059, 0.041655596
        %v3061 = vmul.f32 %v3058, %v3060
        %v3062 = vadd.f32 %v3061, -0.4999988
        %v3063 = vmul.f32 %v3058, %v3062
        %v3064 = vadd.f32 1.0, %v3063
        %v3065 = vmul.f32 %v3056, %v3056
        %v3066 = vmul.f32 %v3065, -0.00019511016
        %v3067 = vadd.f32 %v3066, 0.008332121
        %v3068 = vmul.f32 %v3065, %v3067
        %v3069 = vadd.f32 %v3068, -0.16666654
        %v3070 = vmul.f32 %v3065, %v3069
        %v3071 = vadd.f32 %v3070, 1.0
        %v3072 = vmul.f32 %v3071, %v3056
        %vm3073 = vweird.f32 %v236
        %v3074 = vand.u32 %v3057, 3
        %vm3075 = vcmp.lt.s32.totalorder %v3074, 2
        %vm3076 = vcmp.eq.s32.totalorder %v3074, 0
        %v3077 = vxor.u32 %v3072, 2147483648
        %v3078 = vsel %vm3076, %v3064, %v3077
        %vm3079 = vcmp.eq.s32.totalorder %v3074, 2
        %v3080 = vxor.u32 %v3064, 2147483648
        %v3081 = vsel %vm3079, %v3080, %v3072
        %v3082 = vsel %vm3075, %v3078, %v3081
        %v3083 = vsel %vm3073, nan, %v3082
        %v3084 = vand.u32 2147483647, %v239
        %vm3085 = vcmp.le.f32.partialorder %v3084, 0.7853982
        %vm3086 = vcmp.lt.s32.totalorder %v239, 0
        %v3087 = vand.u32 %v239, 2139095040
        %v3088 = vshrl.u32 %v3087, 23
        %v3089 = vsub.s32 %v3088, 127
        %v3090 = vand.u32 2147483647, %v239
        %v3091 = vand.u32 %v3090, 8388607
        %v3092 = vor.u32 %v3091, 8388608
        %v3093 = vsub.s32 0, %v3092
        %v3094 = vadd.s32 %v3089, 1
        %vm3095 = vcmp.gt.s32.totalorder %v3094, 0
        %v3096 = vsel %vm3095, %v3094, 0
        %v3097 = vshrl.u32 %v3096, 5
        %v3098 = vand.u32 %v3096, 31
        %v3099 = vsub.s32 32, %v3098
        %v3100 = vshrl.u32 683565275, %v3099
        %v3101 = vshll.u32 683565275, %v3098
        %v3102 = vshrl.u32 2475754826, %v3099
        %v3103 = vor.u32 %v3101, %v3102
        %v3104 = vshll.u32 2475754826, %v3098
        %v3105 = vshrl.u32 2131351028, %v3099
        %v3106 = vor.u32 %v3104, %v3105
        %v3107 = vshll.u32 2131351028, %v3098
        %v3108 = vshrl.u32 2102212464, %v3099
        %v3109 = vor.u32 %v3107, %v3108
        %v3110 = vshll.u32 2102212464, %v3098
        %v3111 = vshrl.u32 920167782, %v3099
        %v3112 = vor.u32 %v3110, %v3111
        %v3113 = vshll.u32 920167782, %v3098
        %v3114 = vshrl.u32 1326507024, %v3099
        %v3115 = vor.u32 %v3113, %v3114
        %vm3116 = vcmp.lt.s32.totalorder %v3097, 1
        %vm3117 = vcmp.lt.s32.totalorder %v3097, 2
        %vm3118 = vcmp.lt.s32.totalorder %v3097, 3
        %vm3119 = vcmp.lt.s32.totalorder %v3097, 4
        %v3120 = vsel %vm3116, %v3100, %v3103
        %v3121 = vsel %vm3119, %v3109, 2102212464
        %v3122 = vsel %vm3118, %v3106, %v3121
        %v3123 = vsel %vm3117, %v3120, %v3122
        %v3124 = vsel %vm3116, %v3103, %v3106
        %v3125 = vsel %vm3119, %v3112, 920167782
        %v3126 = vsel %vm3118, %v3109, %v3125
        %v3127 = vsel %vm3117, %v3124, %v3126
        %v3128 = vsel %vm3116, %v3106, %v3109
        %v3129 = vsel %vm3119, %v3115, 1326507024
        %v3130 = vsel %vm3118, %v3112, %v3129
        %v3131 = vsel %vm3117, %v3128, %v3130
        %v3132 = vshll.u32 %v3092, 8
        %v3133 = vand.u32 %v3132, 65535
        %v3134 = vshrl.u32 %v3132, 16
        %v3135 = vand.u32 %v3131, 65535
        %v3136 = vshrl.u32 %v3131, 16
        %v3137 = vmul.u32 %v3133, %v3135
        %v3138 = vmul.u32 %v3133, %v3136
        %v3139 = vmul.u32 %v3134, %v3135
        %v3140 = vmul.u32 %v3134, %v3136
        %v3141 = vshll.u32 %v3138, 16
        %v3142 = vshrl.u32 %v3138, 16
        %v3143 = vshll.u32 %v3139, 16
        %v3144 = vshrl.u32 %v3139, 16
        %vm3145 = vc.u32 %v3137, %v3141
        %v3146 = vsel %vm3145, 1, 0
        %v3147 = vadd.s32 %v3137, %v3141
        %v3148 = vadd.s32 %v3140, %v3146
        %vm3149 = vc.u32 %v3147, %v3143
        %v3150 = vsel %vm3149, 1, 0
        %v3151 = vadd.s32 %v3147, %v3143
        %v3152 = vadd.s32 %v3148, %v3150
        %v3153 = vadd.s32 %v3152, %v3142
        %v3154 = vadd.s32 %v3153, %v3144
        %v3155 = vand.u32 %v3132, 65535
        %v3156 = vshrl.u32 %v3132, 16
        %v3157 = vand.u32 %v3127, 65535
        %v3158 = vshrl.u32 %v3127, 16
        %v3159 = vmul.u32 %v3155, %v3157
        %v3160 = vmul.u32 %v3155, %v3158
        %v3161 = vmul.u32 %v3156, %v3157
        %v3162 = vmul.u32 %v3156, %v3158
        %v3163 = vshll.u32 %v3160, 16
        %v3164 = vshrl.u32 %v3160, 16
        %v3165 = vshll.u32 %v3161, 16
        %v3166 = vshrl.u32 %v3161, 16
        %vm3167 = vc.u32 %v3159, %v3163
        %v3168 = vsel %vm3167, 1, 0
        %v3169 = vadd.s32 %v3159, %v3163
        %v3170 = vadd.s32 %v3162, %v3168
        %vm3171 = vc.u32 %v3169, %v3165
        %v3172 = vsel %vm3171, 1, 0
        %v3173 = vadd.s32 %v3169, %v3165
        %v3174 = vadd.s32 %v3170, %v3172
        %v3175 = vadd.s32 %v3174, %v3164
        %v3176 = vadd.s32 %v3175, %v3166
        %v3177 = vmul.u32 %v3132, %v3123
        %v3178 = vadd.s32 %v3154, %v3173
        %vm3179 = vc.u32 %v3154, %v3173
        %v3180 = vadd.s32 %v3176, 1
        %v3181 = vsel %vm3179, %v3180, %v3176
        %v3182 = vadd.s32 %v3177, %v3181
        %v3183 = vadd.s32 %v3182, 536870912
        %v3184 = vshrl.u32 %v3183, 30
        %v3185 = vshll.u32 %v3184, 30
        %v3186 = vsub.s32 %v3182, %v3185
        %vm3187 = vcmp.lt.s32.totalorder %v3186, 0
        %v3188 = vsub.s32 0, %v3186
        %v3189 = vsel %vm3187, %v3188, %v3186
        %v3190 = vclz %v3189
        %v3191 = vsub.s32 %v3190, 2
        %vm3192 = vcmp.gt.s32.totalorder 0, %v3191
        %v3193 = vsel %vm3192, 0, %v3191
        %v3194 = vsub.s32 32, %v3193
        %v3195 = vshll.u32 %v3186, %v3193
        %v3196 = vshrl.u32 %v3178, %v3194
        %v3197 = vor.u32 %v3195, %v3196
        %v3198 = vsub.s32 4294967266, %v3193
        %v3199 = vadd.s32 %v3198, 127
        %v3200 = vshll.u32 %v3199, 23
        %v3201 = vor.u32 4788187, %v3200
        %v3202 = vand.u32 2147483647, %v3201
        %v3204 = vcvt.s32.f32 %v3197
        %v3205 = vmul.f32 %v3204, %v3202
        %v3206 = vxor.u32 %v3205, 2147483648
        %v3207 = vsel %vm3086, %v3206, %v3205
        %v3208 = vsub.s32 4, %v3184
        %v3209 = vsel %vm3086, %v3208, %v3184
        %v3210 = vsel %vm3085, %v239, %v3207
        %v3211 = vsel %vm3085, 0, %v3209
        %v3212 = vmul.f32 %v3210, %v3210
        %v3213 = vmul.f32 %v3212, -0.001358992
        %v3214 = vadd.f32 %v3213, 0.041655596
        %v3215 = vmul.f32 %v3212, %v3214
        %v3216 = vadd.f32 %v3215, -0.4999988
        %v3217 = vmul.f32 %v3212, %v3216
        %v3218 = vadd.f32 1.0, %v3217
        %v3219 = vmul.f32 %v3210, %v3210
        %v3220 = vmul.f32 %v3219, -0.00019511016
        %v3221 = vadd.f32 %v3220, 0.008332121
        %v3222 = vmul.f32 %v3219, %v3221
        %v3223 = vadd.f32 %v3222, -0.16666654
        %v3224 = vmul.f32 %v3219, %v3223
        %v3225 = vadd.f32 %v3224, 1.0
        %v3226 = vmul.f32 %v3225, %v3210
        %vm3227 = vweird.f32 %v239
        %v3228 = vand.u32 %v3211, 3
        %vm3229 = vcmp.lt.s32.totalorder %v3228, 2
        %vm3230 = vcmp.eq.s32.totalorder %v3228, 0
        %v3231 = vxor.u32 %v3226, 2147483648
        %v3232 = vsel %vm3230, %v3218, %v3231
        %vm3233 = vcmp.eq.s32.totalorder %v3228, 2
        %v3234 = vxor.u32 %v3218, 2147483648
        %v3235 = vsel %vm3233, %v3234, %v3226
        %v3236 = vsel %vm3229, %v3232, %v3235
        %v3237 = vsel %vm3227, nan, %v3236
        %v3238 = vand.u32 2147483647, %v242
        %vm3239 = vcmp.le.f32.partialorder %v3238, 0.7853982
        %vm3240 = vcmp.lt.s32.totalorder %v242, 0
        %v3241 = vand.u32 %v242, 2139095040
        %v3242 = vshrl.u32 %v3241, 23
        %v3243 = vsub.s32 %v3242, 127
        %v3244 = vand.u32 2147483647, %v242
        %v3245 = vand.u32 %v3244, 8388607
        %v3246 = vor.u32 %v3245, 8388608
        %v3247 = vsub.s32 0, %v3246
        %v3248 = vadd.s32 %v3243, 1
        %vm3249 = vcmp.gt.s32.totalorder %v3248, 0
        %v3250 = vsel %vm3249, %v3248, 0
        %v3251 = vshrl.u32 %v3250, 5
        %v3252 = vand.u32 %v3250, 31
        %v3253 = vsub.s32 32, %v3252
        %v3254 = vshrl.u32 683565275, %v3253
        %v3255 = vshll.u32 683565275, %v3252
        %v3256 = vshrl.u32 2475754826, %v3253
        %v3257 = vor.u32 %v3255, %v3256
        %v3258 = vshll.u32 2475754826, %v3252
        %v3259 = vshrl.u32 2131351028, %v3253
        %v3260 = vor.u32 %v3258, %v3259
        %v3261 = vshll.u32 2131351028, %v3252
        %v3262 = vshrl.u32 2102212464, %v3253
        %v3263 = vor.u32 %v3261, %v3262
        %v3264 = vshll.u32 2102212464, %v3252
        %v3265 = vshrl.u32 920167782, %v3253
        %v3266 = vor.u32 %v3264, %v3265
        %v3267 = vshll.u32 920167782, %v3252
        %v3268 = vshrl.u32 1326507024, %v3253
        %v3269 = vor.u32 %v3267, %v3268
        %vm3270 = vcmp.lt.s32.totalorder %v3251, 1
        %vm3271 = vcmp.lt.s32.totalorder %v3251, 2
        %vm3272 = vcmp.lt.s32.totalorder %v3251, 3
        %vm3273 = vcmp.lt.s32.totalorder %v3251, 4
        %v3274 = vsel %vm3270, %v3254, %v3257
        %v3275 = vsel %vm3273, %v3263, 2102212464
        %v3276 = vsel %vm3272, %v3260, %v3275
        %v3277 = vsel %vm3271, %v3274, %v3276
        %v3278 = vsel %vm3270, %v3257, %v3260
        %v3279 = vsel %vm3273, %v3266, 920167782
        %v3280 = vsel %vm3272, %v3263, %v3279
        %v3281 = vsel %vm3271, %v3278, %v3280
        %v3282 = vsel %vm3270, %v3260, %v3263
        %v3283 = vsel %vm3273, %v3269, 1326507024
        %v3284 = vsel %vm3272, %v3266, %v3283
        %v3285 = vsel %vm3271, %v3282, %v3284
        %v3286 = vshll.u32 %v3246, 8
        %v3287 = vand.u32 %v3286, 65535
        %v3288 = vshrl.u32 %v3286, 16
        %v3289 = vand.u32 %v3285, 65535
        %v3290 = vshrl.u32 %v3285, 16
        %v3291 = vmul.u32 %v3287, %v3289
        %v3292 = vmul.u32 %v3287, %v3290
        %v3293 = vmul.u32 %v3288, %v3289
        %v3294 = vmul.u32 %v3288, %v3290
        %v3295 = vshll.u32 %v3292, 16
        %v3296 = vshrl.u32 %v3292, 16
        %v3297 = vshll.u32 %v3293, 16
        %v3298 = vshrl.u32 %v3293, 16
        %vm3299 = vc.u32 %v3291, %v3295
        %v3300 = vsel %vm3299, 1, 0
        %v3301 = vadd.s32 %v3291, %v3295
        %v3302 = vadd.s32 %v3294, %v3300
        %vm3303 = vc.u32 %v3301, %v3297
        %v3304 = vsel %vm3303, 1, 0
        %v3305 = vadd.s32 %v3301, %v3297
        %v3306 = vadd.s32 %v3302, %v3304
        %v3307 = vadd.s32 %v3306, %v3296
        %v3308 = vadd.s32 %v3307, %v3298
        %v3309 = vand.u32 %v3286, 65535
        %v3310 = vshrl.u32 %v3286, 16
        %v3311 = vand.u32 %v3281, 65535
        %v3312 = vshrl.u32 %v3281, 16
        %v3313 = vmul.u32 %v3309, %v3311
        %v3314 = vmul.u32 %v3309, %v3312
        %v3315 = vmul.u32 %v3310, %v3311
        %v3316 = vmul.u32 %v3310, %v3312
        %v3317 = vshll.u32 %v3314, 16
        %v3318 = vshrl.u32 %v3314, 16
        %v3319 = vshll.u32 %v3315, 16
        %v3320 = vshrl.u32 %v3315, 16
        %vm3321 = vc.u32 %v3313, %v3317
        %v3322 = vsel %vm3321, 1, 0
        %v3323 = vadd.s32 %v3313, %v3317
        %v3324 = vadd.s32 %v3316, %v3322
        %vm3325 = vc.u32 %v3323, %v3319
        %v3326 = vsel %vm3325, 1, 0
        %v3327 = vadd.s32 %v3323, %v3319
        %v3328 = vadd.s32 %v3324, %v3326
        %v3329 = vadd.s32 %v3328, %v3318
        %v3330 = vadd.s32 %v3329, %v3320
        %v3331 = vmul.u32 %v3286, %v3277
        %v3332 = vadd.s32 %v3308, %v3327
        %vm3333 = vc.u32 %v3308, %v3327
        %v3334 = vadd.s32 %v3330, 1
        %v3335 = vsel %vm3333, %v3334, %v3330
        %v3336 = vadd.s32 %v3331, %v3335
        %v3337 = vadd.s32 %v3336, 536870912
        %v3338 = vshrl.u32 %v3337, 30
        %v3339 = vshll.u32 %v3338, 30
        %v3340 = vsub.s32 %v3336, %v3339
        %vm3341 = vcmp.lt.s32.totalorder %v3340, 0
        %v3342 = vsub.s32 0, %v3340
        %v3343 = vsel %vm3341, %v3342, %v3340
        %v3344 = vclz %v3343
        %v3345 = vsub.s32 %v3344, 2
        %vm3346 = vcmp.gt.s32.totalorder 0, %v3345
        %v3347 = vsel %vm3346, 0, %v3345
        %v3348 = vsub.s32 32, %v3347
        %v3349 = vshll.u32 %v3340, %v3347
        %v3350 = vshrl.u32 %v3332, %v3348
        %v3351 = vor.u32 %v3349, %v3350
        %v3352 = vsub.s32 4294967266, %v3347
        %v3353 = vadd.s32 %v3352, 127
        %v3354 = vshll.u32 %v3353, 23
        %v3355 = vor.u32 4788187, %v3354
        %v3356 = vand.u32 2147483647, %v3355
        %v3358 = vcvt.s32.f32 %v3351
        %v3359 = vmul.f32 %v3358, %v3356
        %v3360 = vxor.u32 %v3359, 2147483648
        %v3361 = vsel %vm3240, %v3360, %v3359
        %v3362 = vsub.s32 4, %v3338
        %v3363 = vsel %vm3240, %v3362, %v3338
        %v3364 = vsel %vm3239, %v242, %v3361
        %v3365 = vsel %vm3239, 0, %v3363
        %v3366 = vmul.f32 %v3364, %v3364
        %v3367 = vmul.f32 %v3366, -0.001358992
        %v3368 = vadd.f32 %v3367, 0.041655596
        %v3369 = vmul.f32 %v3366, %v3368
        %v3370 = vadd.f32 %v3369, -0.4999988
        %v3371 = vmul.f32 %v3366, %v3370
        %v3372 = vadd.f32 1.0, %v3371
        %v3373 = vmul.f32 %v3364, %v3364
        %v3374 = vmul.f32 %v3373, -0.00019511016
        %v3375 = vadd.f32 %v3374, 0.008332121
        %v3376 = vmul.f32 %v3373, %v3375
        %v3377 = vadd.f32 %v3376, -0.16666654
        %v3378 = vmul.f32 %v3373, %v3377
        %v3379 = vadd.f32 %v3378, 1.0
        %v3380 = vmul.f32 %v3379, %v3364
        %vm3381 = vweird.f32 %v242
        %v3382 = vand.u32 %v3365, 3
        %vm3383 = vcmp.lt.s32.totalorder %v3382, 2
        %vm3384 = vcmp.eq.s32.totalorder %v3382, 0
        %v3385 = vxor.u32 %v3380, 2147483648
        %v3386 = vsel %vm3384, %v3372, %v3385
        %vm3387 = vcmp.eq.s32.totalorder %v3382, 2
        %v3388 = vxor.u32 %v3372, 2147483648
        %v3389 = vsel %vm3387, %v3388, %v3380
        %v3390 = vsel %vm3383, %v3386, %v3389
        %v3391 = vsel %vm3381, nan, %v3390
        %v3392 = vand.u32 2147483647, %v245
        %vm3393 = vcmp.le.f32.partialorder %v3392, 0.7853982
        %vm3394 = vcmp.lt.s32.totalorder %v245, 0
        %v3395 = vand.u32 %v245, 2139095040
        %v3396 = vshrl.u32 %v3395, 23
        %v3397 = vsub.s32 %v3396, 127
        %v3398 = vand.u32 2147483647, %v245
        %v3399 = vand.u32 %v3398, 8388607
        %v3400 = vor.u32 %v3399, 8388608
        %v3401 = vsub.s32 0, %v3400
        %v3402 = vadd.s32 %v3397, 1
        %vm3403 = vcmp.gt.s32.totalorder %v3402, 0
        %v3404 = vsel %vm3403, %v3402, 0
        %v3405 = vshrl.u32 %v3404, 5
        %v3406 = vand.u32 %v3404, 31
        %v3407 = vsub.s32 32, %v3406
        %v3408 = vshrl.u32 683565275, %v3407
        %v3409 = vshll.u32 683565275, %v3406
        %v3410 = vshrl.u32 2475754826, %v3407
        %v3411 = vor.u32 %v3409, %v3410
        %v3412 = vshll.u32 2475754826, %v3406
        %v3413 = vshrl.u32 2131351028, %v3407
        %v3414 = vor.u32 %v3412, %v3413
        %v3415 = vshll.u32 2131351028, %v3406
        %v3416 = vshrl.u32 2102212464, %v3407
        %v3417 = vor.u32 %v3415, %v3416
        %v3418 = vshll.u32 2102212464, %v3406
        %v3419 = vshrl.u32 920167782, %v3407
        %v3420 = vor.u32 %v3418, %v3419
        %v3421 = vshll.u32 920167782, %v3406
        %v3422 = vshrl.u32 1326507024, %v3407
        %v3423 = vor.u32 %v3421, %v3422
        %vm3424 = vcmp.lt.s32.totalorder %v3405, 1
        %vm3425 = vcmp.lt.s32.totalorder %v3405, 2
        %vm3426 = vcmp.lt.s32.totalorder %v3405, 3
        %vm3427 = vcmp.lt.s32.totalorder %v3405, 4
        %v3428 = vsel %vm3424, %v3408, %v3411
        %v3429 = vsel %vm3427, %v3417, 2102212464
        %v3430 = vsel %vm3426, %v3414, %v3429
        %v3431 = vsel %vm3425, %v3428, %v3430
        %v3432 = vsel %vm3424, %v3411, %v3414
        %v3433 = vsel %vm3427, %v3420, 920167782
        %v3434 = vsel %vm3426, %v3417, %v3433
        %v3435 = vsel %vm3425, %v3432, %v3434
        %v3436 = vsel %vm3424, %v3414, %v3417
        %v3437 = vsel %vm3427, %v3423, 1326507024
        %v3438 = vsel %vm3426, %v3420, %v3437
        %v3439 = vsel %vm3425, %v3436, %v3438
        %v3440 = vshll.u32 %v3400, 8
        %v3441 = vand.u32 %v3440, 65535
        %v3442 = vshrl.u32 %v3440, 16
        %v3443 = vand.u32 %v3439, 65535
        %v3444 = vshrl.u32 %v3439, 16
        %v3445 = vmul.u32 %v3441, %v3443
        %v3446 = vmul.u32 %v3441, %v3444
        %v3447 = vmul.u32 %v3442, %v3443
        %v3448 = vmul.u32 %v3442, %v3444
        %v3449 = vshll.u32 %v3446, 16
        %v3450 = vshrl.u32 %v3446, 16
        %v3451 = vshll.u32 %v3447, 16
        %v3452 = vshrl.u32 %v3447, 16
        %vm3453 = vc.u32 %v3445, %v3449
        %v3454 = vsel %vm3453, 1, 0
        %v3455 = vadd.s32 %v3445, %v3449
        %v3456 = vadd.s32 %v3448, %v3454
        %vm3457 = vc.u32 %v3455, %v3451
        %v3458 = vsel %vm3457, 1, 0
        %v3459 = vadd.s32 %v3455, %v3451
        %v3460 = vadd.s32 %v3456, %v3458
        %v3461 = vadd.s32 %v3460, %v3450
        %v3462 = vadd.s32 %v3461, %v3452
        %v3463 = vand.u32 %v3440, 65535
        %v3464 = vshrl.u32 %v3440, 16
        %v3465 = vand.u32 %v3435, 65535
        %v3466 = vshrl.u32 %v3435, 16
        %v3467 = vmul.u32 %v3463, %v3465
        %v3468 = vmul.u32 %v3463, %v3466
        %v3469 = vmul.u32 %v3464, %v3465
        %v3470 = vmul.u32 %v3464, %v3466
        %v3471 = vshll.u32 %v3468, 16
        %v3472 = vshrl.u32 %v3468, 16
        %v3473 = vshll.u32 %v3469, 16
        %v3474 = vshrl.u32 %v3469, 16
        %vm3475 = vc.u32 %v3467, %v3471
        %v3476 = vsel %vm3475, 1, 0
        %v3477 = vadd.s32 %v3467, %v3471
        %v3478 = vadd.s32 %v3470, %v3476
        %vm3479 = vc.u32 %v3477, %v3473
        %v3480 = vsel %vm3479, 1, 0
        %v3481 = vadd.s32 %v3477, %v3473
        %v3482 = vadd.s32 %v3478, %v3480
        %v3483 = vadd.s32 %v3482, %v3472
        %v3484 = vadd.s32 %v3483, %v3474
        %v3485 = vmul.u32 %v3440, %v3431
        %v3486 = vadd.s32 %v3462, %v3481
        %vm3487 = vc.u32 %v3462, %v3481
        %v3488 = vadd.s32 %v3484, 1
        %v3489 = vsel %vm3487, %v3488, %v3484
        %v3490 = vadd.s32 %v3485, %v3489
        %v3491 = vadd.s32 %v3490, 536870912
        %v3492 = vshrl.u32 %v3491, 30
        %v3493 = vshll.u32 %v3492, 30
        %v3494 = vsub.s32 %v3490, %v3493
        %vm3495 = vcmp.lt.s32.totalorder %v3494, 0
        %v3496 = vsub.s32 0, %v3494
        %v3497 = vsel %vm3495, %v3496, %v3494
        %v3498 = vclz %v3497
        %v3499 = vsub.s32 %v3498, 2
        %vm3500 = vcmp.gt.s32.totalorder 0, %v3499
        %v3501 = vsel %vm3500, 0, %v3499
        %v3502 = vsub.s32 32, %v3501
        %v3503 = vshll.u32 %v3494, %v3501
        %v3504 = vshrl.u32 %v3486, %v3502
        %v3505 = vor.u32 %v3503, %v3504
        %v3506 = vsub.s32 4294967266, %v3501
        %v3507 = vadd.s32 %v3506, 127
        %v3508 = vshll.u32 %v3507, 23
        %v3509 = vor.u32 4788187, %v3508
        %v3510 = vand.u32 2147483647, %v3509
        %v3512 = vcvt.s32.f32 %v3505
        %v3513 = vmul.f32 %v3512, %v3510
        %v3514 = vxor.u32 %v3513, 2147483648
        %v3515 = vsel %vm3394, %v3514, %v3513
        %v3516 = vsub.s32 4, %v3492
        %v3517 = vsel %vm3394, %v3516, %v3492
        %v3518 = vsel %vm3393, %v245, %v3515
        %v3519 = vsel %vm3393, 0, %v3517
        %v3520 = vmul.f32 %v3518, %v3518
        %v3521 = vmul.f32 %v3520, -0.001358992
        %v3522 = vadd.f32 %v3521, 0.041655596
        %v3523 = vmul.f32 %v3520, %v3522
        %v3524 = vadd.f32 %v3523, -0.4999988
        %v3525 = vmul.f32 %v3520, %v3524
        %v3526 = vadd.f32 1.0, %v3525
        %v3527 = vmul.f32 %v3518, %v3518
        %v3528 = vmul.f32 %v3527, -0.00019511016
        %v3529 = vadd.f32 %v3528, 0.008332121
        %v3530 = vmul.f32 %v3527, %v3529
        %v3531 = vadd.f32 %v3530, -0.16666654
        %v3532 = vmul.f32 %v3527, %v3531
        %v3533 = vadd.f32 %v3532, 1.0
        %v3534 = vmul.f32 %v3533, %v3518
        %vm3535 = vweird.f32 %v245
        %v3536 = vand.u32 %v3519, 3
        %vm3537 = vcmp.lt.s32.totalorder %v3536, 2
        %vm3538 = vcmp.eq.s32.totalorder %v3536, 0
        %v3539 = vxor.u32 %v3534, 2147483648
        %v3540 = vsel %vm3538, %v3526, %v3539
        %vm3541 = vcmp.eq.s32.totalorder %v3536, 2
        %v3542 = vxor.u32 %v3526, 2147483648
        %v3543 = vsel %vm3541, %v3542, %v3534
        %v3544 = vsel %vm3537, %v3540, %v3543
        %v3545 = vsel %vm3535, nan, %v3544
        %v3546 = vand.u32 2147483647, %v248
        %vm3547 = vcmp.le.f32.partialorder %v3546, 0.7853982
        %vm3548 = vcmp.lt.s32.totalorder %v248, 0
        %v3549 = vand.u32 %v248, 2139095040
        %v3550 = vshrl.u32 %v3549, 23
        %v3551 = vsub.s32 %v3550, 127
        %v3552 = vand.u32 2147483647, %v248
        %v3553 = vand.u32 %v3552, 8388607
        %v3554 = vor.u32 %v3553, 8388608
        %v3555 = vsub.s32 0, %v3554
        %v3556 = vadd.s32 %v3551, 1
        %vm3557 = vcmp.gt.s32.totalorder %v3556, 0
        %v3558 = vsel %vm3557, %v3556, 0
        %v3559 = vshrl.u32 %v3558, 5
        %v3560 = vand.u32 %v3558, 31
        %v3561 = vsub.s32 32, %v3560
        %v3562 = vshrl.u32 683565275, %v3561
        %v3563 = vshll.u32 683565275, %v3560
        %v3564 = vshrl.u32 2475754826, %v3561
        %v3565 = vor.u32 %v3563, %v3564
        %v3566 = vshll.u32 2475754826, %v3560
        %v3567 = vshrl.u32 2131351028, %v3561
        %v3568 = vor.u32 %v3566, %v3567
        %v3569 = vshll.u32 2131351028, %v3560
        %v3570 = vshrl.u32 2102212464, %v3561
        %v3571 = vor.u32 %v3569, %v3570
        %v3572 = vshll.u32 2102212464, %v3560
        %v3573 = vshrl.u32 920167782, %v3561
        %v3574 = vor.u32 %v3572, %v3573
        %v3575 = vshll.u32 920167782, %v3560
        %v3576 = vshrl.u32 1326507024, %v3561
        %v3577 = vor.u32 %v3575, %v3576
        %vm3578 = vcmp.lt.s32.totalorder %v3559, 1
        %vm3579 = vcmp.lt.s32.totalorder %v3559, 2
        %vm3580 = vcmp.lt.s32.totalorder %v3559, 3
        %vm3581 = vcmp.lt.s32.totalorder %v3559, 4
        %v3582 = vsel %vm3578, %v3562, %v3565
        %v3583 = vsel %vm3581, %v3571, 2102212464
        %v3584 = vsel %vm3580, %v3568, %v3583
        %v3585 = vsel %vm3579, %v3582, %v3584
        %v3586 = vsel %vm3578, %v3565, %v3568
        %v3587 = vsel %vm3581, %v3574, 920167782
        %v3588 = vsel %vm3580, %v3571, %v3587
        %v3589 = vsel %vm3579, %v3586, %v3588
        %v3590 = vsel %vm3578, %v3568, %v3571
        %v3591 = vsel %vm3581, %v3577, 1326507024
        %v3592 = vsel %vm3580, %v3574, %v3591
        %v3593 = vsel %vm3579, %v3590, %v3592
        %v3594 = vshll.u32 %v3554, 8
        %v3595 = vand.u32 %v3594, 65535
        %v3596 = vshrl.u32 %v3594, 16
        %v3597 = vand.u32 %v3593, 65535
        %v3598 = vshrl.u32 %v3593, 16
        %v3599 = vmul.u32 %v3595, %v3597
        %v3600 = vmul.u32 %v3595, %v3598
        %v3601 = vmul.u32 %v3596, %v3597
        %v3602 = vmul.u32 %v3596, %v3598
        %v3603 = vshll.u32 %v3600, 16
        %v3604 = vshrl.u32 %v3600, 16
        %v3605 = vshll.u32 %v3601, 16
        %v3606 = vshrl.u32 %v3601, 16
        %vm3607 = vc.u32 %v3599, %v3603
        %v3608 = vsel %vm3607, 1, 0
        %v3609 = vadd.s32 %v3599, %v3603
        %v3610 = vadd.s32 %v3602, %v3608
        %vm3611 = vc.u32 %v3609, %v3605
        %v3612 = vsel %vm3611, 1, 0
        %v3613 = vadd.s32 %v3609, %v3605
        %v3614 = vadd.s32 %v3610, %v3612
        %v3615 = vadd.s32 %v3614, %v3604
        %v3616 = vadd.s32 %v3615, %v3606
        %v3617 = vand.u32 %v3594, 65535
        %v3618 = vshrl.u32 %v3594, 16
        %v3619 = vand.u32 %v3589, 65535
        %v3620 = vshrl.u32 %v3589, 16
        %v3621 = vmul.u32 %v3617, %v3619
        %v3622 = vmul.u32 %v3617, %v3620
        %v3623 = vmul.u32 %v3618, %v3619
        %v3624 = vmul.u32 %v3618, %v3620
        %v3625 = vshll.u32 %v3622, 16
        %v3626 = vshrl.u32 %v3622, 16
        %v3627 = vshll.u32 %v3623, 16
        %v3628 = vshrl.u32 %v3623, 16
        %vm3629 = vc.u32 %v3621, %v3625
        %v3630 = vsel %vm3629, 1, 0
        %v3631 = vadd.s32 %v3621, %v3625
        %v3632 = vadd.s32 %v3624, %v3630
        %vm3633 = vc.u32 %v3631, %v3627
        %v3634 = vsel %vm3633, 1, 0
        %v3635 = vadd.s32 %v3631, %v3627
        %v3636 = vadd.s32 %v3632, %v3634
        %v3637 = vadd.s32 %v3636, %v3626
        %v3638 = vadd.s32 %v3637, %v3628
        %v3639 = vmul.u32 %v3594, %v3585
        %v3640 = vadd.s32 %v3616, %v3635
        %vm3641 = vc.u32 %v3616, %v3635
        %v3642 = vadd.s32 %v3638, 1
        %v3643 = vsel %vm3641, %v3642, %v3638
        %v3644 = vadd.s32 %v3639, %v3643
        %v3645 = vadd.s32 %v3644, 536870912
        %v3646 = vshrl.u32 %v3645, 30
        %v3647 = vshll.u32 %v3646, 30
        %v3648 = vsub.s32 %v3644, %v3647
        %vm3649 = vcmp.lt.s32.totalorder %v3648, 0
        %v3650 = vsub.s32 0, %v3648
        %v3651 = vsel %vm3649, %v3650, %v3648
        %v3652 = vclz %v3651
        %v3653 = vsub.s32 %v3652, 2
        %vm3654 = vcmp.gt.s32.totalorder 0, %v3653
        %v3655 = vsel %vm3654, 0, %v3653
        %v3656 = vsub.s32 32, %v3655
        %v3657 = vshll.u32 %v3648, %v3655
        %v3658 = vshrl.u32 %v3640, %v3656
        %v3659 = vor.u32 %v3657, %v3658
        %v3660 = vsub.s32 4294967266, %v3655
        %v3661 = vadd.s32 %v3660, 127
        %v3662 = vshll.u32 %v3661, 23
        %v3663 = vor.u32 4788187, %v3662
        %v3664 = vand.u32 2147483647, %v3663
        %v3666 = vcvt.s32.f32 %v3659
        %v3667 = vmul.f32 %v3666, %v3664
        %v3668 = vxor.u32 %v3667, 2147483648
        %v3669 = vsel %vm3548, %v3668, %v3667
        %v3670 = vsub.s32 4, %v3646
        %v3671 = vsel %vm3548, %v3670, %v3646
        %v3672 = vsel %vm3547, %v248, %v3669
        %v3673 = vsel %vm3547, 0, %v3671
        %v3674 = vmul.f32 %v3672, %v3672
        %v3675 = vmul.f32 %v3674, -0.001358992
        %v3676 = vadd.f32 %v3675, 0.041655596
        %v3677 = vmul.f32 %v3674, %v3676
        %v3678 = vadd.f32 %v3677, -0.4999988
        %v3679 = vmul.f32 %v3674, %v3678
        %v3680 = vadd.f32 1.0, %v3679
        %v3681 = vmul.f32 %v3672, %v3672
        %v3682 = vmul.f32 %v3681, -0.00019511016
        %v3683 = vadd.f32 %v3682, 0.008332121
        %v3684 = vmul.f32 %v3681, %v3683
        %v3685 = vadd.f32 %v3684, -0.16666654
        %v3686 = vmul.f32 %v3681, %v3685
        %v3687 = vadd.f32 %v3686, 1.0
        %v3688 = vmul.f32 %v3687, %v3672
        %vm3689 = vweird.f32 %v248
        %v3690 = vand.u32 %v3673, 3
        %vm3691 = vcmp.lt.s32.totalorder %v3690, 2
        %vm3692 = vcmp.eq.s32.totalorder %v3690, 0
        %v3693 = vxor.u32 %v3688, 2147483648
        %v3694 = vsel %vm3692, %v3680, %v3693
        %vm3695 = vcmp.eq.s32.totalorder %v3690, 2
        %v3696 = vxor.u32 %v3680, 2147483648
        %v3697 = vsel %vm3695, %v3696, %v3688
        %v3698 = vsel %vm3691, %v3694, %v3697
        %v3699 = vsel %vm3689, nan, %v3698
        %v3700 = vand.u32 2147483647, %v251
        %vm3701 = vcmp.le.f32.partialorder %v3700, 0.7853982
        %vm3702 = vcmp.lt.s32.totalorder %v251, 0
        %v3703 = vand.u32 %v251, 2139095040
        %v3704 = vshrl.u32 %v3703, 23
        %v3705 = vsub.s32 %v3704, 127
        %v3706 = vand.u32 2147483647, %v251
        %v3707 = vand.u32 %v3706, 8388607
        %v3708 = vor.u32 %v3707, 8388608
        %v3709 = vsub.s32 0, %v3708
        %v3710 = vadd.s32 %v3705, 1
        %vm3711 = vcmp.gt.s32.totalorder %v3710, 0
        %v3712 = vsel %vm3711, %v3710, 0
        %v3713 = vshrl.u32 %v3712, 5
        %v3714 = vand.u32 %v3712, 31
        %v3715 = vsub.s32 32, %v3714
        %v3716 = vshrl.u32 683565275, %v3715
        %v3717 = vshll.u32 683565275, %v3714
        %v3718 = vshrl.u32 2475754826, %v3715
        %v3719 = vor.u32 %v3717, %v3718
        %v3720 = vshll.u32 2475754826, %v3714
        %v3721 = vshrl.u32 2131351028, %v3715
        %v3722 = vor.u32 %v3720, %v3721
        %v3723 = vshll.u32 2131351028, %v3714
        %v3724 = vshrl.u32 2102212464, %v3715
        %v3725 = vor.u32 %v3723, %v3724
        %v3726 = vshll.u32 2102212464, %v3714
        %v3727 = vshrl.u32 920167782, %v3715
        %v3728 = vor.u32 %v3726, %v3727
        %v3729 = vshll.u32 920167782, %v3714
        %v3730 = vshrl.u32 1326507024, %v3715
        %v3731 = vor.u32 %v3729, %v3730
        %vm3732 = vcmp.lt.s32.totalorder %v3713, 1
        %vm3733 = vcmp.lt.s32.totalorder %v3713, 2
        %vm3734 = vcmp.lt.s32.totalorder %v3713, 3
        %vm3735 = vcmp.lt.s32.totalorder %v3713, 4
        %v3736 = vsel %vm3732, %v3716, %v3719
        %v3737 = vsel %vm3735, %v3725, 2102212464
        %v3738 = vsel %vm3734, %v3722, %v3737
        %v3739 = vsel %vm3733, %v3736, %v3738
        %v3740 = vsel %vm3732, %v3719, %v3722
        %v3741 = vsel %vm3735, %v3728, 920167782
        %v3742 = vsel %vm3734, %v3725, %v3741
        %v3743 = vsel %vm3733, %v3740, %v3742
        %v3744 = vsel %vm3732, %v3722, %v3725
        %v3745 = vsel %vm3735, %v3731, 1326507024
        %v3746 = vsel %vm3734, %v3728, %v3745
        %v3747 = vsel %vm3733, %v3744, %v3746
        %v3748 = vshll.u32 %v3708, 8
        %v3749 = vand.u32 %v3748, 65535
        %v3750 = vshrl.u32 %v3748, 16
        %v3751 = vand.u32 %v3747, 65535
        %v3752 = vshrl.u32 %v3747, 16
        %v3753 = vmul.u32 %v3749, %v3751
        %v3754 = vmul.u32 %v3749, %v3752
        %v3755 = vmul.u32 %v3750, %v3751
        %v3756 = vmul.u32 %v3750, %v3752
        %v3757 = vshll.u32 %v3754, 16
        %v3758 = vshrl.u32 %v3754, 16
        %v3759 = vshll.u32 %v3755, 16
        %v3760 = vshrl.u32 %v3755, 16
        %vm3761 = vc.u32 %v3753, %v3757
        %v3762 = vsel %vm3761, 1, 0
        %v3763 = vadd.s32 %v3753, %v3757
        %v3764 = vadd.s32 %v3756, %v3762
        %vm3765 = vc.u32 %v3763, %v3759
        %v3766 = vsel %vm3765, 1, 0
        %v3767 = vadd.s32 %v3763, %v3759
        %v3768 = vadd.s32 %v3764, %v3766
        %v3769 = vadd.s32 %v3768, %v3758
        %v3770 = vadd.s32 %v3769, %v3760
        %v3771 = vand.u32 %v3748, 65535
        %v3772 = vshrl.u32 %v3748, 16
        %v3773 = vand.u32 %v3743, 65535
        %v3774 = vshrl.u32 %v3743, 16
        %v3775 = vmul.u32 %v3771, %v3773
        %v3776 = vmul.u32 %v3771, %v3774
        %v3777 = vmul.u32 %v3772, %v3773
        %v3778 = vmul.u32 %v3772, %v3774
        %v3779 = vshll.u32 %v3776, 16
        %v3780 = vshrl.u32 %v3776, 16
        %v3781 = vshll.u32 %v3777, 16
        %v3782 = vshrl.u32 %v3777, 16
        %vm3783 = vc.u32 %v3775, %v3779
        %v3784 = vsel %vm3783, 1, 0
        %v3785 = vadd.s32 %v3775, %v3779
        %v3786 = vadd.s32 %v3778, %v3784
        %vm3787 = vc.u32 %v3785, %v3781
        %v3788 = vsel %vm3787, 1, 0
        %v3789 = vadd.s32 %v3785, %v3781
        %v3790 = vadd.s32 %v3786, %v3788
        %v3791 = vadd.s32 %v3790, %v3780
        %v3792 = vadd.s32 %v3791, %v3782
        %v3793 = vmul.u32 %v3748, %v3739
        %v3794 = vadd.s32 %v3770, %v3789
        %vm3795 = vc.u32 %v3770, %v3789
        %v3796 = vadd.s32 %v3792, 1
        %v3797 = vsel %vm3795, %v3796, %v3792
        %v3798 = vadd.s32 %v3793, %v3797
        %v3799 = vadd.s32 %v3798, 536870912
        %v3800 = vshrl.u32 %v3799, 30
        %v3801 = vshll.u32 %v3800, 30
        %v3802 = vsub.s32 %v3798, %v3801
        %vm3803 = vcmp.lt.s32.totalorder %v3802, 0
        %v3804 = vsub.s32 0, %v3802
        %v3805 = vsel %vm3803, %v3804, %v3802
        %v3806 = vclz %v3805
        %v3807 = vsub.s32 %v3806, 2
        %vm3808 = vcmp.gt.s32.totalorder 0, %v3807
        %v3809 = vsel %vm3808, 0, %v3807
        %v3810 = vsub.s32 32, %v3809
        %v3811 = vshll.u32 %v3802, %v3809
        %v3812 = vshrl.u32 %v3794, %v3810
        %v3813 = vor.u32 %v3811, %v3812
        %v3814 = vsub.s32 4294967266, %v3809
        %v3815 = vadd.s32 %v3814, 127
        %v3816 = vshll.u32 %v3815, 23
        %v3817 = vor.u32 4788187, %v3816
        %v3818 = vand.u32 2147483647, %v3817
        %v3820 = vcvt.s32.f32 %v3813
        %v3821 = vmul.f32 %v3820, %v3818
        %v3822 = vxor.u32 %v3821, 2147483648
        %v3823 = vsel %vm3702, %v3822, %v3821
        %v3824 = vsub.s32 4, %v3800
        %v3825 = vsel %vm3702, %v3824, %v3800
        %v3826 = vsel %vm3701, %v251, %v3823
        %v3827 = vsel %vm3701, 0, %v3825
        %v3828 = vmul.f32 %v3826, %v3826
        %v3829 = vmul.f32 %v3828, -0.001358992
        %v3830 = vadd.f32 %v3829, 0.041655596
        %v3831 = vmul.f32 %v3828, %v3830
        %v3832 = vadd.f32 %v3831, -0.4999988
        %v3833 = vmul.f32 %v3828, %v3832
        %v3834 = vadd.f32 1.0, %v3833
        %v3835 = vmul.f32 %v3826, %v3826
        %v3836 = vmul.f32 %v3835, -0.00019511016
        %v3837 = vadd.f32 %v3836, 0.008332121
        %v3838 = vmul.f32 %v3835, %v3837
        %v3839 = vadd.f32 %v3838, -0.16666654
        %v3840 = vmul.f32 %v3835, %v3839
        %v3841 = vadd.f32 %v3840, 1.0
        %v3842 = vmul.f32 %v3841, %v3826
        %vm3843 = vweird.f32 %v251
        %v3844 = vand.u32 %v3827, 3
        %vm3845 = vcmp.lt.s32.totalorder %v3844, 2
        %vm3846 = vcmp.eq.s32.totalorder %v3844, 0
        %v3847 = vxor.u32 %v3842, 2147483648
        %v3848 = vsel %vm3846, %v3834, %v3847
        %vm3849 = vcmp.eq.s32.totalorder %v3844, 2
        %v3850 = vxor.u32 %v3834, 2147483648
        %v3851 = vsel %vm3849, %v3850, %v3842
        %v3852 = vsel %vm3845, %v3848, %v3851
        %v3853 = vsel %vm3843, nan, %v3852
        %v3854 = vand.u32 2147483647, %v254
        %vm3855 = vcmp.le.f32.partialorder %v3854, 0.7853982
        %vm3856 = vcmp.lt.s32.totalorder %v254, 0
        %v3857 = vand.u32 %v254, 2139095040
        %v3858 = vshrl.u32 %v3857, 23
        %v3859 = vsub.s32 %v3858, 127
        %v3860 = vand.u32 2147483647, %v254
        %v3861 = vand.u32 %v3860, 8388607
        %v3862 = vor.u32 %v3861, 8388608
        %v3863 = vsub.s32 0, %v3862
        %v3864 = vadd.s32 %v3859, 1
        %vm3865 = vcmp.gt.s32.totalorder %v3864, 0
        %v3866 = vsel %vm3865, %v3864, 0
        %v3867 = vshrl.u32 %v3866, 5
        %v3868 = vand.u32 %v3866, 31
        %v3869 = vsub.s32 32, %v3868
        %v3870 = vshrl.u32 683565275, %v3869
        %v3871 = vshll.u32 683565275, %v3868
        %v3872 = vshrl.u32 2475754826, %v3869
        %v3873 = vor.u32 %v3871, %v3872
        %v3874 = vshll.u32 2475754826, %v3868
        %v3875 = vshrl.u32 2131351028, %v3869
        %v3876 = vor.u32 %v3874, %v3875
        %v3877 = vshll.u32 2131351028, %v3868
        %v3878 = vshrl.u32 2102212464, %v3869
        %v3879 = vor.u32 %v3877, %v3878
        %v3880 = vshll.u32 2102212464, %v3868
        %v3881 = vshrl.u32 920167782, %v3869
        %v3882 = vor.u32 %v3880, %v3881
        %v3883 = vshll.u32 920167782, %v3868
        %v3884 = vshrl.u32 1326507024, %v3869
        %v3885 = vor.u32 %v3883, %v3884
        %vm3886 = vcmp.lt.s32.totalorder %v3867, 1
        %vm3887 = vcmp.lt.s32.totalorder %v3867, 2
        %vm3888 = vcmp.lt.s32.totalorder %v3867, 3
        %vm3889 = vcmp.lt.s32.totalorder %v3867, 4
        %v3890 = vsel %vm3886, %v3870, %v3873
        %v3891 = vsel %vm3889, %v3879, 2102212464
        %v3892 = vsel %vm3888, %v3876, %v3891
        %v3893 = vsel %vm3887, %v3890, %v3892
        %v3894 = vsel %vm3886, %v3873, %v3876
        %v3895 = vsel %vm3889, %v3882, 920167782
        %v3896 = vsel %vm3888, %v3879, %v3895
        %v3897 = vsel %vm3887, %v3894, %v3896
        %v3898 = vsel %vm3886, %v3876, %v3879
        %v3899 = vsel %vm3889, %v3885, 1326507024
        %v3900 = vsel %vm3888, %v3882, %v3899
        %v3901 = vsel %vm3887, %v3898, %v3900
        %v3902 = vshll.u32 %v3862, 8
        %v3903 = vand.u32 %v3902, 65535
        %v3904 = vshrl.u32 %v3902, 16
        %v3905 = vand.u32 %v3901, 65535
        %v3906 = vshrl.u32 %v3901, 16
        %v3907 = vmul.u32 %v3903, %v3905
        %v3908 = vmul.u32 %v3903, %v3906
        %v3909 = vmul.u32 %v3904, %v3905
        %v3910 = vmul.u32 %v3904, %v3906
        %v3911 = vshll.u32 %v3908, 16
        %v3912 = vshrl.u32 %v3908, 16
        %v3913 = vshll.u32 %v3909, 16
        %v3914 = vshrl.u32 %v3909, 16
        %vm3915 = vc.u32 %v3907, %v3911
        %v3916 = vsel %vm3915, 1, 0
        %v3917 = vadd.s32 %v3907, %v3911
        %v3918 = vadd.s32 %v3910, %v3916
        %vm3919 = vc.u32 %v3917, %v3913
        %v3920 = vsel %vm3919, 1, 0
        %v3921 = vadd.s32 %v3917, %v3913
        %v3922 = vadd.s32 %v3918, %v3920
        %v3923 = vadd.s32 %v3922, %v3912
        %v3924 = vadd.s32 %v3923, %v3914
        %v3925 = vand.u32 %v3902, 65535
        %v3926 = vshrl.u32 %v3902, 16
        %v3927 = vand.u32 %v3897, 65535
        %v3928 = vshrl.u32 %v3897, 16
        %v3929 = vmul.u32 %v3925, %v3927
        %v3930 = vmul.u32 %v3925, %v3928
        %v3931 = vmul.u32 %v3926, %v3927
        %v3932 = vmul.u32 %v3926, %v3928
        %v3933 = vshll.u32 %v3930, 16
        %v3934 = vshrl.u32 %v3930, 16
        %v3935 = vshll.u32 %v3931, 16
        %v3936 = vshrl.u32 %v3931, 16
        %vm3937 = vc.u32 %v3929, %v3933
        %v3938 = vsel %vm3937, 1, 0
        %v3939 = vadd.s32 %v3929, %v3933
        %v3940 = vadd.s32 %v3932, %v3938
        %vm3941 = vc.u32 %v3939, %v3935
        %v3942 = vsel %vm3941, 1, 0
        %v3943 = vadd.s32 %v3939, %v3935
        %v3944 = vadd.s32 %v3940, %v3942
        %v3945 = vadd.s32 %v3944, %v3934
        %v3946 = vadd.s32 %v3945, %v3936
        %v3947 = vmul.u32 %v3902, %v3893
        %v3948 = vadd.s32 %v3924, %v3943
        %vm3949 = vc.u32 %v3924, %v3943
        %v3950 = vadd.s32 %v3946, 1
        %v3951 = vsel %vm3949, %v3950, %v3946
        %v3952 = vadd.s32 %v3947, %v3951
        %v3953 = vadd.s32 %v3952, 536870912
        %v3954 = vshrl.u32 %v3953, 30
        %v3955 = vshll.u32 %v3954, 30
        %v3956 = vsub.s32 %v3952, %v3955
        %vm3957 = vcmp.lt.s32.totalorder %v3956, 0
        %v3958 = vsub.s32 0, %v3956
        %v3959 = vsel %vm3957, %v3958, %v3956
        %v3960 = vclz %v3959
        %v3961 = vsub.s32 %v3960, 2
        %vm3962 = vcmp.gt.s32.totalorder 0, %v3961
        %v3963 = vsel %vm3962, 0, %v3961
        %v3964 = vsub.s32 32, %v3963
        %v3965 = vshll.u32 %v3956, %v3963
        %v3966 = vshrl.u32 %v3948, %v3964
        %v3967 = vor.u32 %v3965, %v3966
        %v3968 = vsub.s32 4294967266, %v3963
        %v3969 = vadd.s32 %v3968, 127
        %v3970 = vshll.u32 %v3969, 23
        %v3971 = vor.u32 4788187, %v3970
        %v3972 = vand.u32 2147483647, %v3971
        %v3974 = vcvt.s32.f32 %v3967
        %v3975 = vmul.f32 %v3974, %v3972
        %v3976 = vxor.u32 %v3975, 2147483648
        %v3977 = vsel %vm3856, %v3976, %v3975
        %v3978 = vsub.s32 4, %v3954
        %v3979 = vsel %vm3856, %v3978, %v3954
        %v3980 = vsel %vm3855, %v254, %v3977
        %v3981 = vsel %vm3855, 0, %v3979
        %v3982 = vmul.f32 %v3980, %v3980
        %v3983 = vmul.f32 %v3982, -0.001358992
        %v3984 = vadd.f32 %v3983, 0.041655596
        %v3985 = vmul.f32 %v3982, %v3984
        %v3986 = vadd.f32 %v3985, -0.4999988
        %v3987 = vmul.f32 %v3982, %v3986
        %v3988 = vadd.f32 1.0, %v3987
        %v3989 = vmul.f32 %v3980, %v3980
        %v3990 = vmul.f32 %v3989, -0.00019511016
        %v3991 = vadd.f32 %v3990, 0.008332121
        %v3992 = vmul.f32 %v3989, %v3991
        %v3993 = vadd.f32 %v3992, -0.16666654
        %v3994 = vmul.f32 %v3989, %v3993
        %v3995 = vadd.f32 %v3994, 1.0
        %v3996 = vmul.f32 %v3995, %v3980
        %vm3997 = vweird.f32 %v254
        %v3998 = vand.u32 %v3981, 3
        %vm3999 = vcmp.lt.s32.totalorder %v3998, 2
        %vm4000 = vcmp.eq.s32.totalorder %v3998, 0
        %v4001 = vxor.u32 %v3996, 2147483648
        %v4002 = vsel %vm4000, %v3988, %v4001
        %vm4003 = vcmp.eq.s32.totalorder %v3998, 2
        %v4004 = vxor.u32 %v3988, 2147483648
        %v4005 = vsel %vm4003, %v4004, %v3996
        %v4006 = vsel %vm3999, %v4002, %v4005
        %v4007 = vsel %vm3997, nan, %v4006
        %v4008 = vand.u32 2147483647, %v257
        %vm4009 = vcmp.le.f32.partialorder %v4008, 0.7853982
        %vm4010 = vcmp.lt.s32.totalorder %v257, 0
        %v4011 = vand.u32 %v257, 2139095040
        %v4012 = vshrl.u32 %v4011, 23
        %v4013 = vsub.s32 %v4012, 127
        %v4014 = vand.u32 2147483647, %v257
        %v4015 = vand.u32 %v4014, 8388607
        %v4016 = vor.u32 %v4015, 8388608
        %v4017 = vsub.s32 0, %v4016
        %v4018 = vadd.s32 %v4013, 1
        %vm4019 = vcmp.gt.s32.totalorder %v4018, 0
        %v4020 = vsel %vm4019, %v4018, 0
        %v4021 = vshrl.u32 %v4020, 5
        %v4022 = vand.u32 %v4020, 31
        %v4023 = vsub.s32 32, %v4022
        %v4024 = vshrl.u32 683565275, %v4023
        %v4025 = vshll.u32 683565275, %v4022
        %v4026 = vshrl.u32 2475754826, %v4023
        %v4027 = vor.u32 %v4025, %v4026
        %v4028 = vshll.u32 2475754826, %v4022
        %v4029 = vshrl.u32 2131351028, %v4023
        %v4030 = vor.u32 %v4028, %v4029
        %v4031 = vshll.u32 2131351028, %v4022
        %v4032 = vshrl.u32 2102212464, %v4023
        %v4033 = vor.u32 %v4031, %v4032
        %v4034 = vshll.u32 2102212464, %v4022
        %v4035 = vshrl.u32 920167782, %v4023
        %v4036 = vor.u32 %v4034, %v4035
        %v4037 = vshll.u32 920167782, %v4022
        %v4038 = vshrl.u32 1326507024, %v4023
        %v4039 = vor.u32 %v4037, %v4038
        %vm4040 = vcmp.lt.s32.totalorder %v4021, 1
        %vm4041 = vcmp.lt.s32.totalorder %v4021, 2
        %vm4042 = vcmp.lt.s32.totalorder %v4021, 3
        %vm4043 = vcmp.lt.s32.totalorder %v4021, 4
        %v4044 = vsel %vm4040, %v4024, %v4027
        %v4045 = vsel %vm4043, %v4033, 2102212464
        %v4046 = vsel %vm4042, %v4030, %v4045
        %v4047 = vsel %vm4041, %v4044, %v4046
        %v4048 = vsel %vm4040, %v4027, %v4030
        %v4049 = vsel %vm4043, %v4036, 920167782
        %v4050 = vsel %vm4042, %v4033, %v4049
        %v4051 = vsel %vm4041, %v4048, %v4050
        %v4052 = vsel %vm4040, %v4030, %v4033
        %v4053 = vsel %vm4043, %v4039, 1326507024
        %v4054 = vsel %vm4042, %v4036, %v4053
        %v4055 = vsel %vm4041, %v4052, %v4054
        %v4056 = vshll.u32 %v4016, 8
        %v4057 = vand.u32 %v4056, 65535
        %v4058 = vshrl.u32 %v4056, 16
        %v4059 = vand.u32 %v4055, 65535
        %v4060 = vshrl.u32 %v4055, 16
        %v4061 = vmul.u32 %v4057, %v4059
        %v4062 = vmul.u32 %v4057, %v4060
        %v4063 = vmul.u32 %v4058, %v4059
        %v4064 = vmul.u32 %v4058, %v4060
        %v4065 = vshll.u32 %v4062, 16
        %v4066 = vshrl.u32 %v4062, 16
        %v4067 = vshll.u32 %v4063, 16
        %v4068 = vshrl.u32 %v4063, 16
        %vm4069 = vc.u32 %v4061, %v4065
        %v4070 = vsel %vm4069, 1, 0
        %v4071 = vadd.s32 %v4061, %v4065
        %v4072 = vadd.s32 %v4064, %v4070
        %vm4073 = vc.u32 %v4071, %v4067
        %v4074 = vsel %vm4073, 1, 0
        %v4075 = vadd.s32 %v4071, %v4067
        %v4076 = vadd.s32 %v4072, %v4074
        %v4077 = vadd.s32 %v4076, %v4066
        %v4078 = vadd.s32 %v4077, %v4068
        %v4079 = vand.u32 %v4056, 65535
        %v4080 = vshrl.u32 %v4056, 16
        %v4081 = vand.u32 %v4051, 65535
        %v4082 = vshrl.u32 %v4051, 16
        %v4083 = vmul.u32 %v4079, %v4081
        %v4084 = vmul.u32 %v4079, %v4082
        %v4085 = vmul.u32 %v4080, %v4081
        %v4086 = vmul.u32 %v4080, %v4082
        %v4087 = vshll.u32 %v4084, 16
        %v4088 = vshrl.u32 %v4084, 16
        %v4089 = vshll.u32 %v4085, 16
        %v4090 = vshrl.u32 %v4085, 16
        %vm4091 = vc.u32 %v4083, %v4087
        %v4092 = vsel %vm4091, 1, 0
        %v4093 = vadd.s32 %v4083, %v4087
        %v4094 = vadd.s32 %v4086, %v4092
        %vm4095 = vc.u32 %v4093, %v4089
        %v4096 = vsel %vm4095, 1, 0
        %v4097 = vadd.s32 %v4093, %v4089
        %v4098 = vadd.s32 %v4094, %v4096
        %v4099 = vadd.s32 %v4098, %v4088
        %v4100 = vadd.s32 %v4099, %v4090
        %v4101 = vmul.u32 %v4056, %v4047
        %v4102 = vadd.s32 %v4078, %v4097
        %vm4103 = vc.u32 %v4078, %v4097
        %v4104 = vadd.s32 %v4100, 1
        %v4105 = vsel %vm4103, %v4104, %v4100
        %v4106 = vadd.s32 %v4101, %v4105
        %v4107 = vadd.s32 %v4106, 536870912
        %v4108 = vshrl.u32 %v4107, 30
        %v4109 = vshll.u32 %v4108, 30
        %v4110 = vsub.s32 %v4106, %v4109
        %vm4111 = vcmp.lt.s32.totalorder %v4110, 0
        %v4112 = vsub.s32 0, %v4110
        %v4113 = vsel %vm4111, %v4112, %v4110
        %v4114 = vclz %v4113
        %v4115 = vsub.s32 %v4114, 2
        %vm4116 = vcmp.gt.s32.totalorder 0, %v4115
        %v4117 = vsel %vm4116, 0, %v4115
        %v4118 = vsub.s32 32, %v4117
        %v4119 = vshll.u32 %v4110, %v4117
        %v4120 = vshrl.u32 %v4102, %v4118
        %v4121 = vor.u32 %v4119, %v4120
        %v4122 = vsub.s32 4294967266, %v4117
        %v4123 = vadd.s32 %v4122, 127
        %v4124 = vshll.u32 %v4123, 23
        %v4125 = vor.u32 4788187, %v4124
        %v4126 = vand.u32 2147483647, %v4125
        %v4128 = vcvt.s32.f32 %v4121
        %v4129 = vmul.f32 %v4128, %v4126
        %v4130 = vxor.u32 %v4129, 2147483648
        %v4131 = vsel %vm4010, %v4130, %v4129
        %v4132 = vsub.s32 4, %v4108
        %v4133 = vsel %vm4010, %v4132, %v4108
        %v4134 = vsel %vm4009, %v257, %v4131
        %v4135 = vsel %vm4009, 0, %v4133
        %v4136 = vmul.f32 %v4134, %v4134
        %v4137 = vmul.f32 %v4136, -0.001358992
        %v4138 = vadd.f32 %v4137, 0.041655596
        %v4139 = vmul.f32 %v4136, %v4138
        %v4140 = vadd.f32 %v4139, -0.4999988
        %v4141 = vmul.f32 %v4136, %v4140
        %v4142 = vadd.f32 1.0, %v4141
        %v4143 = vmul.f32 %v4134, %v4134
        %v4144 = vmul.f32 %v4143, -0.00019511016
        %v4145 = vadd.f32 %v4144, 0.008332121
        %v4146 = vmul.f32 %v4143, %v4145
        %v4147 = vadd.f32 %v4146, -0.16666654
        %v4148 = vmul.f32 %v4143, %v4147
        %v4149 = vadd.f32 %v4148, 1.0
        %v4150 = vmul.f32 %v4149, %v4134
        %vm4151 = vweird.f32 %v257
        %v4152 = vand.u32 %v4135, 3
        %vm4153 = vcmp.lt.s32.totalorder %v4152, 2
        %vm4154 = vcmp.eq.s32.totalorder %v4152, 0
        %v4155 = vxor.u32 %v4150, 2147483648
        %v4156 = vsel %vm4154, %v4142, %v4155
        %vm4157 = vcmp.eq.s32.totalorder %v4152, 2
        %v4158 = vxor.u32 %v4142, 2147483648
        %v4159 = vsel %vm4157, %v4158, %v4150
        %v4160 = vsel %vm4153, %v4156, %v4159
        %v4161 = vsel %vm4151, nan, %v4160
        %v4162 = vand.u32 2147483647, %v260
        %vm4163 = vcmp.le.f32.partialorder %v4162, 0.7853982
        %vm4164 = vcmp.lt.s32.totalorder %v260, 0
        %v4165 = vand.u32 %v260, 2139095040
        %v4166 = vshrl.u32 %v4165, 23
        %v4167 = vsub.s32 %v4166, 127
        %v4168 = vand.u32 2147483647, %v260
        %v4169 = vand.u32 %v4168, 8388607
        %v4170 = vor.u32 %v4169, 8388608
        %v4171 = vsub.s32 0, %v4170
        %v4172 = vadd.s32 %v4167, 1
        %vm4173 = vcmp.gt.s32.totalorder %v4172, 0
        %v4174 = vsel %vm4173, %v4172, 0
        %v4175 = vshrl.u32 %v4174, 5
        %v4176 = vand.u32 %v4174, 31
        %v4177 = vsub.s32 32, %v4176
        %v4178 = vshrl.u32 683565275, %v4177
        %v4179 = vshll.u32 683565275, %v4176
        %v4180 = vshrl.u32 2475754826, %v4177
        %v4181 = vor.u32 %v4179, %v4180
        %v4182 = vshll.u32 2475754826, %v4176
        %v4183 = vshrl.u32 2131351028, %v4177
        %v4184 = vor.u32 %v4182, %v4183
        %v4185 = vshll.u32 2131351028, %v4176
        %v4186 = vshrl.u32 2102212464, %v4177
        %v4187 = vor.u32 %v4185, %v4186
        %v4188 = vshll.u32 2102212464, %v4176
        %v4189 = vshrl.u32 920167782, %v4177
        %v4190 = vor.u32 %v4188, %v4189
        %v4191 = vshll.u32 920167782, %v4176
        %v4192 = vshrl.u32 1326507024, %v4177
        %v4193 = vor.u32 %v4191, %v4192
        %vm4194 = vcmp.lt.s32.totalorder %v4175, 1
        %vm4195 = vcmp.lt.s32.totalorder %v4175, 2
        %vm4196 = vcmp.lt.s32.totalorder %v4175, 3
        %vm4197 = vcmp.lt.s32.totalorder %v4175, 4
        %v4198 = vsel %vm4194, %v4178, %v4181
        %v4199 = vsel %vm4197, %v4187, 2102212464
        %v4200 = vsel %vm4196, %v4184, %v4199
        %v4201 = vsel %vm4195, %v4198, %v4200
        %v4202 = vsel %vm4194, %v4181, %v4184
        %v4203 = vsel %vm4197, %v4190, 920167782
        %v4204 = vsel %vm4196, %v4187, %v4203
        %v4205 = vsel %vm4195, %v4202, %v4204
        %v4206 = vsel %vm4194, %v4184, %v4187
        %v4207 = vsel %vm4197, %v4193, 1326507024
        %v4208 = vsel %vm4196, %v4190, %v4207
        %v4209 = vsel %vm4195, %v4206, %v4208
        %v4210 = vshll.u32 %v4170, 8
        %v4211 = vand.u32 %v4210, 65535
        %v4212 = vshrl.u32 %v4210, 16
        %v4213 = vand.u32 %v4209, 65535
        %v4214 = vshrl.u32 %v4209, 16
        %v4215 = vmul.u32 %v4211, %v4213
        %v4216 = vmul.u32 %v4211, %v4214
        %v4217 = vmul.u32 %v4212, %v4213
        %v4218 = vmul.u32 %v4212, %v4214
        %v4219 = vshll.u32 %v4216, 16
        %v4220 = vshrl.u32 %v4216, 16
        %v4221 = vshll.u32 %v4217, 16
        %v4222 = vshrl.u32 %v4217, 16
        %vm4223 = vc.u32 %v4215, %v4219
        %v4224 = vsel %vm4223, 1, 0
        %v4225 = vadd.s32 %v4215, %v4219
        %v4226 = vadd.s32 %v4218, %v4224
        %vm4227 = vc.u32 %v4225, %v4221
        %v4228 = vsel %vm4227, 1, 0
        %v4229 = vadd.s32 %v4225, %v4221
        %v4230 = vadd.s32 %v4226, %v4228
        %v4231 = vadd.s32 %v4230, %v4220
        %v4232 = vadd.s32 %v4231, %v4222
        %v4233 = vand.u32 %v4210, 65535
        %v4234 = vshrl.u32 %v4210, 16
        %v4235 = vand.u32 %v4205, 65535
        %v4236 = vshrl.u32 %v4205, 16
        %v4237 = vmul.u32 %v4233, %v4235
        %v4238 = vmul.u32 %v4233, %v4236
        %v4239 = vmul.u32 %v4234, %v4235
        %v4240 = vmul.u32 %v4234, %v4236
        %v4241 = vshll.u32 %v4238, 16
        %v4242 = vshrl.u32 %v4238, 16
        %v4243 = vshll.u32 %v4239, 16
        %v4244 = vshrl.u32 %v4239, 16
        %vm4245 = vc.u32 %v4237, %v4241
        %v4246 = vsel %vm4245, 1, 0
        %v4247 = vadd.s32 %v4237, %v4241
        %v4248 = vadd.s32 %v4240, %v4246
        %vm4249 = vc.u32 %v4247, %v4243
        %v4250 = vsel %vm4249, 1, 0
        %v4251 = vadd.s32 %v4247, %v4243
        %v4252 = vadd.s32 %v4248, %v4250
        %v4253 = vadd.s32 %v4252, %v4242
        %v4254 = vadd.s32 %v4253, %v4244
        %v4255 = vmul.u32 %v4210, %v4201
        %v4256 = vadd.s32 %v4232, %v4251
        %vm4257 = vc.u32 %v4232, %v4251
        %v4258 = vadd.s32 %v4254, 1
        %v4259 = vsel %vm4257, %v4258, %v4254
        %v4260 = vadd.s32 %v4255, %v4259
        %v4261 = vadd.s32 %v4260, 536870912
        %v4262 = vshrl.u32 %v4261, 30
        %v4263 = vshll.u32 %v4262, 30
        %v4264 = vsub.s32 %v4260, %v4263
        %vm4265 = vcmp.lt.s32.totalorder %v4264, 0
        %v4266 = vsub.s32 0, %v4264
        %v4267 = vsel %vm4265, %v4266, %v4264
        %v4268 = vclz %v4267
        %v4269 = vsub.s32 %v4268, 2
        %vm4270 = vcmp.gt.s32.totalorder 0, %v4269
        %v4271 = vsel %vm4270, 0, %v4269
        %v4272 = vsub.s32 32, %v4271
        %v4273 = vshll.u32 %v4264, %v4271
        %v4274 = vshrl.u32 %v4256, %v4272
        %v4275 = vor.u32 %v4273, %v4274
        %v4276 = vsub.s32 4294967266, %v4271
        %v4277 = vadd.s32 %v4276, 127
        %v4278 = vshll.u32 %v4277, 23
        %v4279 = vor.u32 4788187, %v4278
        %v4280 = vand.u32 2147483647, %v4279
        %v4282 = vcvt.s32.f32 %v4275
        %v4283 = vmul.f32 %v4282, %v4280
        %v4284 = vxor.u32 %v4283, 2147483648
        %v4285 = vsel %vm4164, %v4284, %v4283
        %v4286 = vsub.s32 4, %v4262
        %v4287 = vsel %vm4164, %v4286, %v4262
        %v4288 = vsel %vm4163, %v260, %v4285
        %v4289 = vsel %vm4163, 0, %v4287
        %v4290 = vmul.f32 %v4288, %v4288
        %v4291 = vmul.f32 %v4290, -0.001358992
        %v4292 = vadd.f32 %v4291, 0.041655596
        %v4293 = vmul.f32 %v4290, %v4292
        %v4294 = vadd.f32 %v4293, -0.4999988
        %v4295 = vmul.f32 %v4290, %v4294
        %v4296 = vadd.f32 1.0, %v4295
        %v4297 = vmul.f32 %v4288, %v4288
        %v4298 = vmul.f32 %v4297, -0.00019511016
        %v4299 = vadd.f32 %v4298, 0.008332121
        %v4300 = vmul.f32 %v4297, %v4299
        %v4301 = vadd.f32 %v4300, -0.16666654
        %v4302 = vmul.f32 %v4297, %v4301
        %v4303 = vadd.f32 %v4302, 1.0
        %v4304 = vmul.f32 %v4303, %v4288
        %vm4305 = vweird.f32 %v260
        %v4306 = vand.u32 %v4289, 3
        %vm4307 = vcmp.lt.s32.totalorder %v4306, 2
        %vm4308 = vcmp.eq.s32.totalorder %v4306, 0
        %v4309 = vxor.u32 %v4304, 2147483648
        %v4310 = vsel %vm4308, %v4296, %v4309
        %vm4311 = vcmp.eq.s32.totalorder %v4306, 2
        %v4312 = vxor.u32 %v4296, 2147483648
        %v4313 = vsel %vm4311, %v4312, %v4304
        %v4314 = vsel %vm4307, %v4310, %v4313
        %v4315 = vsel %vm4305, nan, %v4314
        %v4316 = vand.u32 2147483647, %v263
        %vm4317 = vcmp.le.f32.partialorder %v4316, 0.7853982
        %vm4318 = vcmp.lt.s32.totalorder %v263, 0
        %v4319 = vand.u32 %v263, 2139095040
        %v4320 = vshrl.u32 %v4319, 23
        %v4321 = vsub.s32 %v4320, 127
        %v4322 = vand.u32 2147483647, %v263
        %v4323 = vand.u32 %v4322, 8388607
        %v4324 = vor.u32 %v4323, 8388608
        %v4325 = vsub.s32 0, %v4324
        %v4326 = vadd.s32 %v4321, 1
        %vm4327 = vcmp.gt.s32.totalorder %v4326, 0
        %v4328 = vsel %vm4327, %v4326, 0
        %v4329 = vshrl.u32 %v4328, 5
        %v4330 = vand.u32 %v4328, 31
        %v4331 = vsub.s32 32, %v4330
        %v4332 = vshrl.u32 683565275, %v4331
        %v4333 = vshll.u32 683565275, %v4330
        %v4334 = vshrl.u32 2475754826, %v4331
        %v4335 = vor.u32 %v4333, %v4334
        %v4336 = vshll.u32 2475754826, %v4330
        %v4337 = vshrl.u32 2131351028, %v4331
        %v4338 = vor.u32 %v4336, %v4337
        %v4339 = vshll.u32 2131351028, %v4330
        %v4340 = vshrl.u32 2102212464, %v4331
        %v4341 = vor.u32 %v4339, %v4340
        %v4342 = vshll.u32 2102212464, %v4330
        %v4343 = vshrl.u32 920167782, %v4331
        %v4344 = vor.u32 %v4342, %v4343
        %v4345 = vshll.u32 920167782, %v4330
        %v4346 = vshrl.u32 1326507024, %v4331
        %v4347 = vor.u32 %v4345, %v4346
        %vm4348 = vcmp.lt.s32.totalorder %v4329, 1
        %vm4349 = vcmp.lt.s32.totalorder %v4329, 2
        %vm4350 = vcmp.lt.s32.totalorder %v4329, 3
        %vm4351 = vcmp.lt.s32.totalorder %v4329, 4
        %v4352 = vsel %vm4348, %v4332, %v4335
        %v4353 = vsel %vm4351, %v4341, 2102212464
        %v4354 = vsel %vm4350, %v4338, %v4353
        %v4355 = vsel %vm4349, %v4352, %v4354
        %v4356 = vsel %vm4348, %v4335, %v4338
        %v4357 = vsel %vm4351, %v4344, 920167782
        %v4358 = vsel %vm4350, %v4341, %v4357
        %v4359 = vsel %vm4349, %v4356, %v4358
        %v4360 = vsel %vm4348, %v4338, %v4341
        %v4361 = vsel %vm4351, %v4347, 1326507024
        %v4362 = vsel %vm4350, %v4344, %v4361
        %v4363 = vsel %vm4349, %v4360, %v4362
        %v4364 = vshll.u32 %v4324, 8
        %v4365 = vand.u32 %v4364, 65535
        %v4366 = vshrl.u32 %v4364, 16
        %v4367 = vand.u32 %v4363, 65535
        %v4368 = vshrl.u32 %v4363, 16
        %v4369 = vmul.u32 %v4365, %v4367
        %v4370 = vmul.u32 %v4365, %v4368
        %v4371 = vmul.u32 %v4366, %v4367
        %v4372 = vmul.u32 %v4366, %v4368
        %v4373 = vshll.u32 %v4370, 16
        %v4374 = vshrl.u32 %v4370, 16
        %v4375 = vshll.u32 %v4371, 16
        %v4376 = vshrl.u32 %v4371, 16
        %vm4377 = vc.u32 %v4369, %v4373
        %v4378 = vsel %vm4377, 1, 0
        %v4379 = vadd.s32 %v4369, %v4373
        %v4380 = vadd.s32 %v4372, %v4378
        %vm4381 = vc.u32 %v4379, %v4375
        %v4382 = vsel %vm4381, 1, 0
        %v4383 = vadd.s32 %v4379, %v4375
        %v4384 = vadd.s32 %v4380, %v4382
        %v4385 = vadd.s32 %v4384, %v4374
        %v4386 = vadd.s32 %v4385, %v4376
        %v4387 = vand.u32 %v4364, 65535
        %v4388 = vshrl.u32 %v4364, 16
        %v4389 = vand.u32 %v4359, 65535
        %v4390 = vshrl.u32 %v4359, 16
        %v4391 = vmul.u32 %v4387, %v4389
        %v4392 = vmul.u32 %v4387, %v4390
        %v4393 = vmul.u32 %v4388, %v4389
        %v4394 = vmul.u32 %v4388, %v4390
        %v4395 = vshll.u32 %v4392, 16
        %v4396 = vshrl.u32 %v4392, 16
        %v4397 = vshll.u32 %v4393, 16
        %v4398 = vshrl.u32 %v4393, 16
        %vm4399 = vc.u32 %v4391, %v4395
        %v4400 = vsel %vm4399, 1, 0
        %v4401 = vadd.s32 %v4391, %v4395
        %v4402 = vadd.s32 %v4394, %v4400
        %vm4403 = vc.u32 %v4401, %v4397
        %v4404 = vsel %vm4403, 1, 0
        %v4405 = vadd.s32 %v4401, %v4397
        %v4406 = vadd.s32 %v4402, %v4404
        %v4407 = vadd.s32 %v4406, %v4396
        %v4408 = vadd.s32 %v4407, %v4398
        %v4409 = vmul.u32 %v4364, %v4355
        %v4410 = vadd.s32 %v4386, %v4405
        %vm4411 = vc.u32 %v4386, %v4405
        %v4412 = vadd.s32 %v4408, 1
        %v4413 = vsel %vm4411, %v4412, %v4408
        %v4414 = vadd.s32 %v4409, %v4413
        %v4415 = vadd.s32 %v4414, 536870912
        %v4416 = vshrl.u32 %v4415, 30
        %v4417 = vshll.u32 %v4416, 30
        %v4418 = vsub.s32 %v4414, %v4417
        %vm4419 = vcmp.lt.s32.totalorder %v4418, 0
        %v4420 = vsub.s32 0, %v4418
        %v4421 = vsel %vm4419, %v4420, %v4418
        %v4422 = vclz %v4421
        %v4423 = vsub.s32 %v4422, 2
        %vm4424 = vcmp.gt.s32.totalorder 0, %v4423
        %v4425 = vsel %vm4424, 0, %v4423
        %v4426 = vsub.s32 32, %v4425
        %v4427 = vshll.u32 %v4418, %v4425
        %v4428 = vshrl.u32 %v4410, %v4426
        %v4429 = vor.u32 %v4427, %v4428
        %v4430 = vsub.s32 4294967266, %v4425
        %v4431 = vadd.s32 %v4430, 127
        %v4432 = vshll.u32 %v4431, 23
        %v4433 = vor.u32 4788187, %v4432
        %v4434 = vand.u32 2147483647, %v4433
        %v4436 = vcvt.s32.f32 %v4429
        %v4437 = vmul.f32 %v4436, %v4434
        %v4438 = vxor.u32 %v4437, 2147483648
        %v4439 = vsel %vm4318, %v4438, %v4437
        %v4440 = vsub.s32 4, %v4416
        %v4441 = vsel %vm4318, %v4440, %v4416
        %v4442 = vsel %vm4317, %v263, %v4439
        %v4443 = vsel %vm4317, 0, %v4441
        %v4444 = vmul.f32 %v4442, %v4442
        %v4445 = vmul.f32 %v4444, -0.001358992
        %v4446 = vadd.f32 %v4445, 0.041655596
        %v4447 = vmul.f32 %v4444, %v4446
        %v4448 = vadd.f32 %v4447, -0.4999988
        %v4449 = vmul.f32 %v4444, %v4448
        %v4450 = vadd.f32 1.0, %v4449
        %v4451 = vmul.f32 %v4442, %v4442
        %v4452 = vmul.f32 %v4451, -0.00019511016
        %v4453 = vadd.f32 %v4452, 0.008332121
        %v4454 = vmul.f32 %v4451, %v4453
        %v4455 = vadd.f32 %v4454, -0.16666654
        %v4456 = vmul.f32 %v4451, %v4455
        %v4457 = vadd.f32 %v4456, 1.0
        %v4458 = vmul.f32 %v4457, %v4442
        %vm4459 = vweird.f32 %v263
        %v4460 = vand.u32 %v4443, 3
        %vm4461 = vcmp.lt.s32.totalorder %v4460, 2
        %vm4462 = vcmp.eq.s32.totalorder %v4460, 0
        %v4463 = vxor.u32 %v4458, 2147483648
        %v4464 = vsel %vm4462, %v4450, %v4463
        %vm4465 = vcmp.eq.s32.totalorder %v4460, 2
        %v4466 = vxor.u32 %v4450, 2147483648
        %v4467 = vsel %vm4465, %v4466, %v4458
        %v4468 = vsel %vm4461, %v4464, %v4467
        %v4469 = vsel %vm4459, nan, %v4468
        %v4470 = vand.u32 2147483647, %v266
        %vm4471 = vcmp.le.f32.partialorder %v4470, 0.7853982
        %vm4472 = vcmp.lt.s32.totalorder %v266, 0
        %v4473 = vand.u32 %v266, 2139095040
        %v4474 = vshrl.u32 %v4473, 23
        %v4475 = vsub.s32 %v4474, 127
        %v4476 = vand.u32 2147483647, %v266
        %v4477 = vand.u32 %v4476, 8388607
        %v4478 = vor.u32 %v4477, 8388608
        %v4479 = vsub.s32 0, %v4478
        %v4480 = vadd.s32 %v4475, 1
        %vm4481 = vcmp.gt.s32.totalorder %v4480, 0
        %v4482 = vsel %vm4481, %v4480, 0
        %v4483 = vshrl.u32 %v4482, 5
        %v4484 = vand.u32 %v4482, 31
        %v4485 = vsub.s32 32, %v4484
        %v4486 = vshrl.u32 683565275, %v4485
        %v4487 = vshll.u32 683565275, %v4484
        %v4488 = vshrl.u32 2475754826, %v4485
        %v4489 = vor.u32 %v4487, %v4488
        %v4490 = vshll.u32 2475754826, %v4484
        %v4491 = vshrl.u32 2131351028, %v4485
        %v4492 = vor.u32 %v4490, %v4491
        %v4493 = vshll.u32 2131351028, %v4484
        %v4494 = vshrl.u32 2102212464, %v4485
        %v4495 = vor.u32 %v4493, %v4494
        %v4496 = vshll.u32 2102212464, %v4484
        %v4497 = vshrl.u32 920167782, %v4485
        %v4498 = vor.u32 %v4496, %v4497
        %v4499 = vshll.u32 920167782, %v4484
        %v4500 = vshrl.u32 1326507024, %v4485
        %v4501 = vor.u32 %v4499, %v4500
        %vm4502 = vcmp.lt.s32.totalorder %v4483, 1
        %vm4503 = vcmp.lt.s32.totalorder %v4483, 2
        %vm4504 = vcmp.lt.s32.totalorder %v4483, 3
        %vm4505 = vcmp.lt.s32.totalorder %v4483, 4
        %v4506 = vsel %vm4502, %v4486, %v4489
        %v4507 = vsel %vm4505, %v4495, 2102212464
        %v4508 = vsel %vm4504, %v4492, %v4507
        %v4509 = vsel %vm4503, %v4506, %v4508
        %v4510 = vsel %vm4502, %v4489, %v4492
        %v4511 = vsel %vm4505, %v4498, 920167782
        %v4512 = vsel %vm4504, %v4495, %v4511
        %v4513 = vsel %vm4503, %v4510, %v4512
        %v4514 = vsel %vm4502, %v4492, %v4495
        %v4515 = vsel %vm4505, %v4501, 1326507024
        %v4516 = vsel %vm4504, %v4498, %v4515
        %v4517 = vsel %vm4503, %v4514, %v4516
        %v4518 = vshll.u32 %v4478, 8
        %v4519 = vand.u32 %v4518, 65535
        %v4520 = vshrl.u32 %v4518, 16
        %v4521 = vand.u32 %v4517, 65535
        %v4522 = vshrl.u32 %v4517, 16
        %v4523 = vmul.u32 %v4519, %v4521
        %v4524 = vmul.u32 %v4519, %v4522
        %v4525 = vmul.u32 %v4520, %v4521
        %v4526 = vmul.u32 %v4520, %v4522
        %v4527 = vshll.u32 %v4524, 16
        %v4528 = vshrl.u32 %v4524, 16
        %v4529 = vshll.u32 %v4525, 16
        %v4530 = vshrl.u32 %v4525, 16
        %vm4531 = vc.u32 %v4523, %v4527
        %v4532 = vsel %vm4531, 1, 0
        %v4533 = vadd.s32 %v4523, %v4527
        %v4534 = vadd.s32 %v4526, %v4532
        %vm4535 = vc.u32 %v4533, %v4529
        %v4536 = vsel %vm4535, 1, 0
        %v4537 = vadd.s32 %v4533, %v4529
        %v4538 = vadd.s32 %v4534, %v4536
        %v4539 = vadd.s32 %v4538, %v4528
        %v4540 = vadd.s32 %v4539, %v4530
        %v4541 = vand.u32 %v4518, 65535
        %v4542 = vshrl.u32 %v4518, 16
        %v4543 = vand.u32 %v4513, 65535
        %v4544 = vshrl.u32 %v4513, 16
        %v4545 = vmul.u32 %v4541, %v4543
        %v4546 = vmul.u32 %v4541, %v4544
        %v4547 = vmul.u32 %v4542, %v4543
        %v4548 = vmul.u32 %v4542, %v4544
        %v4549 = vshll.u32 %v4546, 16
        %v4550 = vshrl.u32 %v4546, 16
        %v4551 = vshll.u32 %v4547, 16
        %v4552 = vshrl.u32 %v4547, 16
        %vm4553 = vc.u32 %v4545, %v4549
        %v4554 = vsel %vm4553, 1, 0
        %v4555 = vadd.s32 %v4545, %v4549
        %v4556 = vadd.s32 %v4548, %v4554
        %vm4557 = vc.u32 %v4555, %v4551
        %v4558 = vsel %vm4557, 1, 0
        %v4559 = vadd.s32 %v4555, %v4551
        %v4560 = vadd.s32 %v4556, %v4558
        %v4561 = vadd.s32 %v4560, %v4550
        %v4562 = vadd.s32 %v4561, %v4552
        %v4563 = vmul.u32 %v4518, %v4509
        %v4564 = vadd.s32 %v4540, %v4559
        %vm4565 = vc.u32 %v4540, %v4559
        %v4566 = vadd.s32 %v4562, 1
        %v4567 = vsel %vm4565, %v4566, %v4562
        %v4568 = vadd.s32 %v4563, %v4567
        %v4569 = vadd.s32 %v4568, 536870912
        %v4570 = vshrl.u32 %v4569, 30
        %v4571 = vshll.u32 %v4570, 30
        %v4572 = vsub.s32 %v4568, %v4571
        %vm4573 = vcmp.lt.s32.totalorder %v4572, 0
        %v4574 = vsub.s32 0, %v4572
        %v4575 = vsel %vm4573, %v4574, %v4572
        %v4576 = vclz %v4575
        %v4577 = vsub.s32 %v4576, 2
        %vm4578 = vcmp.gt.s32.totalorder 0, %v4577
        %v4579 = vsel %vm4578, 0, %v4577
        %v4580 = vsub.s32 32, %v4579
        %v4581 = vshll.u32 %v4572, %v4579
        %v4582 = vshrl.u32 %v4564, %v4580
        %v4583 = vor.u32 %v4581, %v4582
        %v4584 = vsub.s32 4294967266, %v4579
        %v4585 = vadd.s32 %v4584, 127
        %v4586 = vshll.u32 %v4585, 23
        %v4587 = vor.u32 4788187, %v4586
        %v4588 = vand.u32 2147483647, %v4587
        %v4590 = vcvt.s32.f32 %v4583
        %v4591 = vmul.f32 %v4590, %v4588
        %v4592 = vxor.u32 %v4591, 2147483648
        %v4593 = vsel %vm4472, %v4592, %v4591
        %v4594 = vsub.s32 4, %v4570
        %v4595 = vsel %vm4472, %v4594, %v4570
        %v4596 = vsel %vm4471, %v266, %v4593
        %v4597 = vsel %vm4471, 0, %v4595
        %v4598 = vmul.f32 %v4596, %v4596
        %v4599 = vmul.f32 %v4598, -0.001358992
        %v4600 = vadd.f32 %v4599, 0.041655596
        %v4601 = vmul.f32 %v4598, %v4600
        %v4602 = vadd.f32 %v4601, -0.4999988
        %v4603 = vmul.f32 %v4598, %v4602
        %v4604 = vadd.f32 1.0, %v4603
        %v4605 = vmul.f32 %v4596, %v4596
        %v4606 = vmul.f32 %v4605, -0.00019511016
        %v4607 = vadd.f32 %v4606, 0.008332121
        %v4608 = vmul.f32 %v4605, %v4607
        %v4609 = vadd.f32 %v4608, -0.16666654
        %v4610 = vmul.f32 %v4605, %v4609
        %v4611 = vadd.f32 %v4610, 1.0
        %v4612 = vmul.f32 %v4611, %v4596
        %vm4613 = vweird.f32 %v266
        %v4614 = vand.u32 %v4597, 3
        %vm4615 = vcmp.lt.s32.totalorder %v4614, 2
        %vm4616 = vcmp.eq.s32.totalorder %v4614, 0
        %v4617 = vxor.u32 %v4612, 2147483648
        %v4618 = vsel %vm4616, %v4604, %v4617
        %vm4619 = vcmp.eq.s32.totalorder %v4614, 2
        %v4620 = vxor.u32 %v4604, 2147483648
        %v4621 = vsel %vm4619, %v4620, %v4612
        %v4622 = vsel %vm4615, %v4618, %v4621
        %v4623 = vsel %vm4613, nan, %v4622
        %v4624 = vand.u32 2147483647, %v269
        %vm4625 = vcmp.le.f32.partialorder %v4624, 0.7853982
        %vm4626 = vcmp.lt.s32.totalorder %v269, 0
        %v4627 = vand.u32 %v269, 2139095040
        %v4628 = vshrl.u32 %v4627, 23
        %v4629 = vsub.s32 %v4628, 127
        %v4630 = vand.u32 2147483647, %v269
        %v4631 = vand.u32 %v4630, 8388607
        %v4632 = vor.u32 %v4631, 8388608
        %v4633 = vsub.s32 0, %v4632
        %v4634 = vadd.s32 %v4629, 1
        %vm4635 = vcmp.gt.s32.totalorder %v4634, 0
        %v4636 = vsel %vm4635, %v4634, 0
        %v4637 = vshrl.u32 %v4636, 5
        %v4638 = vand.u32 %v4636, 31
        %v4639 = vsub.s32 32, %v4638
        %v4640 = vshrl.u32 683565275, %v4639
        %v4641 = vshll.u32 683565275, %v4638
        %v4642 = vshrl.u32 2475754826, %v4639
        %v4643 = vor.u32 %v4641, %v4642
        %v4644 = vshll.u32 2475754826, %v4638
        %v4645 = vshrl.u32 2131351028, %v4639
        %v4646 = vor.u32 %v4644, %v4645
        %v4647 = vshll.u32 2131351028, %v4638
        %v4648 = vshrl.u32 2102212464, %v4639
        %v4649 = vor.u32 %v4647, %v4648
        %v4650 = vshll.u32 2102212464, %v4638
        %v4651 = vshrl.u32 920167782, %v4639
        %v4652 = vor.u32 %v4650, %v4651
        %v4653 = vshll.u32 920167782, %v4638
        %v4654 = vshrl.u32 1326507024, %v4639
        %v4655 = vor.u32 %v4653, %v4654
        %vm4656 = vcmp.lt.s32.totalorder %v4637, 1
        %vm4657 = vcmp.lt.s32.totalorder %v4637, 2
        %vm4658 = vcmp.lt.s32.totalorder %v4637, 3
        %vm4659 = vcmp.lt.s32.totalorder %v4637, 4
        %v4660 = vsel %vm4656, %v4640, %v4643
        %v4661 = vsel %vm4659, %v4649, 2102212464
        %v4662 = vsel %vm4658, %v4646, %v4661
        %v4663 = vsel %vm4657, %v4660, %v4662
        %v4664 = vsel %vm4656, %v4643, %v4646
        %v4665 = vsel %vm4659, %v4652, 920167782
        %v4666 = vsel %vm4658, %v4649, %v4665
        %v4667 = vsel %vm4657, %v4664, %v4666
        %v4668 = vsel %vm4656, %v4646, %v4649
        %v4669 = vsel %vm4659, %v4655, 1326507024
        %v4670 = vsel %vm4658, %v4652, %v4669
        %v4671 = vsel %vm4657, %v4668, %v4670
        %v4672 = vshll.u32 %v4632, 8
        %v4673 = vand.u32 %v4672, 65535
        %v4674 = vshrl.u32 %v4672, 16
        %v4675 = vand.u32 %v4671, 65535
        %v4676 = vshrl.u32 %v4671, 16
        %v4677 = vmul.u32 %v4673, %v4675
        %v4678 = vmul.u32 %v4673, %v4676
        %v4679 = vmul.u32 %v4674, %v4675
        %v4680 = vmul.u32 %v4674, %v4676
        %v4681 = vshll.u32 %v4678, 16
        %v4682 = vshrl.u32 %v4678, 16
        %v4683 = vshll.u32 %v4679, 16
        %v4684 = vshrl.u32 %v4679, 16
        %vm4685 = vc.u32 %v4677, %v4681
        %v4686 = vsel %vm4685, 1, 0
        %v4687 = vadd.s32 %v4677, %v4681
        %v4688 = vadd.s32 %v4680, %v4686
        %vm4689 = vc.u32 %v4687, %v4683
        %v4690 = vsel %vm4689, 1, 0
        %v4691 = vadd.s32 %v4687, %v4683
        %v4692 = vadd.s32 %v4688, %v4690
        %v4693 = vadd.s32 %v4692, %v4682
        %v4694 = vadd.s32 %v4693, %v4684
        %v4695 = vand.u32 %v4672, 65535
        %v4696 = vshrl.u32 %v4672, 16
        %v4697 = vand.u32 %v4667, 65535
        %v4698 = vshrl.u32 %v4667, 16
        %v4699 = vmul.u32 %v4695, %v4697
        %v4700 = vmul.u32 %v4695, %v4698
        %v4701 = vmul.u32 %v4696, %v4697
        %v4702 = vmul.u32 %v4696, %v4698
        %v4703 = vshll.u32 %v4700, 16
        %v4704 = vshrl.u32 %v4700, 16
        %v4705 = vshll.u32 %v4701, 16
        %v4706 = vshrl.u32 %v4701, 16
        %vm4707 = vc.u32 %v4699, %v4703
        %v4708 = vsel %vm4707, 1, 0
        %v4709 = vadd.s32 %v4699, %v4703
        %v4710 = vadd.s32 %v4702, %v4708
        %vm4711 = vc.u32 %v4709, %v4705
        %v4712 = vsel %vm4711, 1, 0
        %v4713 = vadd.s32 %v4709, %v4705
        %v4714 = vadd.s32 %v4710, %v4712
        %v4715 = vadd.s32 %v4714, %v4704
        %v4716 = vadd.s32 %v4715, %v4706
        %v4717 = vmul.u32 %v4672, %v4663
        %v4718 = vadd.s32 %v4694, %v4713
        %vm4719 = vc.u32 %v4694, %v4713
        %v4720 = vadd.s32 %v4716, 1
        %v4721 = vsel %vm4719, %v4720, %v4716
        %v4722 = vadd.s32 %v4717, %v4721
        %v4723 = vadd.s32 %v4722, 536870912
        %v4724 = vshrl.u32 %v4723, 30
        %v4725 = vshll.u32 %v4724, 30
        %v4726 = vsub.s32 %v4722, %v4725
        %vm4727 = vcmp.lt.s32.totalorder %v4726, 0
        %v4728 = vsub.s32 0, %v4726
        %v4729 = vsel %vm4727, %v4728, %v4726
        %v4730 = vclz %v4729
        %v4731 = vsub.s32 %v4730, 2
        %vm4732 = vcmp.gt.s32.totalorder 0, %v4731
        %v4733 = vsel %vm4732, 0, %v4731
        %v4734 = vsub.s32 32, %v4733
        %v4735 = vshll.u32 %v4726, %v4733
        %v4736 = vshrl.u32 %v4718, %v4734
        %v4737 = vor.u32 %v4735, %v4736
        %v4738 = vsub.s32 4294967266, %v4733
        %v4739 = vadd.s32 %v4738, 127
        %v4740 = vshll.u32 %v4739, 23
        %v4741 = vor.u32 4788187, %v4740
        %v4742 = vand.u32 2147483647, %v4741
        %v4744 = vcvt.s32.f32 %v4737
        %v4745 = vmul.f32 %v4744, %v4742
        %v4746 = vxor.u32 %v4745, 2147483648
        %v4747 = vsel %vm4626, %v4746, %v4745
        %v4748 = vsub.s32 4, %v4724
        %v4749 = vsel %vm4626, %v4748, %v4724
        %v4750 = vsel %vm4625, %v269, %v4747
        %v4751 = vsel %vm4625, 0, %v4749
        %v4752 = vmul.f32 %v4750, %v4750
        %v4753 = vmul.f32 %v4752, -0.001358992
        %v4754 = vadd.f32 %v4753, 0.041655596
        %v4755 = vmul.f32 %v4752, %v4754
        %v4756 = vadd.f32 %v4755, -0.4999988
        %v4757 = vmul.f32 %v4752, %v4756
        %v4758 = vadd.f32 1.0, %v4757
        %v4759 = vmul.f32 %v4750, %v4750
        %v4760 = vmul.f32 %v4759, -0.00019511016
        %v4761 = vadd.f32 %v4760, 0.008332121
        %v4762 = vmul.f32 %v4759, %v4761
        %v4763 = vadd.f32 %v4762, -0.16666654
        %v4764 = vmul.f32 %v4759, %v4763
        %v4765 = vadd.f32 %v4764, 1.0
        %v4766 = vmul.f32 %v4765, %v4750
        %vm4767 = vweird.f32 %v269
        %v4768 = vand.u32 %v4751, 3
        %vm4769 = vcmp.lt.s32.totalorder %v4768, 2
        %vm4770 = vcmp.eq.s32.totalorder %v4768, 0
        %v4771 = vxor.u32 %v4766, 2147483648
        %v4772 = vsel %vm4770, %v4758, %v4771
        %vm4773 = vcmp.eq.s32.totalorder %v4768, 2
        %v4774 = vxor.u32 %v4758, 2147483648
        %v4775 = vsel %vm4773, %v4774, %v4766
        %v4776 = vsel %vm4769, %v4772, %v4775
        %v4777 = vsel %vm4767, nan, %v4776
        %v4778 = vand.u32 2147483647, %v272
        %vm4779 = vcmp.le.f32.partialorder %v4778, 0.7853982
        %vm4780 = vcmp.lt.s32.totalorder %v272, 0
        %v4781 = vand.u32 %v272, 2139095040
        %v4782 = vshrl.u32 %v4781, 23
        %v4783 = vsub.s32 %v4782, 127
        %v4784 = vand.u32 2147483647, %v272
        %v4785 = vand.u32 %v4784, 8388607
        %v4786 = vor.u32 %v4785, 8388608
        %v4787 = vsub.s32 0, %v4786
        %v4788 = vadd.s32 %v4783, 1
        %vm4789 = vcmp.gt.s32.totalorder %v4788, 0
        %v4790 = vsel %vm4789, %v4788, 0
        %v4791 = vshrl.u32 %v4790, 5
        %v4792 = vand.u32 %v4790, 31
        %v4793 = vsub.s32 32, %v4792
        %v4794 = vshrl.u32 683565275, %v4793
        %v4795 = vshll.u32 683565275, %v4792
        %v4796 = vshrl.u32 2475754826, %v4793
        %v4797 = vor.u32 %v4795, %v4796
        %v4798 = vshll.u32 2475754826, %v4792
        %v4799 = vshrl.u32 2131351028, %v4793
        %v4800 = vor.u32 %v4798, %v4799
        %v4801 = vshll.u32 2131351028, %v4792
        %v4802 = vshrl.u32 2102212464, %v4793
        %v4803 = vor.u32 %v4801, %v4802
        %v4804 = vshll.u32 2102212464, %v4792
        %v4805 = vshrl.u32 920167782, %v4793
        %v4806 = vor.u32 %v4804, %v4805
        %v4807 = vshll.u32 920167782, %v4792
        %v4808 = vshrl.u32 1326507024, %v4793
        %v4809 = vor.u32 %v4807, %v4808
        %vm4810 = vcmp.lt.s32.totalorder %v4791, 1
        %vm4811 = vcmp.lt.s32.totalorder %v4791, 2
        %vm4812 = vcmp.lt.s32.totalorder %v4791, 3
        %vm4813 = vcmp.lt.s32.totalorder %v4791, 4
        %v4814 = vsel %vm4810, %v4794, %v4797
        %v4815 = vsel %vm4813, %v4803, 2102212464
        %v4816 = vsel %vm4812, %v4800, %v4815
        %v4817 = vsel %vm4811, %v4814, %v4816
        %v4818 = vsel %vm4810, %v4797, %v4800
        %v4819 = vsel %vm4813, %v4806, 920167782
        %v4820 = vsel %vm4812, %v4803, %v4819
        %v4821 = vsel %vm4811, %v4818, %v4820
        %v4822 = vsel %vm4810, %v4800, %v4803
        %v4823 = vsel %vm4813, %v4809, 1326507024
        %v4824 = vsel %vm4812, %v4806, %v4823
        %v4825 = vsel %vm4811, %v4822, %v4824
        %v4826 = vshll.u32 %v4786, 8
        %v4827 = vand.u32 %v4826, 65535
        %v4828 = vshrl.u32 %v4826, 16
        %v4829 = vand.u32 %v4825, 65535
        %v4830 = vshrl.u32 %v4825, 16
        %v4831 = vmul.u32 %v4827, %v4829
        %v4832 = vmul.u32 %v4827, %v4830
        %v4833 = vmul.u32 %v4828, %v4829
        %v4834 = vmul.u32 %v4828, %v4830
        %v4835 = vshll.u32 %v4832, 16
        %v4836 = vshrl.u32 %v4832, 16
        %v4837 = vshll.u32 %v4833, 16
        %v4838 = vshrl.u32 %v4833, 16
        %vm4839 = vc.u32 %v4831, %v4835
        %v4840 = vsel %vm4839, 1, 0
        %v4841 = vadd.s32 %v4831, %v4835
        %v4842 = vadd.s32 %v4834, %v4840
        %vm4843 = vc.u32 %v4841, %v4837
        %v4844 = vsel %vm4843, 1, 0
        %v4845 = vadd.s32 %v4841, %v4837
        %v4846 = vadd.s32 %v4842, %v4844
        %v4847 = vadd.s32 %v4846, %v4836
        %v4848 = vadd.s32 %v4847, %v4838
        %v4849 = vand.u32 %v4826, 65535
        %v4850 = vshrl.u32 %v4826, 16
        %v4851 = vand.u32 %v4821, 65535
        %v4852 = vshrl.u32 %v4821, 16
        %v4853 = vmul.u32 %v4849, %v4851
        %v4854 = vmul.u32 %v4849, %v4852
        %v4855 = vmul.u32 %v4850, %v4851
        %v4856 = vmul.u32 %v4850, %v4852
        %v4857 = vshll.u32 %v4854, 16
        %v4858 = vshrl.u32 %v4854, 16
        %v4859 = vshll.u32 %v4855, 16
        %v4860 = vshrl.u32 %v4855, 16
        %vm4861 = vc.u32 %v4853, %v4857
        %v4862 = vsel %vm4861, 1, 0
        %v4863 = vadd.s32 %v4853, %v4857
        %v4864 = vadd.s32 %v4856, %v4862
        %vm4865 = vc.u32 %v4863, %v4859
        %v4866 = vsel %vm4865, 1, 0
        %v4867 = vadd.s32 %v4863, %v4859
        %v4868 = vadd.s32 %v4864, %v4866
        %v4869 = vadd.s32 %v4868, %v4858
        %v4870 = vadd.s32 %v4869, %v4860
        %v4871 = vmul.u32 %v4826, %v4817
        %v4872 = vadd.s32 %v4848, %v4867
        %vm4873 = vc.u32 %v4848, %v4867
        %v4874 = vadd.s32 %v4870, 1
        %v4875 = vsel %vm4873, %v4874, %v4870
        %v4876 = vadd.s32 %v4871, %v4875
        %v4877 = vadd.s32 %v4876, 536870912
        %v4878 = vshrl.u32 %v4877, 30
        %v4879 = vshll.u32 %v4878, 30
        %v4880 = vsub.s32 %v4876, %v4879
        %vm4881 = vcmp.lt.s32.totalorder %v4880, 0
        %v4882 = vsub.s32 0, %v4880
        %v4883 = vsel %vm4881, %v4882, %v4880
        %v4884 = vclz %v4883
        %v4885 = vsub.s32 %v4884, 2
        %vm4886 = vcmp.gt.s32.totalorder 0, %v4885
        %v4887 = vsel %vm4886, 0, %v4885
        %v4888 = vsub.s32 32, %v4887
        %v4889 = vshll.u32 %v4880, %v4887
        %v4890 = vshrl.u32 %v4872, %v4888
        %v4891 = vor.u32 %v4889, %v4890
        %v4892 = vsub.s32 4294967266, %v4887
        %v4893 = vadd.s32 %v4892, 127
        %v4894 = vshll.u32 %v4893, 23
        %v4895 = vor.u32 4788187, %v4894
        %v4896 = vand.u32 2147483647, %v4895
        %v4898 = vcvt.s32.f32 %v4891
        %v4899 = vmul.f32 %v4898, %v4896
        %v4900 = vxor.u32 %v4899, 2147483648
        %v4901 = vsel %vm4780, %v4900, %v4899
        %v4902 = vsub.s32 4, %v4878
        %v4903 = vsel %vm4780, %v4902, %v4878
        %v4904 = vsel %vm4779, %v272, %v4901
        %v4905 = vsel %vm4779, 0, %v4903
        %v4906 = vmul.f32 %v4904, %v4904
        %v4907 = vmul.f32 %v4906, -0.001358992
        %v4908 = vadd.f32 %v4907, 0.041655596
        %v4909 = vmul.f32 %v4906, %v4908
        %v4910 = vadd.f32 %v4909, -0.4999988
        %v4911 = vmul.f32 %v4906, %v4910
        %v4912 = vadd.f32 1.0, %v4911
        %v4913 = vmul.f32 %v4904, %v4904
        %v4914 = vmul.f32 %v4913, -0.00019511016
        %v4915 = vadd.f32 %v4914, 0.008332121
        %v4916 = vmul.f32 %v4913, %v4915
        %v4917 = vadd.f32 %v4916, -0.16666654
        %v4918 = vmul.f32 %v4913, %v4917
        %v4919 = vadd.f32 %v4918, 1.0
        %v4920 = vmul.f32 %v4919, %v4904
        %vm4921 = vweird.f32 %v272
        %v4922 = vand.u32 %v4905, 3
        %vm4923 = vcmp.lt.s32.totalorder %v4922, 2
        %vm4924 = vcmp.eq.s32.totalorder %v4922, 0
        %v4925 = vxor.u32 %v4920, 2147483648
        %v4926 = vsel %vm4924, %v4912, %v4925
        %vm4927 = vcmp.eq.s32.totalorder %v4922, 2
        %v4928 = vxor.u32 %v4912, 2147483648
        %v4929 = vsel %vm4927, %v4928, %v4920
        %v4930 = vsel %vm4923, %v4926, %v4929
        %v4931 = vsel %vm4921, nan, %v4930
        %v4932 = vand.u32 2147483647, %v275
        %vm4933 = vcmp.le.f32.partialorder %v4932, 0.7853982
        %vm4934 = vcmp.lt.s32.totalorder %v275, 0
        %v4935 = vand.u32 %v275, 2139095040
        %v4936 = vshrl.u32 %v4935, 23
        %v4937 = vsub.s32 %v4936, 127
        %v4938 = vand.u32 2147483647, %v275
        %v4939 = vand.u32 %v4938, 8388607
        %v4940 = vor.u32 %v4939, 8388608
        %v4941 = vsub.s32 0, %v4940
        %v4942 = vadd.s32 %v4937, 1
        %vm4943 = vcmp.gt.s32.totalorder %v4942, 0
        %v4944 = vsel %vm4943, %v4942, 0
        %v4945 = vshrl.u32 %v4944, 5
        %v4946 = vand.u32 %v4944, 31
        %v4947 = vsub.s32 32, %v4946
        %v4948 = vshrl.u32 683565275, %v4947
        %v4949 = vshll.u32 683565275, %v4946
        %v4950 = vshrl.u32 2475754826, %v4947
        %v4951 = vor.u32 %v4949, %v4950
        %v4952 = vshll.u32 2475754826, %v4946
        %v4953 = vshrl.u32 2131351028, %v4947
        %v4954 = vor.u32 %v4952, %v4953
        %v4955 = vshll.u32 2131351028, %v4946
        %v4956 = vshrl.u32 2102212464, %v4947
        %v4957 = vor.u32 %v4955, %v4956
        %v4958 = vshll.u32 2102212464, %v4946
        %v4959 = vshrl.u32 920167782, %v4947
        %v4960 = vor.u32 %v4958, %v4959
        %v4961 = vshll.u32 920167782, %v4946
        %v4962 = vshrl.u32 1326507024, %v4947
        %v4963 = vor.u32 %v4961, %v4962
        %vm4964 = vcmp.lt.s32.totalorder %v4945, 1
        %vm4965 = vcmp.lt.s32.totalorder %v4945, 2
        %vm4966 = vcmp.lt.s32.totalorder %v4945, 3
        %vm4967 = vcmp.lt.s32.totalorder %v4945, 4
        %v4968 = vsel %vm4964, %v4948, %v4951
        %v4969 = vsel %vm4967, %v4957, 2102212464
        %v4970 = vsel %vm4966, %v4954, %v4969
        %v4971 = vsel %vm4965, %v4968, %v4970
        %v4972 = vsel %vm4964, %v4951, %v4954
        %v4973 = vsel %vm4967, %v4960, 920167782
        %v4974 = vsel %vm4966, %v4957, %v4973
        %v4975 = vsel %vm4965, %v4972, %v4974
        %v4976 = vsel %vm4964, %v4954, %v4957
        %v4977 = vsel %vm4967, %v4963, 1326507024
        %v4978 = vsel %vm4966, %v4960, %v4977
        %v4979 = vsel %vm4965, %v4976, %v4978
        %v4980 = vshll.u32 %v4940, 8
        %v4981 = vand.u32 %v4980, 65535
        %v4982 = vshrl.u32 %v4980, 16
        %v4983 = vand.u32 %v4979, 65535
        %v4984 = vshrl.u32 %v4979, 16
        %v4985 = vmul.u32 %v4981, %v4983
        %v4986 = vmul.u32 %v4981, %v4984
        %v4987 = vmul.u32 %v4982, %v4983
        %v4988 = vmul.u32 %v4982, %v4984
        %v4989 = vshll.u32 %v4986, 16
        %v4990 = vshrl.u32 %v4986, 16
        %v4991 = vshll.u32 %v4987, 16
        %v4992 = vshrl.u32 %v4987, 16
        %vm4993 = vc.u32 %v4985, %v4989
        %v4994 = vsel %vm4993, 1, 0
        %v4995 = vadd.s32 %v4985, %v4989
        %v4996 = vadd.s32 %v4988, %v4994
        %vm4997 = vc.u32 %v4995, %v4991
        %v4998 = vsel %vm4997, 1, 0
        %v4999 = vadd.s32 %v4995, %v4991
        %v5000 = vadd.s32 %v4996, %v4998
        %v5001 = vadd.s32 %v5000, %v4990
        %v5002 = vadd.s32 %v5001, %v4992
        %v5003 = vand.u32 %v4980, 65535
        %v5004 = vshrl.u32 %v4980, 16
        %v5005 = vand.u32 %v4975, 65535
        %v5006 = vshrl.u32 %v4975, 16
        %v5007 = vmul.u32 %v5003, %v5005
        %v5008 = vmul.u32 %v5003, %v5006
        %v5009 = vmul.u32 %v5004, %v5005
        %v5010 = vmul.u32 %v5004, %v5006
        %v5011 = vshll.u32 %v5008, 16
        %v5012 = vshrl.u32 %v5008, 16
        %v5013 = vshll.u32 %v5009, 16
        %v5014 = vshrl.u32 %v5009, 16
        %vm5015 = vc.u32 %v5007, %v5011
        %v5016 = vsel %vm5015, 1, 0
        %v5017 = vadd.s32 %v5007, %v5011
        %v5018 = vadd.s32 %v5010, %v5016
        %vm5019 = vc.u32 %v5017, %v5013
        %v5020 = vsel %vm5019, 1, 0
        %v5021 = vadd.s32 %v5017, %v5013
        %v5022 = vadd.s32 %v5018, %v5020
        %v5023 = vadd.s32 %v5022, %v5012
        %v5024 = vadd.s32 %v5023, %v5014
        %v5025 = vmul.u32 %v4980, %v4971
        %v5026 = vadd.s32 %v5002, %v5021
        %vm5027 = vc.u32 %v5002, %v5021
        %v5028 = vadd.s32 %v5024, 1
        %v5029 = vsel %vm5027, %v5028, %v5024
        %v5030 = vadd.s32 %v5025, %v5029
        %v5031 = vadd.s32 %v5030, 536870912
        %v5032 = vshrl.u32 %v5031, 30
        %v5033 = vshll.u32 %v5032, 30
        %v5034 = vsub.s32 %v5030, %v5033
        %vm5035 = vcmp.lt.s32.totalorder %v5034, 0
        %v5036 = vsub.s32 0, %v5034
        %v5037 = vsel %vm5035, %v5036, %v5034
        %v5038 = vclz %v5037
        %v5039 = vsub.s32 %v5038, 2
        %vm5040 = vcmp.gt.s32.totalorder 0, %v5039
        %v5041 = vsel %vm5040, 0, %v5039
        %v5042 = vsub.s32 32, %v5041
        %v5043 = vshll.u32 %v5034, %v5041
        %v5044 = vshrl.u32 %v5026, %v5042
        %v5045 = vor.u32 %v5043, %v5044
        %v5046 = vsub.s32 4294967266, %v5041
        %v5047 = vadd.s32 %v5046, 127
        %v5048 = vshll.u32 %v5047, 23
        %v5049 = vor.u32 4788187, %v5048
        %v5050 = vand.u32 2147483647, %v5049
        %v5052 = vcvt.s32.f32 %v5045
        %v5053 = vmul.f32 %v5052, %v5050
        %v5054 = vxor.u32 %v5053, 2147483648
        %v5055 = vsel %vm4934, %v5054, %v5053
        %v5056 = vsub.s32 4, %v5032
        %v5057 = vsel %vm4934, %v5056, %v5032
        %v5058 = vsel %vm4933, %v275, %v5055
        %v5059 = vsel %vm4933, 0, %v5057
        %v5060 = vmul.f32 %v5058, %v5058
        %v5061 = vmul.f32 %v5060, -0.001358992
        %v5062 = vadd.f32 %v5061, 0.041655596
        %v5063 = vmul.f32 %v5060, %v5062
        %v5064 = vadd.f32 %v5063, -0.4999988
        %v5065 = vmul.f32 %v5060, %v5064
        %v5066 = vadd.f32 1.0, %v5065
        %v5067 = vmul.f32 %v5058, %v5058
        %v5068 = vmul.f32 %v5067, -0.00019511016
        %v5069 = vadd.f32 %v5068, 0.008332121
        %v5070 = vmul.f32 %v5067, %v5069
        %v5071 = vadd.f32 %v5070, -0.16666654
        %v5072 = vmul.f32 %v5067, %v5071
        %v5073 = vadd.f32 %v5072, 1.0
        %v5074 = vmul.f32 %v5073, %v5058
        %vm5075 = vweird.f32 %v275
        %v5076 = vand.u32 %v5059, 3
        %vm5077 = vcmp.lt.s32.totalorder %v5076, 2
        %vm5078 = vcmp.eq.s32.totalorder %v5076, 0
        %v5079 = vxor.u32 %v5074, 2147483648
        %v5080 = vsel %vm5078, %v5066, %v5079
        %vm5081 = vcmp.eq.s32.totalorder %v5076, 2
        %v5082 = vxor.u32 %v5066, 2147483648
        %v5083 = vsel %vm5081, %v5082, %v5074
        %v5084 = vsel %vm5077, %v5080, %v5083
        %v5085 = vsel %vm5075, nan, %v5084
        %v5086 = vand.u32 2147483647, %v278
        %vm5087 = vcmp.le.f32.partialorder %v5086, 0.7853982
        %vm5088 = vcmp.lt.s32.totalorder %v278, 0
        %v5089 = vand.u32 %v278, 2139095040
        %v5090 = vshrl.u32 %v5089, 23
        %v5091 = vsub.s32 %v5090, 127
        %v5092 = vand.u32 2147483647, %v278
        %v5093 = vand.u32 %v5092, 8388607
        %v5094 = vor.u32 %v5093, 8388608
        %v5095 = vsub.s32 0, %v5094
        %v5096 = vadd.s32 %v5091, 1
        %vm5097 = vcmp.gt.s32.totalorder %v5096, 0
        %v5098 = vsel %vm5097, %v5096, 0
        %v5099 = vshrl.u32 %v5098, 5
        %v5100 = vand.u32 %v5098, 31
        %v5101 = vsub.s32 32, %v5100
        %v5102 = vshrl.u32 683565275, %v5101
        %v5103 = vshll.u32 683565275, %v5100
        %v5104 = vshrl.u32 2475754826, %v5101
        %v5105 = vor.u32 %v5103, %v5104
        %v5106 = vshll.u32 2475754826, %v5100
        %v5107 = vshrl.u32 2131351028, %v5101
        %v5108 = vor.u32 %v5106, %v5107
        %v5109 = vshll.u32 2131351028, %v5100
        %v5110 = vshrl.u32 2102212464, %v5101
        %v5111 = vor.u32 %v5109, %v5110
        %v5112 = vshll.u32 2102212464, %v5100
        %v5113 = vshrl.u32 920167782, %v5101
        %v5114 = vor.u32 %v5112, %v5113
        %v5115 = vshll.u32 920167782, %v5100
        %v5116 = vshrl.u32 1326507024, %v5101
        %v5117 = vor.u32 %v5115, %v5116
        %vm5118 = vcmp.lt.s32.totalorder %v5099, 1
        %vm5119 = vcmp.lt.s32.totalorder %v5099, 2
        %vm5120 = vcmp.lt.s32.totalorder %v5099, 3
        %vm5121 = vcmp.lt.s32.totalorder %v5099, 4
        %v5122 = vsel %vm5118, %v5102, %v5105
        %v5123 = vsel %vm5121, %v5111, 2102212464
        %v5124 = vsel %vm5120, %v5108, %v5123
        %v5125 = vsel %vm5119, %v5122, %v5124
        %v5126 = vsel %vm5118, %v5105, %v5108
        %v5127 = vsel %vm5121, %v5114, 920167782
        %v5128 = vsel %vm5120, %v5111, %v5127
        %v5129 = vsel %vm5119, %v5126, %v5128
        %v5130 = vsel %vm5118, %v5108, %v5111
        %v5131 = vsel %vm5121, %v5117, 1326507024
        %v5132 = vsel %vm5120, %v5114, %v5131
        %v5133 = vsel %vm5119, %v5130, %v5132
        %v5134 = vshll.u32 %v5094, 8
        %v5135 = vand.u32 %v5134, 65535
        %v5136 = vshrl.u32 %v5134, 16
        %v5137 = vand.u32 %v5133, 65535
        %v5138 = vshrl.u32 %v5133, 16
        %v5139 = vmul.u32 %v5135, %v5137
        %v5140 = vmul.u32 %v5135, %v5138
        %v5141 = vmul.u32 %v5136, %v5137
        %v5142 = vmul.u32 %v5136, %v5138
        %v5143 = vshll.u32 %v5140, 16
        %v5144 = vshrl.u32 %v5140, 16
        %v5145 = vshll.u32 %v5141, 16
        %v5146 = vshrl.u32 %v5141, 16
        %vm5147 = vc.u32 %v5139, %v5143
        %v5148 = vsel %vm5147, 1, 0
        %v5149 = vadd.s32 %v5139, %v5143
        %v5150 = vadd.s32 %v5142, %v5148
        %vm5151 = vc.u32 %v5149, %v5145
        %v5152 = vsel %vm5151, 1, 0
        %v5153 = vadd.s32 %v5149, %v5145
        %v5154 = vadd.s32 %v5150, %v5152
        %v5155 = vadd.s32 %v5154, %v5144
        %v5156 = vadd.s32 %v5155, %v5146
        %v5157 = vand.u32 %v5134, 65535
        %v5158 = vshrl.u32 %v5134, 16
        %v5159 = vand.u32 %v5129, 65535
        %v5160 = vshrl.u32 %v5129, 16
        %v5161 = vmul.u32 %v5157, %v5159
        %v5162 = vmul.u32 %v5157, %v5160
        %v5163 = vmul.u32 %v5158, %v5159
        %v5164 = vmul.u32 %v5158, %v5160
        %v5165 = vshll.u32 %v5162, 16
        %v5166 = vshrl.u32 %v5162, 16
        %v5167 = vshll.u32 %v5163, 16
        %v5168 = vshrl.u32 %v5163, 16
        %vm5169 = vc.u32 %v5161, %v5165
        %v5170 = vsel %vm5169, 1, 0
        %v5171 = vadd.s32 %v5161, %v5165
        %v5172 = vadd.s32 %v5164, %v5170
        %vm5173 = vc.u32 %v5171, %v5167
        %v5174 = vsel %vm5173, 1, 0
        %v5175 = vadd.s32 %v5171, %v5167
        %v5176 = vadd.s32 %v5172, %v5174
        %v5177 = vadd.s32 %v5176, %v5166
        %v5178 = vadd.s32 %v5177, %v5168
        %v5179 = vmul.u32 %v5134, %v5125
        %v5180 = vadd.s32 %v5156, %v5175
        %vm5181 = vc.u32 %v5156, %v5175
        %v5182 = vadd.s32 %v5178, 1
        %v5183 = vsel %vm5181, %v5182, %v5178
        %v5184 = vadd.s32 %v5179, %v5183
        %v5185 = vadd.s32 %v5184, 536870912
        %v5186 = vshrl.u32 %v5185, 30
        %v5187 = vshll.u32 %v5186, 30
        %v5188 = vsub.s32 %v5184, %v5187
        %vm5189 = vcmp.lt.s32.totalorder %v5188, 0
        %v5190 = vsub.s32 0, %v5188
        %v5191 = vsel %vm5189, %v5190, %v5188
        %v5192 = vclz %v5191
        %v5193 = vsub.s32 %v5192, 2
        %vm5194 = vcmp.gt.s32.totalorder 0, %v5193
        %v5195 = vsel %vm5194, 0, %v5193
        %v5196 = vsub.s32 32, %v5195
        %v5197 = vshll.u32 %v5188, %v5195
        %v5198 = vshrl.u32 %v5180, %v5196
        %v5199 = vor.u32 %v5197, %v5198
        %v5200 = vsub.s32 4294967266, %v5195
        %v5201 = vadd.s32 %v5200, 127
        %v5202 = vshll.u32 %v5201, 23
        %v5203 = vor.u32 4788187, %v5202
        %v5204 = vand.u32 2147483647, %v5203
        %v5206 = vcvt.s32.f32 %v5199
        %v5207 = vmul.f32 %v5206, %v5204
        %v5208 = vxor.u32 %v5207, 2147483648
        %v5209 = vsel %vm5088, %v5208, %v5207
        %v5210 = vsub.s32 4, %v5186
        %v5211 = vsel %vm5088, %v5210, %v5186
        %v5212 = vsel %vm5087, %v278, %v5209
        %v5213 = vsel %vm5087, 0, %v5211
        %v5214 = vmul.f32 %v5212, %v5212
        %v5215 = vmul.f32 %v5214, -0.001358992
        %v5216 = vadd.f32 %v5215, 0.041655596
        %v5217 = vmul.f32 %v5214, %v5216
        %v5218 = vadd.f32 %v5217, -0.4999988
        %v5219 = vmul.f32 %v5214, %v5218
        %v5220 = vadd.f32 1.0, %v5219
        %v5221 = vmul.f32 %v5212, %v5212
        %v5222 = vmul.f32 %v5221, -0.00019511016
        %v5223 = vadd.f32 %v5222, 0.008332121
        %v5224 = vmul.f32 %v5221, %v5223
        %v5225 = vadd.f32 %v5224, -0.16666654
        %v5226 = vmul.f32 %v5221, %v5225
        %v5227 = vadd.f32 %v5226, 1.0
        %v5228 = vmul.f32 %v5227, %v5212
        %vm5229 = vweird.f32 %v278
        %v5230 = vand.u32 %v5213, 3
        %vm5231 = vcmp.lt.s32.totalorder %v5230, 2
        %vm5232 = vcmp.eq.s32.totalorder %v5230, 0
        %v5233 = vxor.u32 %v5228, 2147483648
        %v5234 = vsel %vm5232, %v5220, %v5233
        %vm5235 = vcmp.eq.s32.totalorder %v5230, 2
        %v5236 = vxor.u32 %v5220, 2147483648
        %v5237 = vsel %vm5235, %v5236, %v5228
        %v5238 = vsel %vm5231, %v5234, %v5237
        %v5239 = vsel %vm5229, nan, %v5238
        %5240 = vst [vmem:[%s137 + $0x8] sm:$0xff] %v2929
        %5241 = vst [vmem:[%s137 + $0x18] sm:$0xff] %v3083
        %5242 = vst [vmem:[%s137 + $0x28] sm:$0xff] %v3237
        %5243 = vst [vmem:[%s137 + $0x38] sm:$0xff] %v3391
        %5244 = vst [vmem:[%s137 + $0x48] sm:$0xff] %v3545
        %5245 = vst [vmem:[%s137 + $0x58] sm:$0xff] %v3699
        %5246 = vst [vmem:[%s137 + $0x68] sm:$0xff] %v3853
        %5247 = vst [vmem:[%s137 + $0x78] sm:$0xff] %v4007
        %5248 = vst [vmem:[%s137 + $0x88] sm:$0xff] %v4161
        %5249 = vst [vmem:[%s137 + $0x98] sm:$0xff] %v4315
        %5250 = vst [vmem:[%s137 + $0xa8] sm:$0xff] %v4469
        %5251 = vst [vmem:[%s137 + $0xb8] sm:$0xff] %v4623
        %5252 = vst [vmem:[%s137 + $0xc8] sm:$0xff] %v4777
        %5253 = vst [vmem:[%s137 + $0xd8] sm:$0xff] %v4931
        %5254 = vst [vmem:[%s137 + $0xe8] sm:$0xff] %v5085
        %5255 = vst [vmem:[%s137 + $0xf8] sm:$0xff] %v5239
        %s5256 = sand.u32 %s71, 1
        %s5257 = scalar_lea.sflag [#allocation3], %s5256
        %s5258 = sand.u32 %s71, 1
        %s5259 = smul.addr %s5258, 256
        %s5260 = scalar_lea.vmem [#allocation2], %s5259
        // Predicated region
        $region29: #{tpu_custom_call.1} parent=27 // pred_check
          %p5261 = pneg %p81
        $region30: #{tpu_custom_call.1} parent=27 // pred_check_branch
          %5263 = sbr.rel (%p5261) target = $region32
        $region31: #{tpu_custom_call.1} parent=27 // pred_region
          %s5264 = smul.u32 16, %s16
          %5266 = vsyncadd %s5257, 0
          %s5267 = smul.addr %s5264, 2
          %s5268 = smul.addr %s5267, 8
          %s5269 = scalar_lea.hbm %s2, %s5268
          %s5270 = sshll.u32 %s5260, 4
          %s5271 = int_to_ptr.vmem [resolvable:$true] %s5270
          %s5272 = sshll.u32 %s5269, 4
          %s5273 = int_to_ptr.hbm [resolvable:$true] %s5272
          %5278 = dma.vmem_to_hbm [thread:$0]  %s5271, 4096, %s5273, %s5257, 256, 256, 16
        $region32: #{tpu_custom_call.1} parent=27 // pred_fallthru
          _
      $region28: #{tpu_custom_call.1} parent=5 // pred_fallthru
        _
      %p5279 = scmp.le.s32.totalorder 2, %s11
      // Predicated region
      $region33: #{tpu_custom_call.1} parent=5 // pred_check
        %p5280 = pneg %p5279
      $region34: #{tpu_custom_call.1} parent=5 // pred_check_branch
        %5282 = sbr.rel (%p5280) target = $region36
      $region35: #{tpu_custom_call.1} parent=5 // pred_region
        %s5283 = ssub.s32 %s11, 2
        // Predicated region
        $region37: #{tpu_custom_call.1} parent=35 // pred_check
          %p5284 = pneg %p87
        $region38: #{tpu_custom_call.1} parent=35 // pred_check_branch
          %5286 = sbr.rel (%p5284) target = $region40
        $region39: #{tpu_custom_call.1} parent=35 // pred_region
          %s5287 = sand.u32 %s72, 1
          %s5288 = scalar_lea.sflag [#allocation3], %s5287
          %s5289 = sand.u32 %s72, 1
          %s5290 = smul.addr %s5289, 256
          %s5291 = scalar_lea.vmem [#allocation2], %s5290
          %5293 = dma.done %s5288, 4096
        $region40: #{tpu_custom_call.1} parent=35 // pred_fallthru
          _
      $region36: #{tpu_custom_call.1} parent=5 // pred_fallthru
        _
    $region6: #{tpu_custom_call.1} parent=1 // loop_footer
      %s15 = sadd.s32 1, %s11
    $region7: #{tpu_custom_call.1} parent=1 // loop_footer_branch
      %10 = sbr.rel target = $region3
    $region8: #{tpu_custom_call.1} parent=1 // loop_exit
      _
    %5294 = vsyncpa [#allocation3], 1
    %s5295 = scalar_lea.sflag [#allocation3], 1
    %5296 = vsyncpa %s5295, 1

</llo_original>
